<compile_context>
chip_gen: v7x
topology: tpu7x:2x2x1
jax: 0.10.0
libtpu: 0.0.40
codegen_flags: <defaults>
</compile_context>

<pallas_src>
import functools

import jax
import jax.numpy as jnp
from jax.experimental import pallas as pl
from jax.experimental.pallas import tpu as pltpu

EPS = 1e-5
LANE = 128
MXU_DTYPE = jnp.bfloat16        # set to jnp.float32 for bit-tight validation


def _default_vmem_limit():
    # v5e / v6e have 128 MiB physical VMEM -> roomy scoped budget;
    # v7x-class parts have 64 MiB -> keep headroom.
    try:
        kind = jax.devices()[0].device_kind.lower()
    except Exception:
        return 32 * 1024 * 1024
    if "v5" in kind or "v6" in kind:
        return 64 * 1024 * 1024
    return 40 * 1024 * 1024


VMEM_LIMIT = _default_vmem_limit()


def _round_up(x, m):
    return (x + m - 1) // m * m


def _pad_to(a, shape):
    return jnp.pad(a, [(0, t - s) for s, t in zip(a.shape, shape)])


def _pick_th(H, W, cmid, cout, vmem_limit):
    """Largest row-tile TH (a divisor of H) whose 3x3-stage per-step footprint
    fits comfortably in the scoped-VMEM budget.  TH=1 always divides, so an
    awkward H never falls back to a single whole-image block."""
    budget = vmem_limit // 4
    for th in (128, 64, 32, 16, 8, 4, 2, 1):
        if H % th:
            continue
        thw = th * W
        foot = (2 * thw * cmid * 2              # core rows (bf16), double-buffered
                + 4 * W * cmid * 2              # 1-row halos, double-buffered
                + 2 * thw * cout * 4            # conv output block (f32), double-buffered
                + thw * cout * 4                # f32 accumulator scratch
                + 2 * 9 * cmid * cout * 2       # merged-kw weights (bf16)
                + 3 * (th + 2) * (W + 2) * cmid * 4)   # in-register window temps
        if foot <= budget:
            return th
    return 1


# ---------------- Pallas kernels ----------------


def _conv1x1_stats_kernel(x_ref, w_ref, b_ref, y_ref, stats_ref):
    """(THW, Cin) @ (Cin, Cmid) + bias; emits bf16 y and f32 BN partial sums.

    Stats are taken on the pre-bias accumulator (better conditioned variance);
    the host adds the bias back to the mean.
    """
    acc = jnp.dot(x_ref[0], w_ref[...], preferred_element_type=jnp.float32)
    y_ref[...] = (acc + b_ref[...])[None].astype(y_ref.dtype)
    s = jnp.sum(acc, axis=0, keepdims=True)
    ss = jnp.sum(acc * acc, axis=0, keepdims=True)
    pad = jnp.zeros((6, acc.shape[1]), jnp.float32)
    stats_ref[...] = jnp.concatenate([s, ss, pad], axis=0)[None]


def _conv3x3_fused_kernel(core_ref, top_ref, bot_ref, w_ref, b_ref,
                          sc_ref, sh_ref, y_ref, stats_ref, acc_ref):
    """Fused BN1+ReLU (input path) -> 3x3 conv (pad=1) -> bias -> BN2 partials.

    core_ref : (1, TH, W, Cmid) raw conv1x1 rows of this tile (auto-pipelined)
    top/bot  : (1, 1, W, Cmid)  1-row halos (row above / below), auto-pipelined
    w_ref    : (3, 3*Cmid, Cout) merged-kw weights -> one K=3*Cmid matmul per kh
    acc_ref  : VMEM (TH*W, Cout) f32 accumulator scratch
    """
    i = pl.program_id(1)
    last = pl.num_programs(1) - 1
    th, wd, c_in = core_ref.shape[1], core_ref.shape[2], core_ref.shape[3]
    thw, c_out = y_ref.shape[2], y_ref.shape[3]

    sc = sc_ref[0]                        # (Cmid,)
    sh = sh_ref[0]

    def bn_relu_in(v):                    # fused first BatchNorm + ReLU
        return jnp.maximum(v.astype(jnp.float32) * sc + sh, 0.0)

    # Halo rows outside the image (above row 0 / below row H-1) must be zero
    # *after* normalization (they are the conv's zero padding) -> mask post-ReLU.
    tmask = jnp.where(i > 0, 1.0, 0.0)
    bmask = jnp.where(i < last, 1.0, 0.0)
    a = jnp.concatenate([bn_relu_in(top_ref[0]) * tmask,
                         bn_relu_in(core_ref[0]),
                         bn_relu_in(bot_ref[0]) * bmask], axis=0)   # (TH+2, W, Cmid)
    # Width padding (conv pad=1) and a single cast shared by all taps.
    zcol = jnp.zeros((th + 2, 1, c_in), jnp.float32)
    a = jnp.concatenate([zcol, a, zcol], axis=1).astype(MXU_DTYPE)  # (TH+2, W+2, Cmid)

    acc_ref[...] = jnp.zeros_like(acc_ref)
    for kh in range(3):                   # 3 MXU matmuls, K = 3*Cmid (merged kw taps)
        rows = a[kh:kh + th]              # (TH, W+2, Cmid)
        patch = jnp.concatenate(
            [rows[:, 0:wd], rows[:, 1:wd + 1], rows[:, 2:wd + 2]], axis=-1
        ).reshape(thw, 3 * c_in)
        acc_ref[...] += jnp.dot(patch, w_ref[kh],
                                preferred_element_type=jnp.float32)

    acc = acc_ref[...]
    y_ref[...] = (acc + b_ref[...])[None, None].astype(y_ref.dtype)
    s = jnp.sum(acc, axis=0, keepdims=True)
    ss = jnp.sum(acc * acc, axis=0, keepdims=True)
    pad = jnp.zeros((6, c_out), jnp.float32)
    stats_ref[...] = jnp.concatenate([s, ss, pad], axis=0)[None, None]


def _bn_relu_kernel(y_ref, sc_ref, sh_ref, o_ref):
    o_ref[...] = jnp.maximum(
        y_ref[...].astype(jnp.float32) * sc_ref[...] + sh_ref[...], 0.0
    ).astype(o_ref.dtype)


# ---------------- pallas_call wrappers ----------------


def conv1x1_stats(x, w, b, out_dtype):
    T, THW, Cin = x.shape
    Cmid = w.shape[1]
    return pl.pallas_call(
        _conv1x1_stats_kernel,
        out_shape=(jax.ShapeDtypeStruct((T, THW, Cmid), out_dtype),
                   jax.ShapeDtypeStruct((T, 8, Cmid), jnp.float32)),
        grid=(T,),
        in_specs=[pl.BlockSpec((1, THW, Cin), lambda t: (t, 0, 0)),
                  pl.BlockSpec((Cin, Cmid), lambda t: (0, 0)),
                  pl.BlockSpec((1, Cmid), lambda t: (0, 0))],
        out_specs=(pl.BlockSpec((1, THW, Cmid), lambda t: (t, 0, 0)),
                   pl.BlockSpec((1, 8, Cmid), lambda t: (t, 0, 0))),
        compiler_params=pltpu.CompilerParams(
            dimension_semantics=("parallel",),
            vmem_limit_bytes=VMEM_LIMIT),
    )(x, w, b)


def conv3x3_fused(y1, w, b, scale1, shift1, th, out_dtype):
    N, H, W, Cmid = y1.shape
    Cout = w.shape[-1]
    nh = H // th
    thw = th * W
    return pl.pallas_call(
        _conv3x3_fused_kernel,
        out_shape=(jax.ShapeDtypeStruct((N, nh, thw, Cout), out_dtype),
                   jax.ShapeDtypeStruct((N, nh, 8, Cout), jnp.float32)),
        grid=(N, nh),
        in_specs=[
            # core rows of this tile (auto double-buffered HBM->VMEM stream)
            pl.BlockSpec((1, th, W, Cmid), lambda n, i: (n, i, 0, 0)),
            # 1-row halos: block size 1 along H => block index == row index
            pl.BlockSpec((1, 1, W, Cmid),
                         lambda n, i: (n, jnp.maximum(i * th - 1, 0), 0, 0)),
            pl.BlockSpec((1, 1, W, Cmid),
                         lambda n, i: (n, jnp.minimum(i * th + th, H - 1), 0, 0)),
            pl.BlockSpec((3, 3 * Cmid, Cout), lambda n, i: (0, 0, 0)),
            pl.BlockSpec((1, Cout), lambda n, i: (0, 0)),
            pl.BlockSpec((1, Cmid), lambda n, i: (0, 0)),
            pl.BlockSpec((1, Cmid), lambda n, i: (0, 0)),
        ],
        out_specs=(pl.BlockSpec((1, 1, thw, Cout), lambda n, i: (n, i, 0, 0)),
                   pl.BlockSpec((1, 1, 8, Cout), lambda n, i: (n, i, 0, 0))),
        scratch_shapes=[pltpu.VMEM((thw, Cout), jnp.float32)],
        compiler_params=pltpu.CompilerParams(
            dimension_semantics=("parallel", "parallel"),
            vmem_limit_bytes=VMEM_LIMIT),
    )(y1, y1, y1, w, b, scale1, shift1)


def bn_relu(y, scale, shift, out_dtype):
    T, THW, C = y.shape
    return pl.pallas_call(
        _bn_relu_kernel,
        out_shape=jax.ShapeDtypeStruct((T, THW, C), out_dtype),
        grid=(T,),
        in_specs=[pl.BlockSpec((1, THW, C), lambda t: (t, 0, 0)),
                  pl.BlockSpec((1, C), lambda t: (0, 0)),
                  pl.BlockSpec((1, C), lambda t: (0, 0))],
        out_specs=pl.BlockSpec((1, THW, C), lambda t: (t, 0, 0)),
        compiler_params=pltpu.CompilerParams(
            dimension_semantics=("parallel",),
            vmem_limit_bytes=VMEM_LIMIT),
    )(y, scale, shift)


# ---------------- BN reduction (host side, tiny) ----------------


def _bn_scale_shift(stats, count, bias, gamma, beta):
    """Reduce per-tile (sum, sumsq) partials of the pre-bias conv output to the
    per-channel affine (scale, shift) implementing training-mode BatchNorm."""
    c = stats.shape[-1]
    s = stats[..., 0, :].reshape(-1, c).sum(axis=0)
    ss = stats[..., 1, :].reshape(-1, c).sum(axis=0)
    m0 = s / count
    var = ss / count - m0 * m0                 # biased variance; bias-shifted sums
    mean = m0 + bias.reshape(-1)
    scale = gamma.reshape(-1) * jax.lax.rsqrt(var + EPS)
    shift = beta.reshape(-1) - mean * scale
    return scale.reshape(1, c), shift.reshape(1, c)


# ---------------- DoubleConv forward ----------------


def double_conv(x_nchw, w1, b1, g1, be1, w2, b2, g2, be2, th_override=None):
    """x_nchw: (N, in_ch+mid_ch, H, W) -> (N, out_ch, H, W)."""
    N, C_in, H, W = x_nchw.shape
    mid, out = w1.shape[0], w2.shape[0]
    Cin_p, Cmid_p, Cout_p = (_round_up(c, LANE) for c in (C_in, mid, out))
    M = N * H * W
    TH = th_override if th_override is not None else \
        _pick_th(H, W, Cmid_p, Cout_p, VMEM_LIMIT)
    assert H % TH == 0, (H, TH)
    nh = H // TH
    inter_dtype = MXU_DTYPE                 # conv1x1 -> conv3x3 intermediate (bf16)

    # ---- channels-last, zero-padded to a 128-lane multiple (lane-dense stores) ----
    x = jnp.transpose(x_nchw, (0, 2, 3, 1))
    x = _pad_to(x, (N, H, W, Cin_p)).astype(MXU_DTYPE)
    x = x.reshape(N * nh, TH * W, Cin_p)    # free contiguous reshape

    w1m = _pad_to(w1.reshape(mid, C_in).T, (Cin_p, Cmid_p)).astype(MXU_DTYPE)
    b1p = _pad_to(b1.reshape(1, mid), (1, Cmid_p)).astype(jnp.float32)
    # NOTE: gamma/beta are zero-padded -> padded channels normalize to exactly 0,
    # which is what the 3x3 conv input requires.
    g1p = _pad_to(g1.reshape(1, mid), (1, Cmid_p)).astype(jnp.float32)
    be1p = _pad_to(be1.reshape(1, mid), (1, Cmid_p)).astype(jnp.float32)

    # PyTorch (out, mid, kh, kw) -> merged-kw (kh, kw*Cmid_p + cin, cout) layout
    w2t = _pad_to(jnp.transpose(w2, (2, 3, 1, 0)), (3, 3, Cmid_p, Cout_p))
    w2m = w2t.reshape(3, 3 * Cmid_p, Cout_p).astype(MXU_DTYPE)
    b2p = _pad_to(b2.reshape(1, out), (1, Cout_p)).astype(jnp.float32)
    g2p = _pad_to(g2.reshape(1, out), (1, Cout_p)).astype(jnp.float32)
    be2p = _pad_to(be2.reshape(1, out), (1, Cout_p)).astype(jnp.float32)

    # ---- Stage A: 1x1 conv + bias, fused BN1 partial sums, bf16 output ----
    y1, st1 = conv1x1_stats(x, w1m, b1p, inter_dtype)
    scale1, shift1 = _bn_scale_shift(st1, M, b1p, g1p, be1p)

    # ---- Stage B: BN1+ReLU fused into the 3x3 conv input; halo BlockSpecs ----
    y2, st2 = conv3x3_fused(y1.reshape(N, H, W, Cmid_p), w2m, b2p,
                            scale1, shift1, TH, jnp.float32)
    scale2, shift2 = _bn_scale_shift(st2, M, b2p, g2p, be2p)

    # ---- Stage C: BN2 + ReLU ----
    o = bn_relu(y2.reshape(N * nh, TH * W, Cout_p), scale2, shift2, jnp.float32)

    # ---- back to NCHW, drop channel padding ----
    o = o.reshape(N, H, W, Cout_p)[..., :out]
    return jnp.transpose(o, (0, 3, 1, 2))


# ---------------- pure-JAX reference (correctness check) ----------------


def double_conv_ref(x, w1, b1, g1, be1, w2, b2, g2, be2):
    dn = ("NCHW", "OIHW", "NCHW")

    def bn_relu_ref(y, g, be):
        mean = y.mean(axis=(0, 2, 3), keepdims=True)
        var = ((y - mean) ** 2).mean(axis=(0, 2, 3), keepdims=True)
        y = (y - mean) * jax.lax.rsqrt(var + EPS) * g[None, :, None, None] \
            + be[None, :, None, None]
        return jnp.maximum(y, 0.0)

    y = jax.lax.conv_general_dilated(x, w1, (1, 1), "VALID", dimension_numbers=dn)
    y = y + b1[None, :, None, None]
    y = bn_relu_ref(y, g1, be1)
    y = jax.lax.conv_general_dilated(y, w2, (1, 1), ((1, 1), (1, 1)),
                                     dimension_numbers=dn)
    y = y + b2[None, :, None, None]
    y = bn_relu_ref(y, g2, be2)
    return y


# ---------------- main ----------------


if __name__ == "__main__":
    key = jax.random.PRNGKey(0)
    in_ch, mid_ch, out_ch = 4, 4, 8
    N, H, W = 2, 16, 16
    C_in = in_ch + mid_ch

    k1, k2, k3, k4, k5 = jax.random.split(key, 5)
    x = jax.random.normal(k1, (N, C_in, H, W), jnp.float32)

    # deterministic synthetic parameters (shapes match nn.Conv2d / nn.BatchNorm2d)
    w1 = jax.random.normal(k2, (mid_ch, C_in, 1, 1), jnp.float32) * 0.1
    b1 = jax.random.normal(k3, (mid_ch,), jnp.float32) * 0.1
    w2 = jax.random.normal(k4, (out_ch, mid_ch, 3, 3), jnp.float32) * 0.1
    b2 = jax.random.normal(k5, (out_ch,), jnp.float32) * 0.1
    g1 = jnp.ones((mid_ch,), jnp.float32)
    be1 = jnp.zeros((mid_ch,), jnp.float32)
    g2 = jnp.ones((out_ch,), jnp.float32)
    be2 = jnp.zeros((out_ch,), jnp.float32)

    ref = jax.block_until_ready(
        double_conv_ref(x, w1, b1, g1, be1, w2, b2, g2, be2))
    tol = 5e-2 if MXU_DTYPE == jnp.bfloat16 else 1e-4

    # Default tiling (TH chosen by the VMEM-aware picker).
    out = jax.block_until_ready(
        jax.jit(double_conv)(x, w1, b1, g1, be1, w2, b2, g2, be2))
    assert out.shape == (N, out_ch, H, W), out.shape
    assert jnp.allclose(out, ref, atol=tol, rtol=tol), \
        float(jnp.max(jnp.abs(out - ref)))

    # Forced multi-row-tile path: exercises the 1-row halo exchange between tiles.
    out2 = jax.block_until_ready(
        jax.jit(functools.partial(double_conv, th_override=4))(
            x, w1, b1, g1, be1, w2, b2, g2, be2))
    assert jnp.allclose(out2, ref, atol=tol, rtol=tol), \
        float(jnp.max(jnp.abs(out2 - ref)))

    print("KERNEL_OK")
</pallas_src>

<mosaic_0001>
module attributes {stable_mosaic.version = 11 : i64} {
  func.func @_conv1x1_stats_kernel(%arg0: i32, %arg1: memref<1x256x128xbf16, #tpu.memory_space<vmem>>, %arg2: memref<128x128xbf16, #tpu.memory_space<vmem>>, %arg3: memref<1x128xf32, #tpu.memory_space<vmem>>, %arg4: memref<1x256x128xbf16, #tpu.memory_space<vmem>>, %arg5: memref<1x8x128xf32, #tpu.memory_space<vmem>>) attributes {dimension_semantics = [#tpu.dimension_semantics<parallel>], iteration_bounds = array<i64: 2>, scalar_prefetch = 0 : i64, scratch_operands = 0 : i64, tpu.core_type = #tpu.core_type<tc>, window_params = [{transform_indices = @transform_0, window_bounds = array<i64: 1, 256, 128>}, {pipeline_mode = #tpu.pipeline_mode<synchronous>, transform_indices = @transform_1, window_bounds = array<i64: 128, 128>}, {pipeline_mode = #tpu.pipeline_mode<synchronous>, transform_indices = @transform_2, window_bounds = array<i64: 1, 128>}, {transform_indices = @transform_3, window_bounds = array<i64: 1, 256, 128>}, {transform_indices = @transform_4, window_bounds = array<i64: 1, 8, 128>}]} {
    %c0 = arith.constant 0 : index
    %c0_0 = arith.constant 0 : index
    %c0_1 = arith.constant 0 : index
    %0 = vector.load %arg1[%c0, %c0_0, %c0_1] : memref<1x256x128xbf16, #tpu.memory_space<vmem>>, vector<1x256x128xbf16>
    %1 = vector.shape_cast %0 : vector<1x256x128xbf16> to vector<256x128xbf16>
    %c0_2 = arith.constant 0 : index
    %c0_3 = arith.constant 0 : index
    %2 = vector.load %arg2[%c0_2, %c0_3] : memref<128x128xbf16, #tpu.memory_space<vmem>>, vector<128x128xbf16>
    %cst = arith.constant dense<0.000000e+00> : vector<256x128xf32>
    %3 = tpu.matmul %1, %2, %cst {dimension_numbers = #tpu.dot_dimension_numbers<[1], [0], [0], [1], [0, 0, 1, 1], [], []>} : vector<256x128xbf16>, vector<128x128xbf16>, vector<256x128xf32> -> vector<256x128xf32>
    %c0_4 = arith.constant 0 : index
    %c0_5 = arith.constant 0 : index
    %4 = vector.load %arg3[%c0_4, %c0_5] : memref<1x128xf32, #tpu.memory_space<vmem>>, vector<1x128xf32>
    %5 = vector.broadcast %4 : vector<1x128xf32> to vector<256x128xf32>
    %6 = arith.addf %3, %5 : vector<256x128xf32>
    %7 = vector.shape_cast %6 : vector<256x128xf32> to vector<1x256x128xf32>
    %8 = arith.truncf %7 : vector<1x256x128xf32> to vector<1x256x128xbf16>
    %c0_6 = arith.constant 0 : index
    %c0_7 = arith.constant 0 : index
    %c0_8 = arith.constant 0 : index
    %9 = vector.load %arg4[%c0_6, %c0_7, %c0_8] : memref<1x256x128xbf16, #tpu.memory_space<vmem>>, vector<1x256x128xbf16>
    tpu.vector_store %arg4[%c0_6, %c0_7, %c0_8], %8 {strides = array<i32>} : memref<1x256x128xbf16, #tpu.memory_space<vmem>>, vector<1x256x128xbf16>,
    %cst_9 = arith.constant dense<0.000000e+00> : vector<128xf32>
    %10 = vector.multi_reduction <add>, %3, %cst_9 [0] : vector<256x128xf32> to vector<128xf32>
    %11 = vector.shape_cast %10 : vector<128xf32> to vector<1x128xf32>
    %12 = arith.mulf %3, %3 : vector<256x128xf32>
    %cst_10 = arith.constant dense<0.000000e+00> : vector<128xf32>
    %13 = vector.multi_reduction <add>, %12, %cst_10 [0] : vector<256x128xf32> to vector<128xf32>
    %14 = vector.shape_cast %13 : vector<128xf32> to vector<1x128xf32>
    %cst_11 = arith.constant 0.000000e+00 : f32
    %15 = vector.broadcast %cst_11 : f32 to vector<6x128xf32>
    %16 = tpu.concatenate %11, %14, %15 in 0 : vector<1x128xf32>, vector<1x128xf32>, vector<6x128xf32> -> vector<8x128xf32>
    %17 = vector.shape_cast %16 : vector<8x128xf32> to vector<1x8x128xf32>
    %c0_12 = arith.constant 0 : index
    %c0_13 = arith.constant 0 : index
    %c0_14 = arith.constant 0 : index
    %18 = vector.load %arg5[%c0_12, %c0_13, %c0_14] : memref<1x8x128xf32, #tpu.memory_space<vmem>>, vector<1x8x128xf32>
    tpu.vector_store %arg5[%c0_12, %c0_13, %c0_14], %17 {strides = array<i32>} : memref<1x8x128xf32, #tpu.memory_space<vmem>>, vector<1x8x128xf32>,
    return
  }
  func.func @transform_0(%arg0: i32) -> (i32, i32, i32) {
    %c0_i32 = arith.constant 0 : i32
    %c0_i32_0 = arith.constant 0 : i32
    %c0_i32_1 = arith.constant 0 : i32
    return %arg0, %c0_i32, %c0_i32_0 : i32, i32, i32
  }
  func.func @transform_1(%arg0: i32) -> (i32, i32) {
    %c0_i32 = arith.constant 0 : i32
    %c0_i32_0 = arith.constant 0 : i32
    %c0_i32_1 = arith.constant 0 : i32
    return %c0_i32, %c0_i32_0 : i32, i32
  }
  func.func @transform_2(%arg0: i32) -> (i32, i32) {
    %c0_i32 = arith.constant 0 : i32
    %c0_i32_0 = arith.constant 0 : i32
    %c0_i32_1 = arith.constant 0 : i32
    return %c0_i32, %c0_i32_0 : i32, i32
  }
  func.func @transform_3(%arg0: i32) -> (i32, i32, i32) {
    %c0_i32 = arith.constant 0 : i32
    %c0_i32_0 = arith.constant 0 : i32
    %c0_i32_1 = arith.constant 0 : i32
    return %arg0, %c0_i32, %c0_i32_0 : i32, i32, i32
  }
  func.func @transform_4(%arg0: i32) -> (i32, i32, i32) {
    %c0_i32 = arith.constant 0 : i32
    %c0_i32_0 = arith.constant 0 : i32
    %c0_i32_1 = arith.constant 0 : i32
    return %arg0, %c0_i32, %c0_i32_0 : i32, i32, i32
  }
}

module attributes {stable_mosaic.version = 11 : i64} {
  func.func @_conv3x3_fused_kernel(%arg0: i32, %arg1: i32, %arg2: memref<1x16x16x128xbf16, #tpu.memory_space<vmem>>, %arg3: memref<1x1x16x128xbf16, #tpu.memory_space<vmem>>, %arg4: memref<1x1x16x128xbf16, #tpu.memory_space<vmem>>, %arg5: memref<3x384x128xbf16, #tpu.memory_space<vmem>>, %arg6: memref<1x128xf32, #tpu.memory_space<vmem>>, %arg7: memref<1x128xf32, #tpu.memory_space<vmem>>, %arg8: memref<1x128xf32, #tpu.memory_space<vmem>>, %arg9: memref<1x1x256x128xf32, #tpu.memory_space<vmem>>, %arg10: memref<1x1x8x128xf32, #tpu.memory_space<vmem>>, %arg11: memref<256x128xf32, #tpu.memory_space<vmem>>) attributes {dimension_semantics = [#tpu.dimension_semantics<parallel>, #tpu.dimension_semantics<parallel>], iteration_bounds = array<i64: 2, 1>, scalar_prefetch = 0 : i64, scratch_operands = 1 : i64, tpu.core_type = #tpu.core_type<tc>, window_params = [{transform_indices = @transform_0, window_bounds = array<i64: 1, 16, 16, 128>}, {transform_indices = @transform_1, window_bounds = array<i64: 1, 1, 16, 128>}, {transform_indices = @transform_2, window_bounds = array<i64: 1, 1, 16, 128>}, {pipeline_mode = #tpu.pipeline_mode<synchronous>, transform_indices = @transform_3, window_bounds = array<i64: 3, 384, 128>}, {pipeline_mode = #tpu.pipeline_mode<synchronous>, transform_indices = @transform_4, window_bounds = array<i64: 1, 128>}, {pipeline_mode = #tpu.pipeline_mode<synchronous>, transform_indices = @transform_5, window_bounds = array<i64: 1, 128>}, {pipeline_mode = #tpu.pipeline_mode<synchronous>, transform_indices = @transform_6, window_bounds = array<i64: 1, 128>}, {transform_indices = @transform_7, window_bounds = array<i64: 1, 1, 256, 128>}, {transform_indices = @transform_8, window_bounds = array<i64: 1, 1, 8, 128>}]} {
    %c0 = arith.constant 0 : index
    %c0_0 = arith.constant 0 : index
    %0 = vector.load %arg7[%c0, %c0_0] : memref<1x128xf32, #tpu.memory_space<vmem>>, vector<1x128xf32>
    %1 = vector.shape_cast %0 : vector<1x128xf32> to vector<128xf32>
    %c0_1 = arith.constant 0 : index
    %c0_2 = arith.constant 0 : index
    %2 = vector.load %arg8[%c0_1, %c0_2] : memref<1x128xf32, #tpu.memory_space<vmem>>, vector<1x128xf32>
    %3 = vector.shape_cast %2 : vector<1x128xf32> to vector<128xf32>
    %c0_i32 = arith.constant 0 : i32
    %4 = arith.cmpi sgt, %arg1, %c0_i32 : i32
    %cst = arith.constant 1.000000e+00 : f32
    %cst_3 = arith.constant 0.000000e+00 : f32
    %5 = arith.select %4, %cst, %cst_3 : f32
    %c0_i32_4 = arith.constant 0 : i32
    %6 = arith.cmpi slt, %arg1, %c0_i32_4 : i32
    %cst_5 = arith.constant 1.000000e+00 : f32
    %cst_6 = arith.constant 0.000000e+00 : f32
    %7 = arith.select %6, %cst_5, %cst_6 : f32
    %c0_7 = arith.constant 0 : index
    %c0_8 = arith.constant 0 : index
    %c0_9 = arith.constant 0 : index
    %c0_10 = arith.constant 0 : index
    %8 = vector.load %arg3[%c0_7, %c0_8, %c0_9, %c0_10] : memref<1x1x16x128xbf16, #tpu.memory_space<vmem>>, vector<1x1x16x128xbf16>
    %9 = vector.shape_cast %8 : vector<1x1x16x128xbf16> to vector<1x16x128xbf16>
    %10 = arith.extf %9 : vector<1x16x128xbf16> to vector<1x16x128xf32>
    %11 = vector.shape_cast %1 : vector<128xf32> to vector<1x1x128xf32>
    %12 = vector.broadcast %11 : vector<1x1x128xf32> to vector<1x16x128xf32>
    %13 = arith.mulf %10, %12 : vector<1x16x128xf32>
    %14 = vector.shape_cast %3 : vector<128xf32> to vector<1x1x128xf32>
    %15 = vector.broadcast %14 : vector<1x1x128xf32> to vector<1x16x128xf32>
    %16 = arith.addf %13, %15 : vector<1x16x128xf32>
    %cst_11 = arith.constant 0.000000e+00 : f32
    %17 = vector.broadcast %cst_11 : f32 to vector<1x16x128xf32>
    %18 = arith.maximumf %16, %17 : vector<1x16x128xf32>
    %19 = vector.broadcast %5 : f32 to vector<1x16x128xf32>
    %20 = arith.mulf %18, %19 : vector<1x16x128xf32>
    %c0_12 = arith.constant 0 : index
    %c0_13 = arith.constant 0 : index
    %c0_14 = arith.constant 0 : index
    %c0_15 = arith.constant 0 : index
    %21 = vector.load %arg2[%c0_12, %c0_13, %c0_14, %c0_15] : memref<1x16x16x128xbf16, #tpu.memory_space<vmem>>, vector<1x16x16x128xbf16>
    %22 = vector.shape_cast %21 : vector<1x16x16x128xbf16> to vector<16x16x128xbf16>
    %23 = arith.extf %22 : vector<16x16x128xbf16> to vector<16x16x128xf32>
    %24 = vector.shape_cast %1 : vector<128xf32> to vector<1x1x128xf32>
    %25 = vector.broadcast %24 : vector<1x1x128xf32> to vector<16x16x128xf32>
    %26 = arith.mulf %23, %25 : vector<16x16x128xf32>
    %27 = vector.shape_cast %3 : vector<128xf32> to vector<1x1x128xf32>
    %28 = vector.broadcast %27 : vector<1x1x128xf32> to vector<16x16x128xf32>
    %29 = arith.addf %26, %28 : vector<16x16x128xf32>
    %cst_16 = arith.constant 0.000000e+00 : f32
    %30 = vector.broadcast %cst_16 : f32 to vector<16x16x128xf32>
    %31 = arith.maximumf %29, %30 : vector<16x16x128xf32>
    %c0_17 = arith.constant 0 : index
    %c0_18 = arith.constant 0 : index
    %c0_19 = arith.constant 0 : index
    %c0_20 = arith.constant 0 : index
    %32 = vector.load %arg4[%c0_17, %c0_18, %c0_19, %c0_20] : memref<1x1x16x128xbf16, #tpu.memory_space<vmem>>, vector<1x1x16x128xbf16>
    %33 = vector.shape_cast %32 : vector<1x1x16x128xbf16> to vector<1x16x128xbf16>
    %34 = arith.extf %33 : vector<1x16x128xbf16> to vector<1x16x128xf32>
    %35 = vector.shape_cast %1 : vector<128xf32> to vector<1x1x128xf32>
    %36 = vector.broadcast %35 : vector<1x1x128xf32> to vector<1x16x128xf32>
    %37 = arith.mulf %34, %36 : vector<1x16x128xf32>
    %38 = vector.shape_cast %3 : vector<128xf32> to vector<1x1x128xf32>
    %39 = vector.broadcast %38 : vector<1x1x128xf32> to vector<1x16x128xf32>
    %40 = arith.addf %37, %39 : vector<1x16x128xf32>
    %cst_21 = arith.constant 0.000000e+00 : f32
    %41 = vector.broadcast %cst_21 : f32 to vector<1x16x128xf32>
    %42 = arith.maximumf %40, %41 : vector<1x16x128xf32>
    %43 = vector.broadcast %7 : f32 to vector<1x16x128xf32>
    %44 = arith.mulf %42, %43 : vector<1x16x128xf32>
    %45 = tpu.concatenate %20, %31, %44 in 0 : vector<1x16x128xf32>, vector<16x16x128xf32>, vector<1x16x128xf32> -> vector<18x16x128xf32>
    %cst_22 = arith.constant 0.000000e+00 : f32
    %46 = vector.broadcast %cst_22 : f32 to vector<18x1x128xf32>
    %47 = tpu.concatenate %46, %45, %46 in 1 : vector<18x1x128xf32>, vector<18x16x128xf32>, vector<18x1x128xf32> -> vector<18x18x128xf32>
    %48 = arith.truncf %47 : vector<18x18x128xf32> to vector<18x18x128xbf16>
    %cst_23 = arith.constant 0.000000e+00 : f32
    %49 = vector.broadcast %cst_23 : f32 to vector<256x128xf32>
    %c0_24 = arith.constant 0 : index
    %c0_25 = arith.constant 0 : index
    %50 = vector.load %arg11[%c0_24, %c0_25] : memref<256x128xf32, #tpu.memory_space<vmem>>, vector<256x128xf32>
    tpu.vector_store %arg11[%c0_24, %c0_25], %49 {strides = array<i32>} : memref<256x128xf32, #tpu.memory_space<vmem>>, vector<256x128xf32>,
    %51 = vector.extract_strided_slice %48 {offsets = [0, 0, 0], sizes = [16, 18, 128], strides = [1, 1, 1]} : vector<18x18x128xbf16> to vector<16x18x128xbf16>
    %52 = vector.extract_strided_slice %51 {offsets = [0, 0, 0], sizes = [16, 16, 128], strides = [1, 1, 1]} : vector<16x18x128xbf16> to vector<16x16x128xbf16>
    %53 = vector.extract_strided_slice %51 {offsets = [0, 1, 0], sizes = [16, 16, 128], strides = [1, 1, 1]} : vector<16x18x128xbf16> to vector<16x16x128xbf16>
    %54 = vector.extract_strided_slice %51 {offsets = [0, 2, 0], sizes = [16, 16, 128], strides = [1, 1, 1]} : vector<16x18x128xbf16> to vector<16x16x128xbf16>
    %55 = tpu.concatenate %52, %53, %54 in 2 : vector<16x16x128xbf16>, vector<16x16x128xbf16>, vector<16x16x128xbf16> -> vector<16x16x384xbf16>
    %56 = vector.shape_cast %55 : vector<16x16x384xbf16> to vector<256x384xbf16>
    %c0_26 = arith.constant 0 : index
    %c0_27 = arith.constant 0 : index
    %57 = vector.load %arg11[%c0_26, %c0_27] : memref<256x128xf32, #tpu.memory_space<vmem>>, vector<256x128xf32>
    %c0_28 = arith.constant 0 : index
    %c0_29 = arith.constant 0 : index
    %c0_30 = arith.constant 0 : index
    %58 = vector.load %arg5[%c0_28, %c0_29, %c0_30] : memref<3x384x128xbf16, #tpu.memory_space<vmem>>, vector<1x384x128xbf16>
    %59 = vector.shape_cast %58 : vector<1x384x128xbf16> to vector<384x128xbf16>
    %cst_31 = arith.constant dense<0.000000e+00> : vector<256x128xf32>
    %60 = tpu.matmul %56, %59, %cst_31 {dimension_numbers = #tpu.dot_dimension_numbers<[1], [0], [0], [1], [0, 0, 1, 1], [], []>} : vector<256x384xbf16>, vector<384x128xbf16>, vector<256x128xf32> -> vector<256x128xf32>
    %61 = arith.addf %57, %60 : vector<256x128xf32>
    %c0_32 = arith.constant 0 : index
    %c0_33 = arith.constant 0 : index
    %62 = vector.load %arg11[%c0_32, %c0_33] : memref<256x128xf32, #tpu.memory_space<vmem>>, vector<256x128xf32>
    tpu.vector_store %arg11[%c0_32, %c0_33], %61 {strides = array<i32>} : memref<256x128xf32, #tpu.memory_space<vmem>>, vector<256x128xf32>,
    %63 = vector.extract_strided_slice %48 {offsets = [1, 0, 0], sizes = [16, 18, 128], strides = [1, 1, 1]} : vector<18x18x128xbf16> to vector<16x18x128xbf16>
    %64 = vector.extract_strided_slice %63 {offsets = [0, 0, 0], sizes = [16, 16, 128], strides = [1, 1, 1]} : vector<16x18x128xbf16> to vector<16x16x128xbf16>
    %65 = vector.extract_strided_slice %63 {offsets = [0, 1, 0], sizes = [16, 16, 128], strides = [1, 1, 1]} : vector<16x18x128xbf16> to vector<16x16x128xbf16>
    %66 = vector.extract_strided_slice %63 {offsets = [0, 2, 0], sizes = [16, 16, 128], strides = [1, 1, 1]} : vector<16x18x128xbf16> to vector<16x16x128xbf16>
    %67 = tpu.concatenate %64, %65, %66 in 2 : vector<16x16x128xbf16>, vector<16x16x128xbf16>, vector<16x16x128xbf16> -> vector<16x16x384xbf16>
    %68 = vector.shape_cast %67 : vector<16x16x384xbf16> to vector<256x384xbf16>
    %c0_34 = arith.constant 0 : index
    %c0_35 = arith.constant 0 : index
    %69 = vector.load %arg11[%c0_34, %c0_35] : memref<256x128xf32, #tpu.memory_space<vmem>>, vector<256x128xf32>
    %c1 = arith.constant 1 : index
    %c0_36 = arith.constant 0 : index
    %c0_37 = arith.constant 0 : index
    %70 = vector.load %arg5[%c1, %c0_36, %c0_37] : memref<3x384x128xbf16, #tpu.memory_space<vmem>>, vector<1x384x128xbf16>
    %71 = vector.shape_cast %70 : vector<1x384x128xbf16> to vector<384x128xbf16>
    %cst_38 = arith.constant dense<0.000000e+00> : vector<256x128xf32>
    %72 = tpu.matmul %68, %71, %cst_38 {dimension_numbers = #tpu.dot_dimension_numbers<[1], [0], [0], [1], [0, 0, 1, 1], [], []>} : vector<256x384xbf16>, vector<384x128xbf16>, vector<256x128xf32> -> vector<256x128xf32>
    %73 = arith.addf %69, %72 : vector<256x128xf32>
    %c0_39 = arith.constant 0 : index
    %c0_40 = arith.constant 0 : index
    %74 = vector.load %arg11[%c0_39, %c0_40] : memref<256x128xf32, #tpu.memory_space<vmem>>, vector<256x128xf32>
    tpu.vector_store %arg11[%c0_39, %c0_40], %73 {strides = array<i32>} : memref<256x128xf32, #tpu.memory_space<vmem>>, vector<256x128xf32>,
    %75 = vector.extract_strided_slice %48 {offsets = [2, 0, 0], sizes = [16, 18, 128], strides = [1, 1, 1]} : vector<18x18x128xbf16> to vector<16x18x128xbf16>
    %76 = vector.extract_strided_slice %75 {offsets = [0, 0, 0], sizes = [16, 16, 128], strides = [1, 1, 1]} : vector<16x18x128xbf16> to vector<16x16x128xbf16>
    %77 = vector.extract_strided_slice %75 {offsets = [0, 1, 0], sizes = [16, 16, 128], strides = [1, 1, 1]} : vector<16x18x128xbf16> to vector<16x16x128xbf16>
    %78 = vector.extract_strided_slice %75 {offsets = [0, 2, 0], sizes = [16, 16, 128], strides = [1, 1, 1]} : vector<16x18x128xbf16> to vector<16x16x128xbf16>
    %79 = tpu.concatenate %76, %77, %78 in 2 : vector<16x16x128xbf16>, vector<16x16x128xbf16>, vector<16x16x128xbf16> -> vector<16x16x384xbf16>
    %80 = vector.shape_cast %79 : vector<16x16x384xbf16> to vector<256x384xbf16>
    %c0_41 = arith.constant 0 : index
    %c0_42 = arith.constant 0 : index
    %81 = vector.load %arg11[%c0_41, %c0_42] : memref<256x128xf32, #tpu.memory_space<vmem>>, vector<256x128xf32>
    %c2 = arith.constant 2 : index
    %c0_43 = arith.constant 0 : index
    %c0_44 = arith.constant 0 : index
    %82 = vector.load %arg5[%c2, %c0_43, %c0_44] : memref<3x384x128xbf16, #tpu.memory_space<vmem>>, vector<1x384x128xbf16>
    %83 = vector.shape_cast %82 : vector<1x384x128xbf16> to vector<384x128xbf16>
    %cst_45 = arith.constant dense<0.000000e+00> : vector<256x128xf32>
    %84 = tpu.matmul %80, %83, %cst_45 {dimension_numbers = #tpu.dot_dimension_numbers<[1], [0], [0], [1], [0, 0, 1, 1], [], []>} : vector<256x384xbf16>, vector<384x128xbf16>, vector<256x128xf32> -> vector<256x128xf32>
    %85 = arith.addf %81, %84 : vector<256x128xf32>
    %c0_46 = arith.constant 0 : index
    %c0_47 = arith.constant 0 : index
    %86 = vector.load %arg11[%c0_46, %c0_47] : memref<256x128xf32, #tpu.memory_space<vmem>>, vector<256x128xf32>
    tpu.vector_store %arg11[%c0_46, %c0_47], %85 {strides = array<i32>} : memref<256x128xf32, #tpu.memory_space<vmem>>, vector<256x128xf32>,
    %c0_48 = arith.constant 0 : index
    %c0_49 = arith.constant 0 : index
    %87 = vector.load %arg11[%c0_48, %c0_49] : memref<256x128xf32, #tpu.memory_space<vmem>>, vector<256x128xf32>
    %c0_50 = arith.constant 0 : index
    %c0_51 = arith.constant 0 : index
    %88 = vector.load %arg6[%c0_50, %c0_51] : memref<1x128xf32, #tpu.memory_space<vmem>>, vector<1x128xf32>
    %89 = vector.broadcast %88 : vector<1x128xf32> to vector<256x128xf32>
    %90 = arith.addf %87, %89 : vector<256x128xf32>
    %91 = vector.shape_cast %90 : vector<256x128xf32> to vector<1x1x256x128xf32>
    %c0_52 = arith.constant 0 : index
    %c0_53 = arith.constant 0 : index
    %c0_54 = arith.constant 0 : index
    %c0_55 = arith.constant 0 : index
    %92 = vector.load %arg9[%c0_52, %c0_53, %c0_54, %c0_55] : memref<1x1x256x128xf32, #tpu.memory_space<vmem>>, vector<1x1x256x128xf32>
    tpu.vector_store %arg9[%c0_52, %c0_53, %c0_54, %c0_55], %91 {strides = array<i32>} : memref<1x1x256x128xf32, #tpu.memory_space<vmem>>, vector<1x1x256x128xf32>,
    %cst_56 = arith.constant dense<0.000000e+00> : vector<128xf32>
    %93 = vector.multi_reduction <add>, %87, %cst_56 [0] : vector<256x128xf32> to vector<128xf32>
    %94 = vector.shape_cast %93 : vector<128xf32> to vector<1x128xf32>
    %95 = arith.mulf %87, %87 : vector<256x128xf32>
    %cst_57 = arith.constant dense<0.000000e+00> : vector<128xf32>
    %96 = vector.multi_reduction <add>, %95, %cst_57 [0] : vector<256x128xf32> to vector<128xf32>
    %97 = vector.shape_cast %96 : vector<128xf32> to vector<1x128xf32>
    %cst_58 = arith.constant 0.000000e+00 : f32
    %98 = vector.broadcast %cst_58 : f32 to vector<6x128xf32>
    %99 = tpu.concatenate %94, %97, %98 in 0 : vector<1x128xf32>, vector<1x128xf32>, vector<6x128xf32> -> vector<8x128xf32>
    %100 = vector.shape_cast %99 : vector<8x128xf32> to vector<1x1x8x128xf32>
    %c0_59 = arith.constant 0 : index
    %c0_60 = arith.constant 0 : index
    %c0_61 = arith.constant 0 : index
    %c0_62 = arith.constant 0 : index
    %101 = vector.load %arg10[%c0_59, %c0_60, %c0_61, %c0_62] : memref<1x1x8x128xf32, #tpu.memory_space<vmem>>, vector<1x1x8x128xf32>
    tpu.vector_store %arg10[%c0_59, %c0_60, %c0_61, %c0_62], %100 {strides = array<i32>} : memref<1x1x8x128xf32, #tpu.memory_space<vmem>>, vector<1x1x8x128xf32>,
    return
  }
  func.func @transform_0(%arg0: i32, %arg1: i32) -> (i32, i32, i32, i32) {
    %c0_i32 = arith.constant 0 : i32
    %c0_i32_0 = arith.constant 0 : i32
    %c0_i32_1 = arith.constant 0 : i32
    return %arg0, %arg1, %c0_i32, %c0_i32_0 : i32, i32, i32, i32
  }
  func.func @transform_1(%arg0: i32, %arg1: i32) -> (i32, i32, i32, i32) {
    %c16_i32 = arith.constant 16 : i32
    %0 = arith.muli %arg1, %c16_i32 : i32
    %c1_i32 = arith.constant 1 : i32
    %1 = arith.subi %0, %c1_i32 : i32
    %c0_i32 = arith.constant 0 : i32
    %2 = arith.maxsi %1, %c0_i32 : i32
    %c0_i32_0 = arith.constant 0 : i32
    %c0_i32_1 = arith.constant 0 : i32
    %c0_i32_2 = arith.constant 0 : i32
    return %arg0, %2, %c0_i32_0, %c0_i32_1 : i32, i32, i32, i32
  }
  func.func @transform_2(%arg0: i32, %arg1: i32) -> (i32, i32, i32, i32) {
    %c16_i32 = arith.constant 16 : i32
    %0 = arith.muli %arg1, %c16_i32 : i32
    %c16_i32_0 = arith.constant 16 : i32
    %1 = arith.addi %0, %c16_i32_0 : i32
    %c15_i32 = arith.constant 15 : i32
    %2 = arith.minsi %1, %c15_i32 : i32
    %c0_i32 = arith.constant 0 : i32
    %c0_i32_1 = arith.constant 0 : i32
    %c0_i32_2 = arith.constant 0 : i32
    return %arg0, %2, %c0_i32, %c0_i32_1 : i32, i32, i32, i32
  }
  func.func @transform_3(%arg0: i32, %arg1: i32) -> (i32, i32, i32) {
    %c0_i32 = arith.constant 0 : i32
    %c0_i32_0 = arith.constant 0 : i32
    %c0_i32_1 = arith.constant 0 : i32
    %c0_i32_2 = arith.constant 0 : i32
    return %c0_i32, %c0_i32_0, %c0_i32_1 : i32, i32, i32
  }
  func.func @transform_4(%arg0: i32, %arg1: i32) -> (i32, i32) {
    %c0_i32 = arith.constant 0 : i32
    %c0_i32_0 = arith.constant 0 : i32
    %c0_i32_1 = arith.constant 0 : i32
    return %c0_i32, %c0_i32_0 : i32, i32
  }
  func.func @transform_5(%arg0: i32, %arg1: i32) -> (i32, i32) {
    %c0_i32 = arith.constant 0 : i32
    %c0_i32_0 = arith.constant 0 : i32
    %c0_i32_1 = arith.constant 0 : i32
    return %c0_i32, %c0_i32_0 : i32, i32
  }
  func.func @transform_6(%arg0: i32, %arg1: i32) -> (i32, i32) {
    %c0_i32 = arith.constant 0 : i32
    %c0_i32_0 = arith.constant 0 : i32
    %c0_i32_1 = arith.constant 0 : i32
    return %c0_i32, %c0_i32_0 : i32, i32
  }
  func.func @transform_7(%arg0: i32, %arg1: i32) -> (i32, i32, i32, i32) {
    %c0_i32 = arith.constant 0 : i32
    %c0_i32_0 = arith.constant 0 : i32
    %c0_i32_1 = arith.constant 0 : i32
    return %arg0, %arg1, %c0_i32, %c0_i32_0 : i32, i32, i32, i32
  }
  func.func @transform_8(%arg0: i32, %arg1: i32) -> (i32, i32, i32, i32) {
    %c0_i32 = arith.constant 0 : i32
    %c0_i32_0 = arith.constant 0 : i32
    %c0_i32_1 = arith.constant 0 : i32
    return %arg0, %arg1, %c0_i32, %c0_i32_0 : i32, i32, i32, i32
  }
}

module attributes {stable_mosaic.version = 11 : i64} {
  func.func @_bn_relu_kernel(%arg0: i32, %arg1: memref<1x256x128xf32, #tpu.memory_space<vmem>>, %arg2: memref<1x128xf32, #tpu.memory_space<vmem>>, %arg3: memref<1x128xf32, #tpu.memory_space<vmem>>, %arg4: memref<1x256x128xf32, #tpu.memory_space<vmem>>) attributes {dimension_semantics = [#tpu.dimension_semantics<parallel>], iteration_bounds = array<i64: 2>, scalar_prefetch = 0 : i64, scratch_operands = 0 : i64, tpu.core_type = #tpu.core_type<tc>, window_params = [{transform_indices = @transform_0, window_bounds = array<i64: 1, 256, 128>}, {pipeline_mode = #tpu.pipeline_mode<synchronous>, transform_indices = @transform_1, window_bounds = array<i64: 1, 128>}, {pipeline_mode = #tpu.pipeline_mode<synchronous>, transform_indices = @transform_2, window_bounds = array<i64: 1, 128>}, {transform_indices = @transform_3, window_bounds = array<i64: 1, 256, 128>}]} {
    %c0 = arith.constant 0 : index
    %c0_0 = arith.constant 0 : index
    %c0_1 = arith.constant 0 : index
    %0 = vector.load %arg1[%c0, %c0_0, %c0_1] : memref<1x256x128xf32, #tpu.memory_space<vmem>>, vector<1x256x128xf32>
    %c0_2 = arith.constant 0 : index
    %c0_3 = arith.constant 0 : index
    %1 = vector.load %arg2[%c0_2, %c0_3] : memref<1x128xf32, #tpu.memory_space<vmem>>, vector<1x128xf32>
    %2 = vector.shape_cast %1 : vector<1x128xf32> to vector<1x1x128xf32>
    %3 = vector.broadcast %2 : vector<1x1x128xf32> to vector<1x256x128xf32>
    %4 = arith.mulf %0, %3 : vector<1x256x128xf32>
    %c0_4 = arith.constant 0 : index
    %c0_5 = arith.constant 0 : index
    %5 = vector.load %arg3[%c0_4, %c0_5] : memref<1x128xf32, #tpu.memory_space<vmem>>, vector<1x128xf32>
    %6 = vector.shape_cast %5 : vector<1x128xf32> to vector<1x1x128xf32>
    %7 = vector.broadcast %6 : vector<1x1x128xf32> to vector<1x256x128xf32>
    %8 = arith.addf %4, %7 : vector<1x256x128xf32>
    %cst = arith.constant 0.000000e+00 : f32
    %9 = vector.broadcast %cst : f32 to vector<1x256x128xf32>
    %10 = arith.maximumf %8, %9 : vector<1x256x128xf32>
    %c0_6 = arith.constant 0 : index
    %c0_7 = arith.constant 0 : index
    %c0_8 = arith.constant 0 : index
    %11 = vector.load %arg4[%c0_6, %c0_7, %c0_8] : memref<1x256x128xf32, #tpu.memory_space<vmem>>, vector<1x256x128xf32>
    tpu.vector_store %arg4[%c0_6, %c0_7, %c0_8], %10 {strides = array<i32>} : memref<1x256x128xf32, #tpu.memory_space<vmem>>, vector<1x256x128xf32>,
    return
  }
  func.func @transform_0(%arg0: i32) -> (i32, i32, i32) {
    %c0_i32 = arith.constant 0 : i32
    %c0_i32_0 = arith.constant 0 : i32
    %c0_i32_1 = arith.constant 0 : i32
    return %arg0, %c0_i32, %c0_i32_0 : i32, i32, i32
  }
  func.func @transform_1(%arg0: i32) -> (i32, i32) {
    %c0_i32 = arith.constant 0 : i32
    %c0_i32_0 = arith.constant 0 : i32
    %c0_i32_1 = arith.constant 0 : i32
    return %c0_i32, %c0_i32_0 : i32, i32
  }
  func.func @transform_2(%arg0: i32) -> (i32, i32) {
    %c0_i32 = arith.constant 0 : i32
    %c0_i32_0 = arith.constant 0 : i32
    %c0_i32_1 = arith.constant 0 : i32
    return %c0_i32, %c0_i32_0 : i32, i32
  }
  func.func @transform_3(%arg0: i32) -> (i32, i32, i32) {
    %c0_i32 = arith.constant 0 : i32
    %c0_i32_0 = arith.constant 0 : i32
    %c0_i32_1 = arith.constant 0 : i32
    return %arg0, %c0_i32, %c0_i32_0 : i32, i32, i32
  }
}

</mosaic_0001>

<llo_original>
// kernel: double_conv.3
$region0: #{double_conv.3}
  #allocation0 [shape = 'u32[]', space=smem, size = 0x4, offset = 0x4, fixed_abs, tag = 'smem constant byte address 0x4 - core index']
  #allocation1 [shape = 'u32[144,128]{1,0:T(1,128)}', space=vmem, size = 0x12000, scoped, tag = 'internal scratch']
  %s0 = inlined_call_operand.vmem [shape: bf16[2,256,128], index: 0, kind: input, shape index: {}]
  %s1 = inlined_call_operand.vmem [shape: bf16[128,128], index: 1, kind: input, shape index: {}]
  %s2 = inlined_call_operand.vmem [shape: f32[1,128], index: 2, kind: input, shape index: {}]
  %s3 = inlined_call_operand.vmem [shape: bf16[2,256,128], index: 3, kind: output, shape index: {0}]
  %s4 = inlined_call_operand.vmem [shape: f32[2,8,128], index: 4, kind: output, shape index: {1}]
  %5 = xla_tuple %s3, %s4
  %s6 = sld [smem:[#allocation0]]
  $region53: #{double_conv.3} parent=0
    _
  %s8 = ssub.s32 1, %s6
  %s9 = scalar_select 0, %s8, %s6
  loop: start=0, step=1, limit=4
  $region2: #{double_conv.3} parent=0 // loop_pre_header
    _
  $region3: #{double_conv.3} parent=0 // loop_header
    %s11 = sphi 0, %s15
    %p12 = scmp.ge.s32.totalorder %s11, 4
    %s21 = sphi 0, %s23
    %s24 = sphi 0, %s21
    %s25 = sphi 0, %s24
    %s41 = sphi 0, %s25
    %s45 = sphi 0, %s45
    %s47 = sphi 0, %s45
    %s48 = sphi 0, %s47
    %s62 = sphi 0, %s48
    %s66 = sphi 0, %s66
    %s68 = sphi 0, %s66
    %s69 = sphi 0, %s68
    %s83 = sphi 0, %s69
    %s89 = sphi 0, %s91
    %s92 = sphi 0, %s89
    %s93 = sphi 0, %s92
    %s109 = sphi 0, %s93
    %s115 = sphi 0, %s117
    %s118 = sphi 0, %s115
    %s119 = sphi 0, %s118
    %s135 = sphi 0, %s119
  $region4: #{double_conv.3} parent=0 // loop_header_branch
    %14 = sbr.rel (%p12) target = $region8
  $region5: #{double_conv.3} parent=0 // loop_body
    %s16 = ssub.s32 %s11, 1
    %s17 = ssub.s32 %s11, 2
    %s18 = sadd.s32 %s11, 1
    %s19 = ssub.s32 %s11, %s18
    %p20 = scmp.eq.s32.totalorder %s19, 0
    %s22 = sadd.s32 %s21, 1
    %s23 = scalar_select %p20, %s21, %s22
    %p26 = pneg %p20
    %p27 = scmp.eq.s32.totalorder %s11, 1
    %p28 = por %p26, %p27
    %p29 = scmp.ne.s32.totalorder %s21, %s24
    %p30 = scmp.eq.s32.totalorder %s11, 0
    %p31 = por %p29, %p30
    %p32 = scmp.ne.s32.totalorder %s21, %s24
    %p33 = scmp.eq.s32.totalorder %s16, 1
    %p34 = por %p32, %p33
    %p35 = scmp.ne.s32.totalorder %s24, %s25
    %p36 = scmp.eq.s32.totalorder %s16, 0
    %p37 = por %p35, %p36
    %p38 = scmp.ne.s32.totalorder %s24, %s25
    %p39 = scmp.eq.s32.totalorder %s17, 1
    %p40 = por %p38, %p39
    %p42 = scmp.ne.s32.totalorder %s25, %s41
    %p43 = scmp.eq.s32.totalorder %s17, 0
    %p44 = por %p42, %p43
    %s46 = sadd.s32 %s45, 1
    %p49 = scmp.eq.s32.totalorder %s11, 1
    %p50 = scmp.ne.s32.totalorder %s45, %s47
    %p51 = scmp.eq.s32.totalorder %s11, 0
    %p52 = por %p50, %p51
    %p53 = scmp.ne.s32.totalorder %s45, %s47
    %p54 = scmp.eq.s32.totalorder %s16, 1
    %p55 = por %p53, %p54
    %p56 = scmp.ne.s32.totalorder %s47, %s48
    %p57 = scmp.eq.s32.totalorder %s16, 0
    %p58 = por %p56, %p57
    %p59 = scmp.ne.s32.totalorder %s47, %s48
    %p60 = scmp.eq.s32.totalorder %s17, 1
    %p61 = por %p59, %p60
    %p63 = scmp.ne.s32.totalorder %s48, %s62
    %p64 = scmp.eq.s32.totalorder %s17, 0
    %p65 = por %p63, %p64
    %s67 = sadd.s32 %s66, 1
    %p70 = scmp.eq.s32.totalorder %s11, 1
    %p71 = scmp.ne.s32.totalorder %s66, %s68
    %p72 = scmp.eq.s32.totalorder %s11, 0
    %p73 = por %p71, %p72
    %p74 = scmp.ne.s32.totalorder %s66, %s68
    %p75 = scmp.eq.s32.totalorder %s16, 1
    %p76 = por %p74, %p75
    %p77 = scmp.ne.s32.totalorder %s68, %s69
    %p78 = scmp.eq.s32.totalorder %s16, 0
    %p79 = por %p77, %p78
    %p80 = scmp.ne.s32.totalorder %s68, %s69
    %p81 = scmp.eq.s32.totalorder %s17, 1
    %p82 = por %p80, %p81
    %p84 = scmp.ne.s32.totalorder %s69, %s83
    %p85 = scmp.eq.s32.totalorder %s17, 0
    %p86 = por %p84, %p85
    %s87 = ssub.s32 %s11, %s18
    %p88 = scmp.eq.s32.totalorder %s87, 0
    %s90 = sadd.s32 %s89, 1
    %s91 = scalar_select %p88, %s89, %s90
    %p94 = pneg %p88
    %p95 = scmp.eq.s32.totalorder %s11, 1
    %p96 = por %p94, %p95
    %p97 = scmp.ne.s32.totalorder %s89, %s92
    %p98 = scmp.eq.s32.totalorder %s11, 0
    %p99 = por %p97, %p98
    %p100 = scmp.ne.s32.totalorder %s89, %s92
    %p101 = scmp.eq.s32.totalorder %s16, 1
    %p102 = por %p100, %p101
    %p103 = scmp.ne.s32.totalorder %s92, %s93
    %p104 = scmp.eq.s32.totalorder %s16, 0
    %p105 = por %p103, %p104
    %p106 = scmp.ne.s32.totalorder %s92, %s93
    %p107 = scmp.eq.s32.totalorder %s17, 1
    %p108 = por %p106, %p107
    %p110 = scmp.ne.s32.totalorder %s93, %s109
    %p111 = scmp.eq.s32.totalorder %s17, 0
    %p112 = por %p110, %p111
    %s113 = ssub.s32 %s11, %s18
    %p114 = scmp.eq.s32.totalorder %s113, 0
    %s116 = sadd.s32 %s115, 1
    %s117 = scalar_select %p114, %s115, %s116
    %p120 = pneg %p114
    %p121 = scmp.eq.s32.totalorder %s11, 1
    %p122 = por %p120, %p121
    %p123 = scmp.ne.s32.totalorder %s115, %s118
    %p124 = scmp.eq.s32.totalorder %s11, 0
    %p125 = por %p123, %p124
    %p126 = scmp.ne.s32.totalorder %s115, %s118
    %p127 = scmp.eq.s32.totalorder %s16, 1
    %p128 = por %p126, %p127
    %p129 = scmp.ne.s32.totalorder %s118, %s119
    %p130 = scmp.eq.s32.totalorder %s16, 0
    %p131 = por %p129, %p130
    %p132 = scmp.ne.s32.totalorder %s118, %s119
    %p133 = scmp.eq.s32.totalorder %s17, 1
    %p134 = por %p132, %p133
    %p136 = scmp.ne.s32.totalorder %s119, %s135
    %p137 = scmp.eq.s32.totalorder %s17, 0
    %p138 = por %p136, %p137
    %p139 = scmp.le.s32.totalorder 1, %s11
    %p140 = scmp.lt.s32.totalorder %s11, 3
    %p141 = pnand %p139, %p140
    %p142 = pneg %p141
    // Predicated region
    $region9: #{double_conv.3} parent=5 // pred_check
      _
    $region10: #{double_conv.3} parent=5 // pred_check_branch
      %144 = sbr.rel (%p141) target = $region12
    $region11: #{double_conv.3} parent=5 // pred_region
      %s145 = ssub.s32 %s11, 1
      // Predicated region
      $region13: #{double_conv.3} parent=11 // pred_check
        %p146 = pneg %p58
      $region14: #{double_conv.3} parent=11 // pred_check_branch
        %148 = sbr.rel (%p146) target = $region16
      $region15: #{double_conv.3} parent=11 // pred_region
        _
      $region16: #{double_conv.3} parent=11 // pred_fallthru
        _
      // Predicated region
      $region17: #{double_conv.3} parent=11 // pred_check
        %p149 = pneg %p79
      $region18: #{double_conv.3} parent=11 // pred_check_branch
        %151 = sbr.rel (%p149) target = $region20
      $region19: #{double_conv.3} parent=11 // pred_region
        _
      $region20: #{double_conv.3} parent=11 // pred_fallthru
        _
    $region12: #{double_conv.3} parent=5 // pred_fallthru
      _
    %p152 = scmp.lt.s32.totalorder %s11, 2
    // Predicated region
    $region21: #{double_conv.3} parent=5 // pred_check
      %p153 = pneg %p152
    $region22: #{double_conv.3} parent=5 // pred_check_branch
      %155 = sbr.rel (%p153) target = $region24
    $region23: #{double_conv.3} parent=5 // pred_region
      // Predicated region
      $region25: #{double_conv.3} parent=23 // pred_check
        %p156 = pneg %p31
      $region26: #{double_conv.3} parent=23 // pred_check_branch
        %158 = sbr.rel (%p156) target = $region28
      $region27: #{double_conv.3} parent=23 // pred_region
        %p159 = scmp.lt.s32.totalorder %s11, 1
        %s160 = scalar_select %p159, %s11, 1
        %s161 = smul.addr %s160, 32
        %s162 = smul.addr %s161, 4
        %s163 = scalar_lea.vmem %s0, %s162
      $region28: #{double_conv.3} parent=23 // pred_fallthru
        _
    $region24: #{double_conv.3} parent=5 // pred_fallthru
      _
    %p164 = scmp.le.s32.totalorder 1, %s11
    %p165 = scmp.lt.s32.totalorder %s11, 3
    %p166 = pnand %p164, %p165
    %p167 = pneg %p166
    // Predicated region
    $region29: #{double_conv.3} parent=5 // pred_check
      _
    $region30: #{double_conv.3} parent=5 // pred_check_branch
      %169 = sbr.rel (%p166) target = $region32
    $region31: #{double_conv.3} parent=5 // pred_region
      %s170 = ssub.s32 %s11, 1
      %p171 = scmp.lt.s32.totalorder %s16, 1
      %s172 = scalar_select %p171, %s16, 1
      %s173 = smul.addr %s172, 32
      %s174 = smul.addr %s173, 4
      %s175 = scalar_lea.vmem %s0, %s174
      %p176 = pneg %p37
      %p177 = pneg %p34
      %p178 = pneg %p58
      %p179 = pneg %p55
      %p180 = pneg %p79
      %p181 = pneg %p76
      %p182 = pneg %p105
      %p183 = pneg %p102
      %p184 = scmp.lt.s32.totalorder %s16, 1
      %s185 = scalar_select %p184, %s16, 1
      %s186 = smul.addr %s185, 32
      %s187 = smul.addr %s186, 4
      %s188 = scalar_lea.vmem %s3, %s187
      %p189 = pneg %p131
      %p190 = pneg %p128
      %p191 = scmp.lt.s32.totalorder %s16, 1
      %s192 = scalar_select %p191, %s16, 1
      %s193 = smul.addr %s192, 8
      %s194 = scalar_lea.vmem %s4, %s193
      %p195 = scmp.lt.s32.totalorder %s16, 1
      %s196 = scalar_select %p195, %s16, 1
      %s197 = smul.addr %s196, 32
      %s198 = smul.addr %s197, 4
      %s199 = scalar_lea.vmem %s0, %s198
      %p200 = scmp.lt.s32.totalorder %s16, 1
      %s201 = scalar_select %p200, %s16, 1
      %s202 = smul.addr %s201, 32
      %s203 = smul.addr %s202, 4
      %s204 = scalar_lea.vmem %s3, %s203
      %p205 = scmp.lt.s32.totalorder %s16, 1
      %s206 = scalar_select %p205, %s16, 1
      %s207 = smul.addr %s206, 8
      %s208 = scalar_lea.vmem %s4, %s207
      %v210 = vld [vmem:[%s199] sm:$0xf]
      %v211 = vld [vmem:[%s199 + $0x4] sm:$0xf]
      %v212 = vld [vmem:[%s199 + $0x8] sm:$0xf]
      %v213 = vld [vmem:[%s199 + $0xc] sm:$0xf]
      %v214 = vld [vmem:[%s199 + $0x10] sm:$0xf]
      %v215 = vld [vmem:[%s199 + $0x14] sm:$0xf]
      %v216 = vld [vmem:[%s199 + $0x18] sm:$0xf]
      %v217 = vld [vmem:[%s199 + $0x1c] sm:$0xf]
      %v218 = vld [vmem:[%s199 + $0x20] sm:$0xf]
      %v219 = vld [vmem:[%s199 + $0x24] sm:$0xf]
      %v220 = vld [vmem:[%s199 + $0x28] sm:$0xf]
      %v221 = vld [vmem:[%s199 + $0x2c] sm:$0xf]
      %v222 = vld [vmem:[%s199 + $0x30] sm:$0xf]
      %v223 = vld [vmem:[%s199 + $0x34] sm:$0xf]
      %v224 = vld [vmem:[%s199 + $0x38] sm:$0xf]
      %v225 = vld [vmem:[%s199 + $0x3c] sm:$0xf]
      %v226 = vld [vmem:[%s199 + $0x40] sm:$0xf]
      %v227 = vld [vmem:[%s199 + $0x44] sm:$0xf]
      %v228 = vld [vmem:[%s199 + $0x48] sm:$0xf]
      %v229 = vld [vmem:[%s199 + $0x4c] sm:$0xf]
      %v230 = vld [vmem:[%s199 + $0x50] sm:$0xf]
      %v231 = vld [vmem:[%s199 + $0x54] sm:$0xf]
      %v232 = vld [vmem:[%s199 + $0x58] sm:$0xf]
      %v233 = vld [vmem:[%s199 + $0x5c] sm:$0xf]
      %v234 = vld [vmem:[%s199 + $0x60] sm:$0xf]
      %v235 = vld [vmem:[%s199 + $0x64] sm:$0xf]
      %v236 = vld [vmem:[%s199 + $0x68] sm:$0xf]
      %v237 = vld [vmem:[%s199 + $0x6c] sm:$0xf]
      %v238 = vld [vmem:[%s199 + $0x70] sm:$0xf]
      %v239 = vld [vmem:[%s199 + $0x74] sm:$0xf]
      %v240 = vld [vmem:[%s199 + $0x78] sm:$0xf]
      %v241 = vld [vmem:[%s199 + $0x7c] sm:$0xf]
      %v242 = vld [vmem:[%s1] sm:$0xf]
      %v243 = vld [vmem:[%s1 + $0x4] sm:$0xf]
      %v244 = vld [vmem:[%s1 + $0x8] sm:$0xf]
      %v245 = vld [vmem:[%s1 + $0xc] sm:$0xf]
      %v246 = vld [vmem:[%s1 + $0x10] sm:$0xf]
      %v247 = vld [vmem:[%s1 + $0x14] sm:$0xf]
      %v248 = vld [vmem:[%s1 + $0x18] sm:$0xf]
      %v249 = vld [vmem:[%s1 + $0x1c] sm:$0xf]
      %v250 = vld [vmem:[%s1 + $0x20] sm:$0xf]
      %v251 = vld [vmem:[%s1 + $0x24] sm:$0xf]
      %v252 = vld [vmem:[%s1 + $0x28] sm:$0xf]
      %v253 = vld [vmem:[%s1 + $0x2c] sm:$0xf]
      %v254 = vld [vmem:[%s1 + $0x30] sm:$0xf]
      %v255 = vld [vmem:[%s1 + $0x34] sm:$0xf]
      %v256 = vld [vmem:[%s1 + $0x38] sm:$0xf]
      %v257 = vld [vmem:[%s1 + $0x3c] sm:$0xf]
      %v290 = vunpack.c.l.b16 %v210
      %v291 = vunpack.c.l.b16 %v211
      %v292 = vunpack.c.l.b16 %v212
      %v293 = vunpack.c.l.b16 %v213
      %v294 = vunpack.c.l.b16 %v214
      %v295 = vunpack.c.l.b16 %v215
      %v296 = vunpack.c.l.b16 %v216
      %v297 = vunpack.c.l.b16 %v217
      %v298 = vunpack.c.l.b16 %v218
      %v299 = vunpack.c.l.b16 %v219
      %v300 = vunpack.c.l.b16 %v220
      %v301 = vunpack.c.l.b16 %v221
      %v302 = vunpack.c.l.b16 %v222
      %v303 = vunpack.c.l.b16 %v223
      %v304 = vunpack.c.l.b16 %v224
      %v305 = vunpack.c.l.b16 %v225
      %v306 = vunpack.c.l.b16 %v226
      %v307 = vunpack.c.l.b16 %v227
      %v308 = vunpack.c.l.b16 %v228
      %v309 = vunpack.c.l.b16 %v229
      %v310 = vunpack.c.l.b16 %v230
      %v311 = vunpack.c.l.b16 %v231
      %v312 = vunpack.c.l.b16 %v232
      %v313 = vunpack.c.l.b16 %v233
      %v314 = vunpack.c.l.b16 %v234
      %v315 = vunpack.c.l.b16 %v235
      %v316 = vunpack.c.l.b16 %v236
      %v317 = vunpack.c.l.b16 %v237
      %v318 = vunpack.c.l.b16 %v238
      %v319 = vunpack.c.l.b16 %v239
      %v320 = vunpack.c.l.b16 %v240
      %v321 = vunpack.c.l.b16 %v241
      %v322 = vpack.c.b16 %v291, %v290
      %v323 = vpack.c.b16 %v293, %v292
      %v324 = vpack.c.b16 %v295, %v294
      %v325 = vpack.c.b16 %v297, %v296
      %v326 = vpack.c.b16 %v299, %v298
      %v327 = vpack.c.b16 %v301, %v300
      %v328 = vpack.c.b16 %v303, %v302
      %v329 = vpack.c.b16 %v305, %v304
      %v330 = vpack.c.b16 %v307, %v306
      %v331 = vpack.c.b16 %v309, %v308
      %v332 = vpack.c.b16 %v311, %v310
      %v333 = vpack.c.b16 %v313, %v312
      %v334 = vpack.c.b16 %v315, %v314
      %v335 = vpack.c.b16 %v317, %v316
      %v336 = vpack.c.b16 %v319, %v318
      %v337 = vpack.c.b16 %v321, %v320
      %v370 = vunpack.c.l.b16 %v242
      %v371 = vunpack.c.l.b16 %v243
      %v372 = vunpack.c.l.b16 %v244
      %v373 = vunpack.c.l.b16 %v245
      %v374 = vunpack.c.l.b16 %v246
      %v375 = vunpack.c.l.b16 %v247
      %v376 = vunpack.c.l.b16 %v248
      %v377 = vunpack.c.l.b16 %v249
      %v378 = vunpack.c.l.b16 %v250
      %v379 = vunpack.c.l.b16 %v251
      %v380 = vunpack.c.l.b16 %v252
      %v381 = vunpack.c.l.b16 %v253
      %v382 = vunpack.c.l.b16 %v254
      %v383 = vunpack.c.l.b16 %v255
      %v384 = vunpack.c.l.b16 %v256
      %v385 = vunpack.c.l.b16 %v257
      %v386 = vpack.c.b16 %v371, %v370
      %v387 = vpack.c.b16 %v373, %v372
      %v388 = vpack.c.b16 %v375, %v374
      %v389 = vpack.c.b16 %v377, %v376
      %v390 = vpack.c.b16 %v379, %v378
      %v391 = vpack.c.b16 %v381, %v380
      %v392 = vpack.c.b16 %v383, %v382
      %v393 = vpack.c.b16 %v385, %v384
      %402 = vmatprep.subr.bf16.mxu0 0
      %403 = vmatpush1.bf16.msra.mxu0 %v386
      %404 = vmatprep.subr.bf16.mxu0 0
      %405 = vmatpush1.bf16.msra.mxu0 %v387
      %406 = vmatprep.subr.bf16.mxu0 0
      %407 = vmatpush1.bf16.msra.mxu0 %v388
      %408 = vmatprep.subr.bf16.mxu0 0
      %409 = vmatpush1.bf16.msra.mxu0 %v389
      %410 = vmatprep.subr.bf16.mxu0 0
      %411 = vmatpush1.bf16.msra.mxu0 %v390
      %412 = vmatprep.subr.bf16.mxu0 0
      %413 = vmatpush1.bf16.msra.mxu0 %v391
      %414 = vmatprep.subr.bf16.mxu0 0
      %415 = vmatpush1.bf16.msra.mxu0 %v392
      %416 = vmatprep.subr.bf16.mxu0 0
      %417 = vmatpush1.bf16.msra.mxu0 %v393
      %418 = vmatprep.subr.bf16.mxu0 0
      %419 = vmatpush1.bf16.msra.mxu0 0
      %420 = vmatprep.subr.bf16.mxu0 0
      %421 = vmatpush1.bf16.msra.mxu0 0
      %422 = vmatprep.subr.bf16.mxu0 0
      %423 = vmatpush1.bf16.msra.mxu0 0
      %424 = vmatprep.subr.bf16.mxu0 0
      %425 = vmatpush1.bf16.msra.mxu0 0
      %426 = vmatprep.subr.bf16.mxu0 0
      %427 = vmatpush1.bf16.msra.mxu0 0
      %428 = vmatprep.subr.bf16.mxu0 0
      %429 = vmatpush1.bf16.msra.mxu0 0
      %430 = vmatprep.subr.bf16.mxu0 0
      %431 = vmatpush1.bf16.msra.mxu0 0
      %432 = vmatprep.subr.bf16.mxu0 0
      %433 = vmatpush1.bf16.msra.mxu0 0
      %434 = vmatprep.mubr.bf16.mxu0 0
      %435 = vmatmul.mubr.bf16.gmra.mrb[0].mxu0 %v322
      %v436 = vpop.f32.mrb[0].mxu0
      %v437 = vadd.f32 0.0, %v436
      %v438 = vpop.f32.mrb[0].mxu0
      %v439 = vpop.f32.mrb[0].mxu0
      %v440 = vadd.f32 0.0, %v439
      %v441 = vpop.f32.mrb[0].mxu0
      %442 = vmatprep.mubr.bf16.mxu0 0
      %443 = vmatmul.mubr.bf16.gmra.mrb[0].mxu0 %v323
      %v444 = vpop.f32.mrb[0].mxu0
      %v445 = vadd.f32 0.0, %v444
      %v446 = vpop.f32.mrb[0].mxu0
      %v447 = vpop.f32.mrb[0].mxu0
      %v448 = vadd.f32 0.0, %v447
      %v449 = vpop.f32.mrb[0].mxu0
      %450 = vmatprep.mubr.bf16.mxu0 0
      %451 = vmatmul.mubr.bf16.gmra.mrb[0].mxu0 %v324
      %v452 = vpop.f32.mrb[0].mxu0
      %v453 = vadd.f32 0.0, %v452
      %v454 = vpop.f32.mrb[0].mxu0
      %v455 = vpop.f32.mrb[0].mxu0
      %v456 = vadd.f32 0.0, %v455
      %v457 = vpop.f32.mrb[0].mxu0
      %458 = vmatprep.mubr.bf16.mxu0 0
      %459 = vmatmul.mubr.bf16.gmra.mrb[0].mxu0 %v325
      %v460 = vpop.f32.mrb[0].mxu0
      %v461 = vadd.f32 0.0, %v460
      %v462 = vpop.f32.mrb[0].mxu0
      %v463 = vpop.f32.mrb[0].mxu0
      %v464 = vadd.f32 0.0, %v463
      %v465 = vpop.f32.mrb[0].mxu0
      %466 = vmatprep.mubr.bf16.mxu0 0
      %467 = vmatmul.mubr.bf16.gmra.mrb[0].mxu0 %v326
      %v468 = vpop.f32.mrb[0].mxu0
      %v469 = vadd.f32 0.0, %v468
      %v470 = vpop.f32.mrb[0].mxu0
      %v471 = vpop.f32.mrb[0].mxu0
      %v472 = vadd.f32 0.0, %v471
      %v473 = vpop.f32.mrb[0].mxu0
      %474 = vmatprep.mubr.bf16.mxu0 0
      %475 = vmatmul.mubr.bf16.gmra.mrb[0].mxu0 %v327
      %v476 = vpop.f32.mrb[0].mxu0
      %v477 = vadd.f32 0.0, %v476
      %v478 = vpop.f32.mrb[0].mxu0
      %v479 = vpop.f32.mrb[0].mxu0
      %v480 = vadd.f32 0.0, %v479
      %v481 = vpop.f32.mrb[0].mxu0
      %482 = vmatprep.mubr.bf16.mxu0 0
      %483 = vmatmul.mubr.bf16.gmra.mrb[0].mxu0 %v328
      %v484 = vpop.f32.mrb[0].mxu0
      %v485 = vadd.f32 0.0, %v484
      %v486 = vpop.f32.mrb[0].mxu0
      %v487 = vpop.f32.mrb[0].mxu0
      %v488 = vadd.f32 0.0, %v487
      %v489 = vpop.f32.mrb[0].mxu0
      %490 = vmatprep.mubr.bf16.mxu0 0
      %491 = vmatmul.mubr.bf16.gmra.mrb[0].mxu0 %v329
      %v492 = vpop.f32.mrb[0].mxu0
      %v493 = vadd.f32 0.0, %v492
      %v494 = vpop.f32.mrb[0].mxu0
      %v495 = vpop.f32.mrb[0].mxu0
      %v496 = vadd.f32 0.0, %v495
      %v497 = vpop.f32.mrb[0].mxu0
      %498 = vmatprep.mubr.bf16.mxu0 0
      %499 = vmatmul.mubr.bf16.gmra.mrb[0].mxu0 %v330
      %v500 = vpop.f32.mrb[0].mxu0
      %v501 = vadd.f32 0.0, %v500
      %v502 = vpop.f32.mrb[0].mxu0
      %v503 = vpop.f32.mrb[0].mxu0
      %v504 = vadd.f32 0.0, %v503
      %v505 = vpop.f32.mrb[0].mxu0
      %506 = vmatprep.mubr.bf16.mxu0 0
      %507 = vmatmul.mubr.bf16.gmra.mrb[0].mxu0 %v331
      %v508 = vpop.f32.mrb[0].mxu0
      %v509 = vadd.f32 0.0, %v508
      %v510 = vpop.f32.mrb[0].mxu0
      %v511 = vpop.f32.mrb[0].mxu0
      %v512 = vadd.f32 0.0, %v511
      %v513 = vpop.f32.mrb[0].mxu0
      %514 = vmatprep.mubr.bf16.mxu0 0
      %515 = vmatmul.mubr.bf16.gmra.mrb[0].mxu0 %v332
      %v516 = vpop.f32.mrb[0].mxu0
      %v517 = vadd.f32 0.0, %v516
      %v518 = vpop.f32.mrb[0].mxu0
      %v519 = vpop.f32.mrb[0].mxu0
      %v520 = vadd.f32 0.0, %v519
      %v521 = vpop.f32.mrb[0].mxu0
      %522 = vmatprep.mubr.bf16.mxu0 0
      %523 = vmatmul.mubr.bf16.gmra.mrb[0].mxu0 %v333
      %v524 = vpop.f32.mrb[0].mxu0
      %v525 = vadd.f32 0.0, %v524
      %v526 = vpop.f32.mrb[0].mxu0
      %v527 = vpop.f32.mrb[0].mxu0
      %v528 = vadd.f32 0.0, %v527
      %v529 = vpop.f32.mrb[0].mxu0
      %530 = vmatprep.mubr.bf16.mxu0 0
      %531 = vmatmul.mubr.bf16.gmra.mrb[0].mxu0 %v334
      %v532 = vpop.f32.mrb[0].mxu0
      %v533 = vadd.f32 0.0, %v532
      %v534 = vpop.f32.mrb[0].mxu0
      %v535 = vpop.f32.mrb[0].mxu0
      %v536 = vadd.f32 0.0, %v535
      %v537 = vpop.f32.mrb[0].mxu0
      %538 = vmatprep.mubr.bf16.mxu0 0
      %539 = vmatmul.mubr.bf16.gmra.mrb[0].mxu0 %v335
      %v540 = vpop.f32.mrb[0].mxu0
      %v541 = vadd.f32 0.0, %v540
      %v542 = vpop.f32.mrb[0].mxu0
      %v543 = vpop.f32.mrb[0].mxu0
      %v544 = vadd.f32 0.0, %v543
      %v545 = vpop.f32.mrb[0].mxu0
      %546 = vmatprep.mubr.bf16.mxu0 0
      %547 = vmatmul.mubr.bf16.gmra.mrb[0].mxu0 %v336
      %v548 = vpop.f32.mrb[0].mxu0
      %v549 = vadd.f32 0.0, %v548
      %v550 = vpop.f32.mrb[0].mxu0
      %v551 = vpop.f32.mrb[0].mxu0
      %v552 = vadd.f32 0.0, %v551
      %v553 = vpop.f32.mrb[0].mxu0
      %554 = vmatprep.mubr.bf16.mxu0 0
      %555 = vmatmul.mubr.bf16.gmra.mrb[0].mxu0 %v337
      %v556 = vpop.f32.mrb[0].mxu0
      %v557 = vadd.f32 0.0, %v556
      %v558 = vpop.f32.mrb[0].mxu0
      %v559 = vpop.f32.mrb[0].mxu0
      %v560 = vadd.f32 0.0, %v559
      %v561 = vpop.f32.mrb[0].mxu0
      %562 = vdwg.mxu0
      %v563 = vld [vmem:[%s2] sm:$0x1]
      %v565 = vlaneseq
      %v566 = vshrl.u32 %v565, 7
      %v567 = vsub.s32 0, %v566
      %v568 = vrot.slane %v563, %v567
      %v570 = vadd.f32 %v437, %v568
      %v571 = vadd.f32 %v440, %v568
      %v572 = vadd.f32 %v445, %v568
      %v573 = vadd.f32 %v448, %v568
      %v574 = vadd.f32 %v453, %v568
      %v575 = vadd.f32 %v456, %v568
      %v576 = vadd.f32 %v461, %v568
      %v577 = vadd.f32 %v464, %v568
      %v578 = vadd.f32 %v469, %v568
      %v579 = vadd.f32 %v472, %v568
      %v580 = vadd.f32 %v477, %v568
      %v581 = vadd.f32 %v480, %v568
      %v582 = vadd.f32 %v485, %v568
      %v583 = vadd.f32 %v488, %v568
      %v584 = vadd.f32 %v493, %v568
      %v585 = vadd.f32 %v496, %v568
      %v586 = vadd.f32 %v501, %v568
      %v587 = vadd.f32 %v504, %v568
      %v588 = vadd.f32 %v509, %v568
      %v589 = vadd.f32 %v512, %v568
      %v590 = vadd.f32 %v517, %v568
      %v591 = vadd.f32 %v520, %v568
      %v592 = vadd.f32 %v525, %v568
      %v593 = vadd.f32 %v528, %v568
      %v594 = vadd.f32 %v533, %v568
      %v595 = vadd.f32 %v536, %v568
      %v596 = vadd.f32 %v541, %v568
      %v597 = vadd.f32 %v544, %v568
      %v598 = vadd.f32 %v549, %v568
      %v599 = vadd.f32 %v552, %v568
      %v600 = vadd.f32 %v557, %v568
      %v601 = vadd.f32 %v560, %v568
      %v602 = vpack.c.bf16 %v571, %v570
      %v603 = vpack.c.bf16 %v573, %v572
      %v604 = vpack.c.bf16 %v575, %v574
      %v605 = vpack.c.bf16 %v577, %v576
      %v606 = vpack.c.bf16 %v579, %v578
      %v607 = vpack.c.bf16 %v581, %v580
      %v608 = vpack.c.bf16 %v583, %v582
      %v609 = vpack.c.bf16 %v585, %v584
      %v610 = vpack.c.bf16 %v587, %v586
      %v611 = vpack.c.bf16 %v589, %v588
      %v612 = vpack.c.bf16 %v591, %v590
      %v613 = vpack.c.bf16 %v593, %v592
      %v614 = vpack.c.bf16 %v595, %v594
      %v615 = vpack.c.bf16 %v597, %v596
      %v616 = vpack.c.bf16 %v599, %v598
      %v617 = vpack.c.bf16 %v601, %v600
      %v634 = vunpack.c.l.b16 %v602
      %v635 = vunpack.c.h.b16 %v602
      %v636 = vunpack.c.l.b16 %v603
      %v637 = vunpack.c.h.b16 %v603
      %v638 = vunpack.c.l.b16 %v604
      %v639 = vunpack.c.h.b16 %v604
      %v640 = vunpack.c.l.b16 %v605
      %v641 = vunpack.c.h.b16 %v605
      %v642 = vunpack.c.l.b16 %v606
      %v643 = vunpack.c.h.b16 %v606
      %v644 = vunpack.c.l.b16 %v607
      %v645 = vunpack.c.h.b16 %v607
      %v646 = vunpack.c.l.b16 %v608
      %v647 = vunpack.c.h.b16 %v608
      %v648 = vunpack.c.l.b16 %v609
      %v649 = vunpack.c.h.b16 %v609
      %v650 = vunpack.c.l.b16 %v610
      %v651 = vunpack.c.h.b16 %v610
      %v652 = vunpack.c.l.b16 %v611
      %v653 = vunpack.c.h.b16 %v611
      %v654 = vunpack.c.l.b16 %v612
      %v655 = vunpack.c.h.b16 %v612
      %v656 = vunpack.c.l.b16 %v613
      %v657 = vunpack.c.h.b16 %v613
      %v658 = vunpack.c.l.b16 %v614
      %v659 = vunpack.c.h.b16 %v614
      %v660 = vunpack.c.l.b16 %v615
      %v661 = vunpack.c.h.b16 %v615
      %v662 = vunpack.c.l.b16 %v616
      %v663 = vunpack.c.h.b16 %v616
      %v664 = vunpack.c.l.b16 %v617
      %v665 = vunpack.c.h.b16 %v617
      %v666 = vpack.c.b16 %v634, %v634
      %v667 = vpack.c.b16 %v635, %v635
      %v668 = vpack.c.b16 %v636, %v636
      %v669 = vpack.c.b16 %v637, %v637
      %v670 = vpack.c.b16 %v638, %v638
      %v671 = vpack.c.b16 %v639, %v639
      %v672 = vpack.c.b16 %v640, %v640
      %v673 = vpack.c.b16 %v641, %v641
      %v674 = vpack.c.b16 %v642, %v642
      %v675 = vpack.c.b16 %v643, %v643
      %v676 = vpack.c.b16 %v644, %v644
      %v677 = vpack.c.b16 %v645, %v645
      %v678 = vpack.c.b16 %v646, %v646
      %v679 = vpack.c.b16 %v647, %v647
      %v680 = vpack.c.b16 %v648, %v648
      %v681 = vpack.c.b16 %v649, %v649
      %v682 = vpack.c.b16 %v650, %v650
      %v683 = vpack.c.b16 %v651, %v651
      %v684 = vpack.c.b16 %v652, %v652
      %v685 = vpack.c.b16 %v653, %v653
      %v686 = vpack.c.b16 %v654, %v654
      %v687 = vpack.c.b16 %v655, %v655
      %v688 = vpack.c.b16 %v656, %v656
      %v689 = vpack.c.b16 %v657, %v657
      %v690 = vpack.c.b16 %v658, %v658
      %v691 = vpack.c.b16 %v659, %v659
      %v692 = vpack.c.b16 %v660, %v660
      %v693 = vpack.c.b16 %v661, %v661
      %v694 = vpack.c.b16 %v662, %v662
      %v695 = vpack.c.b16 %v663, %v663
      %v696 = vpack.c.b16 %v664, %v664
      %v697 = vpack.c.b16 %v665, %v665
      %730 = vst [vmem:[%s204] sm:$0xf] %v666
      %731 = vst [vmem:[%s204 + $0x4] sm:$0xf] %v667
      %732 = vst [vmem:[%s204 + $0x8] sm:$0xf] %v668
      %733 = vst [vmem:[%s204 + $0xc] sm:$0xf] %v669
      %734 = vst [vmem:[%s204 + $0x10] sm:$0xf] %v670
      %735 = vst [vmem:[%s204 + $0x14] sm:$0xf] %v671
      %736 = vst [vmem:[%s204 + $0x18] sm:$0xf] %v672
      %737 = vst [vmem:[%s204 + $0x1c] sm:$0xf] %v673
      %738 = vst [vmem:[%s204 + $0x20] sm:$0xf] %v674
      %739 = vst [vmem:[%s204 + $0x24] sm:$0xf] %v675
      %740 = vst [vmem:[%s204 + $0x28] sm:$0xf] %v676
      %741 = vst [vmem:[%s204 + $0x2c] sm:$0xf] %v677
      %742 = vst [vmem:[%s204 + $0x30] sm:$0xf] %v678
      %743 = vst [vmem:[%s204 + $0x34] sm:$0xf] %v679
      %744 = vst [vmem:[%s204 + $0x38] sm:$0xf] %v680
      %745 = vst [vmem:[%s204 + $0x3c] sm:$0xf] %v681
      %746 = vst [vmem:[%s204 + $0x40] sm:$0xf] %v682
      %747 = vst [vmem:[%s204 + $0x44] sm:$0xf] %v683
      %748 = vst [vmem:[%s204 + $0x48] sm:$0xf] %v684
      %749 = vst [vmem:[%s204 + $0x4c] sm:$0xf] %v685
      %750 = vst [vmem:[%s204 + $0x50] sm:$0xf] %v686
      %751 = vst [vmem:[%s204 + $0x54] sm:$0xf] %v687
      %752 = vst [vmem:[%s204 + $0x58] sm:$0xf] %v688
      %753 = vst [vmem:[%s204 + $0x5c] sm:$0xf] %v689
      %754 = vst [vmem:[%s204 + $0x60] sm:$0xf] %v690
      %755 = vst [vmem:[%s204 + $0x64] sm:$0xf] %v691
      %756 = vst [vmem:[%s204 + $0x68] sm:$0xf] %v692
      %757 = vst [vmem:[%s204 + $0x6c] sm:$0xf] %v693
      %758 = vst [vmem:[%s204 + $0x70] sm:$0xf] %v694
      %759 = vst [vmem:[%s204 + $0x74] sm:$0xf] %v695
      %760 = vst [vmem:[%s204 + $0x78] sm:$0xf] %v696
      %761 = vst [vmem:[%s204 + $0x7c] sm:$0xf] %v697
      %v762 = vadd.f32 %v437, %v440
      %v763 = vadd.f32 %v762, %v445
      %v764 = vadd.f32 %v763, %v448
      %v765 = vadd.f32 %v764, %v453
      %v766 = vadd.f32 %v765, %v456
      %v767 = vadd.f32 %v766, %v461
      %v768 = vadd.f32 %v767, %v464
      %v769 = vadd.f32 %v768, %v469
      %v770 = vadd.f32 %v769, %v472
      %v771 = vadd.f32 %v770, %v477
      %v772 = vadd.f32 %v771, %v480
      %v773 = vadd.f32 %v772, %v485
      %v774 = vadd.f32 %v773, %v488
      %v775 = vadd.f32 %v774, %v493
      %v776 = vadd.f32 %v775, %v496
      %v777 = vadd.f32 %v776, %v501
      %v778 = vadd.f32 %v777, %v504
      %v779 = vadd.f32 %v778, %v509
      %v780 = vadd.f32 %v779, %v512
      %v781 = vadd.f32 %v780, %v517
      %v782 = vadd.f32 %v781, %v520
      %v783 = vadd.f32 %v782, %v525
      %v784 = vadd.f32 %v783, %v528
      %v785 = vadd.f32 %v784, %v533
      %v786 = vadd.f32 %v785, %v536
      %v787 = vadd.f32 %v786, %v541
      %v788 = vadd.f32 %v787, %v544
      %v789 = vadd.f32 %v788, %v549
      %v790 = vadd.f32 %v789, %v552
      %v791 = vadd.f32 %v790, %v557
      %v792 = vadd.f32 %v791, %v560
      %v793 = vrot.slane %v792, 4
      %v794 = vadd.f32 %v792, %v793
      %v795 = vrot.slane %v794, 2
      %v796 = vadd.f32 %v794, %v795
      %v797 = vrot.slane %v796, 1
      %v798 = vadd.f32 %v796, %v797
      %v799 = vmul.f32 %v437, %v437
      %v800 = vmul.f32 %v440, %v440
      %v801 = vmul.f32 %v445, %v445
      %v802 = vmul.f32 %v448, %v448
      %v803 = vmul.f32 %v453, %v453
      %v804 = vmul.f32 %v456, %v456
      %v805 = vmul.f32 %v461, %v461
      %v806 = vmul.f32 %v464, %v464
      %v807 = vmul.f32 %v469, %v469
      %v808 = vmul.f32 %v472, %v472
      %v809 = vmul.f32 %v477, %v477
      %v810 = vmul.f32 %v480, %v480
      %v811 = vmul.f32 %v485, %v485
      %v812 = vmul.f32 %v488, %v488
      %v813 = vmul.f32 %v493, %v493
      %v814 = vmul.f32 %v496, %v496
      %v815 = vmul.f32 %v501, %v501
      %v816 = vmul.f32 %v504, %v504
      %v817 = vmul.f32 %v509, %v509
      %v818 = vmul.f32 %v512, %v512
      %v819 = vmul.f32 %v517, %v517
      %v820 = vmul.f32 %v520, %v520
      %v821 = vmul.f32 %v525, %v525
      %v822 = vmul.f32 %v528, %v528
      %v823 = vmul.f32 %v533, %v533
      %v824 = vmul.f32 %v536, %v536
      %v825 = vmul.f32 %v541, %v541
      %v826 = vmul.f32 %v544, %v544
      %v827 = vmul.f32 %v549, %v549
      %v828 = vmul.f32 %v552, %v552
      %v829 = vmul.f32 %v557, %v557
      %v830 = vmul.f32 %v560, %v560
      %v831 = vadd.f32 %v799, %v800
      %v832 = vadd.f32 %v831, %v801
      %v833 = vadd.f32 %v832, %v802
      %v834 = vadd.f32 %v833, %v803
      %v835 = vadd.f32 %v834, %v804
      %v836 = vadd.f32 %v835, %v805
      %v837 = vadd.f32 %v836, %v806
      %v838 = vadd.f32 %v837, %v807
      %v839 = vadd.f32 %v838, %v808
      %v840 = vadd.f32 %v839, %v809
      %v841 = vadd.f32 %v840, %v810
      %v842 = vadd.f32 %v841, %v811
      %v843 = vadd.f32 %v842, %v812
      %v844 = vadd.f32 %v843, %v813
      %v845 = vadd.f32 %v844, %v814
      %v846 = vadd.f32 %v845, %v815
      %v847 = vadd.f32 %v846, %v816
      %v848 = vadd.f32 %v847, %v817
      %v849 = vadd.f32 %v848, %v818
      %v850 = vadd.f32 %v849, %v819
      %v851 = vadd.f32 %v850, %v820
      %v852 = vadd.f32 %v851, %v821
      %v853 = vadd.f32 %v852, %v822
      %v854 = vadd.f32 %v853, %v823
      %v855 = vadd.f32 %v854, %v824
      %v856 = vadd.f32 %v855, %v825
      %v857 = vadd.f32 %v856, %v826
      %v858 = vadd.f32 %v857, %v827
      %v859 = vadd.f32 %v858, %v828
      %v860 = vadd.f32 %v859, %v829
      %v861 = vadd.f32 %v860, %v830
      %v862 = vrot.slane %v861, 4
      %v863 = vadd.f32 %v861, %v862
      %v864 = vrot.slane %v863, 2
      %v865 = vadd.f32 %v863, %v864
      %v866 = vrot.slane %v865, 1
      %v867 = vadd.f32 %v865, %v866
      %vm868 = vcmask 1040384
      %v869 = vsel %vm868, %v798, %v867
      %vm870 = vcmask 1041408
      %v871 = vsel %vm870, %v869, 0.0
      %872 = vst [vmem:[%s208] sm:$0xff] %v871
      %p873 = scmp.lt.s32.totalorder %s16, 1
      %s874 = scalar_select %p873, %s16, 1
      %s875 = smul.addr %s874, 32
      %s876 = smul.addr %s875, 4
      %s877 = scalar_lea.vmem %s3, %s876
      %p878 = scmp.lt.s32.totalorder %s16, 1
      %s879 = scalar_select %p878, %s16, 1
      %s880 = smul.addr %s879, 8
      %s881 = scalar_lea.vmem %s4, %s880
      // Predicated region
      $region33: #{double_conv.3} parent=31 // pred_check
        %p882 = pneg %p102
      $region34: #{double_conv.3} parent=31 // pred_check_branch
        %884 = sbr.rel (%p882) target = $region36
      $region35: #{double_conv.3} parent=31 // pred_region
        _
      $region36: #{double_conv.3} parent=31 // pred_fallthru
        _
      // Predicated region
      $region37: #{double_conv.3} parent=31 // pred_check
        %p885 = pneg %p128
      $region38: #{double_conv.3} parent=31 // pred_check_branch
        %887 = sbr.rel (%p885) target = $region40
      $region39: #{double_conv.3} parent=31 // pred_region
        _
      $region40: #{double_conv.3} parent=31 // pred_fallthru
        _
    $region32: #{double_conv.3} parent=5 // pred_fallthru
      _
    %p888 = scmp.le.s32.totalorder 2, %s11
    // Predicated region
    $region41: #{double_conv.3} parent=5 // pred_check
      %p889 = pneg %p888
    $region42: #{double_conv.3} parent=5 // pred_check_branch
      %891 = sbr.rel (%p889) target = $region44
    $region43: #{double_conv.3} parent=5 // pred_region
      %s892 = ssub.s32 %s11, 2
      // Predicated region
      $region45: #{double_conv.3} parent=43 // pred_check
        %p893 = pneg %p108
      $region46: #{double_conv.3} parent=43 // pred_check_branch
        %895 = sbr.rel (%p893) target = $region48
      $region47: #{double_conv.3} parent=43 // pred_region
        %p896 = scmp.lt.s32.totalorder %s17, 1
        %s897 = scalar_select %p896, %s17, 1
        %s898 = smul.addr %s897, 32
        %s899 = smul.addr %s898, 4
        %s900 = scalar_lea.vmem %s3, %s899
      $region48: #{double_conv.3} parent=43 // pred_fallthru
        _
      // Predicated region
      $region49: #{double_conv.3} parent=43 // pred_check
        %p901 = pneg %p134
      $region50: #{double_conv.3} parent=43 // pred_check_branch
        %903 = sbr.rel (%p901) target = $region52
      $region51: #{double_conv.3} parent=43 // pred_region
        %p904 = scmp.lt.s32.totalorder %s17, 1
        %s905 = scalar_select %p904, %s17, 1
        %s906 = smul.addr %s905, 8
        %s907 = scalar_lea.vmem %s4, %s906
      $region52: #{double_conv.3} parent=43 // pred_fallthru
        _
    $region44: #{double_conv.3} parent=5 // pred_fallthru
      _
  $region6: #{double_conv.3} parent=0 // loop_footer
    %s15 = sadd.s32 1, %s11
  $region7: #{double_conv.3} parent=0 // loop_footer_branch
    %10 = sbr.rel target = $region3
  $region8: #{double_conv.3} parent=0 // loop_exit
    _

// kernel: double_conv.5
$region0: #{double_conv.5}
  #allocation0 [shape = 'u32[]', space=smem, size = 0x4, offset = 0x4, fixed_abs, tag = 'smem constant byte address 0x4 - core index']
  #allocation1 [shape = 'u32[144,128]{1,0:T(1,128)}', space=vmem, size = 0x12000, scoped, tag = 'internal scratch']
  %s0 = inlined_call_operand.vmem [shape: f32[2,256,128], index: 0, kind: input, shape index: {}]
  %s1 = inlined_call_operand.vmem [shape: f32[1,128], index: 1, kind: input, shape index: {}]
  %s2 = inlined_call_operand.vmem [shape: f32[1,128], index: 2, kind: input, shape index: {}]
  %s3 = inlined_call_operand.vmem [shape: f32[2,256,128], index: 3, kind: output, shape index: {}]
  %s4 = sld [smem:[#allocation0]]
  $region45: #{double_conv.5} parent=0
    _
  %s6 = ssub.s32 1, %s4
  %s7 = scalar_select 0, %s6, %s4
  loop: start=0, step=1, limit=4
  $region2: #{double_conv.5} parent=0 // loop_pre_header
    _
  $region3: #{double_conv.5} parent=0 // loop_header
    %s9 = sphi 0, %s13
    %p10 = scmp.ge.s32.totalorder %s9, 4
    %s19 = sphi 0, %s21
    %s22 = sphi 0, %s19
    %s23 = sphi 0, %s22
    %s39 = sphi 0, %s23
    %s43 = sphi 0, %s43
    %s45 = sphi 0, %s43
    %s46 = sphi 0, %s45
    %s60 = sphi 0, %s46
    %s64 = sphi 0, %s64
    %s66 = sphi 0, %s64
    %s67 = sphi 0, %s66
    %s81 = sphi 0, %s67
    %s87 = sphi 0, %s89
    %s90 = sphi 0, %s87
    %s91 = sphi 0, %s90
    %s107 = sphi 0, %s91
  $region4: #{double_conv.5} parent=0 // loop_header_branch
    %12 = sbr.rel (%p10) target = $region8
  $region5: #{double_conv.5} parent=0 // loop_body
    %s14 = ssub.s32 %s9, 1
    %s15 = ssub.s32 %s9, 2
    %s16 = sadd.s32 %s9, 1
    %s17 = ssub.s32 %s9, %s16
    %p18 = scmp.eq.s32.totalorder %s17, 0
    %s20 = sadd.s32 %s19, 1
    %s21 = scalar_select %p18, %s19, %s20
    %p24 = pneg %p18
    %p25 = scmp.eq.s32.totalorder %s9, 1
    %p26 = por %p24, %p25
    %p27 = scmp.ne.s32.totalorder %s19, %s22
    %p28 = scmp.eq.s32.totalorder %s9, 0
    %p29 = por %p27, %p28
    %p30 = scmp.ne.s32.totalorder %s19, %s22
    %p31 = scmp.eq.s32.totalorder %s14, 1
    %p32 = por %p30, %p31
    %p33 = scmp.ne.s32.totalorder %s22, %s23
    %p34 = scmp.eq.s32.totalorder %s14, 0
    %p35 = por %p33, %p34
    %p36 = scmp.ne.s32.totalorder %s22, %s23
    %p37 = scmp.eq.s32.totalorder %s15, 1
    %p38 = por %p36, %p37
    %p40 = scmp.ne.s32.totalorder %s23, %s39
    %p41 = scmp.eq.s32.totalorder %s15, 0
    %p42 = por %p40, %p41
    %s44 = sadd.s32 %s43, 1
    %p47 = scmp.eq.s32.totalorder %s9, 1
    %p48 = scmp.ne.s32.totalorder %s43, %s45
    %p49 = scmp.eq.s32.totalorder %s9, 0
    %p50 = por %p48, %p49
    %p51 = scmp.ne.s32.totalorder %s43, %s45
    %p52 = scmp.eq.s32.totalorder %s14, 1
    %p53 = por %p51, %p52
    %p54 = scmp.ne.s32.totalorder %s45, %s46
    %p55 = scmp.eq.s32.totalorder %s14, 0
    %p56 = por %p54, %p55
    %p57 = scmp.ne.s32.totalorder %s45, %s46
    %p58 = scmp.eq.s32.totalorder %s15, 1
    %p59 = por %p57, %p58
    %p61 = scmp.ne.s32.totalorder %s46, %s60
    %p62 = scmp.eq.s32.totalorder %s15, 0
    %p63 = por %p61, %p62
    %s65 = sadd.s32 %s64, 1
    %p68 = scmp.eq.s32.totalorder %s9, 1
    %p69 = scmp.ne.s32.totalorder %s64, %s66
    %p70 = scmp.eq.s32.totalorder %s9, 0
    %p71 = por %p69, %p70
    %p72 = scmp.ne.s32.totalorder %s64, %s66
    %p73 = scmp.eq.s32.totalorder %s14, 1
    %p74 = por %p72, %p73
    %p75 = scmp.ne.s32.totalorder %s66, %s67
    %p76 = scmp.eq.s32.totalorder %s14, 0
    %p77 = por %p75, %p76
    %p78 = scmp.ne.s32.totalorder %s66, %s67
    %p79 = scmp.eq.s32.totalorder %s15, 1
    %p80 = por %p78, %p79
    %p82 = scmp.ne.s32.totalorder %s67, %s81
    %p83 = scmp.eq.s32.totalorder %s15, 0
    %p84 = por %p82, %p83
    %s85 = ssub.s32 %s9, %s16
    %p86 = scmp.eq.s32.totalorder %s85, 0
    %s88 = sadd.s32 %s87, 1
    %s89 = scalar_select %p86, %s87, %s88
    %p92 = pneg %p86
    %p93 = scmp.eq.s32.totalorder %s9, 1
    %p94 = por %p92, %p93
    %p95 = scmp.ne.s32.totalorder %s87, %s90
    %p96 = scmp.eq.s32.totalorder %s9, 0
    %p97 = por %p95, %p96
    %p98 = scmp.ne.s32.totalorder %s87, %s90
    %p99 = scmp.eq.s32.totalorder %s14, 1
    %p100 = por %p98, %p99
    %p101 = scmp.ne.s32.totalorder %s90, %s91
    %p102 = scmp.eq.s32.totalorder %s14, 0
    %p103 = por %p101, %p102
    %p104 = scmp.ne.s32.totalorder %s90, %s91
    %p105 = scmp.eq.s32.totalorder %s15, 1
    %p106 = por %p104, %p105
    %p108 = scmp.ne.s32.totalorder %s91, %s107
    %p109 = scmp.eq.s32.totalorder %s15, 0
    %p110 = por %p108, %p109
    %p111 = scmp.le.s32.totalorder 1, %s9
    %p112 = scmp.lt.s32.totalorder %s9, 3
    %p113 = pnand %p111, %p112
    %p114 = pneg %p113
    // Predicated region
    $region9: #{double_conv.5} parent=5 // pred_check
      _
    $region10: #{double_conv.5} parent=5 // pred_check_branch
      %116 = sbr.rel (%p113) target = $region12
    $region11: #{double_conv.5} parent=5 // pred_region
      %s117 = ssub.s32 %s9, 1
      // Predicated region
      $region13: #{double_conv.5} parent=11 // pred_check
        %p118 = pneg %p56
      $region14: #{double_conv.5} parent=11 // pred_check_branch
        %120 = sbr.rel (%p118) target = $region16
      $region15: #{double_conv.5} parent=11 // pred_region
        _
      $region16: #{double_conv.5} parent=11 // pred_fallthru
        _
      // Predicated region
      $region17: #{double_conv.5} parent=11 // pred_check
        %p121 = pneg %p77
      $region18: #{double_conv.5} parent=11 // pred_check_branch
        %123 = sbr.rel (%p121) target = $region20
      $region19: #{double_conv.5} parent=11 // pred_region
        _
      $region20: #{double_conv.5} parent=11 // pred_fallthru
        _
    $region12: #{double_conv.5} parent=5 // pred_fallthru
      _
    %p124 = scmp.lt.s32.totalorder %s9, 2
    // Predicated region
    $region21: #{double_conv.5} parent=5 // pred_check
      %p125 = pneg %p124
    $region22: #{double_conv.5} parent=5 // pred_check_branch
      %127 = sbr.rel (%p125) target = $region24
    $region23: #{double_conv.5} parent=5 // pred_region
      // Predicated region
      $region25: #{double_conv.5} parent=23 // pred_check
        %p128 = pneg %p29
      $region26: #{double_conv.5} parent=23 // pred_check_branch
        %130 = sbr.rel (%p128) target = $region28
      $region27: #{double_conv.5} parent=23 // pred_region
        %p131 = scmp.lt.s32.totalorder %s9, 1
        %s132 = scalar_select %p131, %s9, 1
        %s133 = smul.addr %s132, 32
        %s134 = smul.addr %s133, 8
        %s135 = scalar_lea.vmem %s0, %s134
      $region28: #{double_conv.5} parent=23 // pred_fallthru
        _
    $region24: #{double_conv.5} parent=5 // pred_fallthru
      _
    %p136 = scmp.le.s32.totalorder 1, %s9
    %p137 = scmp.lt.s32.totalorder %s9, 3
    %p138 = pnand %p136, %p137
    %p139 = pneg %p138
    // Predicated region
    $region29: #{double_conv.5} parent=5 // pred_check
      _
    $region30: #{double_conv.5} parent=5 // pred_check_branch
      %141 = sbr.rel (%p138) target = $region32
    $region31: #{double_conv.5} parent=5 // pred_region
      %s142 = ssub.s32 %s9, 1
      %p143 = scmp.lt.s32.totalorder %s14, 1
      %s144 = scalar_select %p143, %s14, 1
      %s145 = smul.addr %s144, 32
      %s146 = smul.addr %s145, 8
      %s147 = scalar_lea.vmem %s0, %s146
      %p148 = pneg %p35
      %p149 = pneg %p32
      %p150 = pneg %p56
      %p151 = pneg %p53
      %p152 = pneg %p77
      %p153 = pneg %p74
      %p154 = pneg %p103
      %p155 = pneg %p100
      %p156 = scmp.lt.s32.totalorder %s14, 1
      %s157 = scalar_select %p156, %s14, 1
      %s158 = smul.addr %s157, 32
      %s159 = smul.addr %s158, 8
      %s160 = scalar_lea.vmem %s3, %s159
      %p161 = scmp.lt.s32.totalorder %s14, 1
      %s162 = scalar_select %p161, %s14, 1
      %s163 = smul.addr %s162, 32
      %s164 = smul.addr %s163, 8
      %s165 = scalar_lea.vmem %s0, %s164
      %p166 = scmp.lt.s32.totalorder %s14, 1
      %s167 = scalar_select %p166, %s14, 1
      %s168 = smul.addr %s167, 32
      %s169 = smul.addr %s168, 8
      %s170 = scalar_lea.vmem %s3, %s169
      %v171 = vld [vmem:[%s165] sm:$0xff]
      %v172 = vld [vmem:[%s165 + $0x8] sm:$0xff]
      %v173 = vld [vmem:[%s165 + $0x10] sm:$0xff]
      %v174 = vld [vmem:[%s165 + $0x18] sm:$0xff]
      %v175 = vld [vmem:[%s165 + $0x20] sm:$0xff]
      %v176 = vld [vmem:[%s165 + $0x28] sm:$0xff]
      %v177 = vld [vmem:[%s165 + $0x30] sm:$0xff]
      %v178 = vld [vmem:[%s165 + $0x38] sm:$0xff]
      %v179 = vld [vmem:[%s165 + $0x40] sm:$0xff]
      %v180 = vld [vmem:[%s165 + $0x48] sm:$0xff]
      %v181 = vld [vmem:[%s165 + $0x50] sm:$0xff]
      %v182 = vld [vmem:[%s165 + $0x58] sm:$0xff]
      %v183 = vld [vmem:[%s165 + $0x60] sm:$0xff]
      %v184 = vld [vmem:[%s165 + $0x68] sm:$0xff]
      %v185 = vld [vmem:[%s165 + $0x70] sm:$0xff]
      %v186 = vld [vmem:[%s165 + $0x78] sm:$0xff]
      %v187 = vld [vmem:[%s165 + $0x80] sm:$0xff]
      %v188 = vld [vmem:[%s165 + $0x88] sm:$0xff]
      %v189 = vld [vmem:[%s165 + $0x90] sm:$0xff]
      %v190 = vld [vmem:[%s165 + $0x98] sm:$0xff]
      %v191 = vld [vmem:[%s165 + $0xa0] sm:$0xff]
      %v192 = vld [vmem:[%s165 + $0xa8] sm:$0xff]
      %v193 = vld [vmem:[%s165 + $0xb0] sm:$0xff]
      %v194 = vld [vmem:[%s165 + $0xb8] sm:$0xff]
      %v195 = vld [vmem:[%s165 + $0xc0] sm:$0xff]
      %v196 = vld [vmem:[%s165 + $0xc8] sm:$0xff]
      %v197 = vld [vmem:[%s165 + $0xd0] sm:$0xff]
      %v198 = vld [vmem:[%s165 + $0xd8] sm:$0xff]
      %v199 = vld [vmem:[%s165 + $0xe0] sm:$0xff]
      %v200 = vld [vmem:[%s165 + $0xe8] sm:$0xff]
      %v201 = vld [vmem:[%s165 + $0xf0] sm:$0xff]
      %v202 = vld [vmem:[%s165 + $0xf8] sm:$0xff]
      %v203 = vld [vmem:[%s1] sm:$0x1]
      %v205 = vlaneseq
      %v206 = vshrl.u32 %v205, 7
      %v207 = vsub.s32 0, %v206
      %v208 = vrot.slane %v203, %v207
      %v210 = vmul.f32 %v171, %v208
      %v211 = vmul.f32 %v172, %v208
      %v212 = vmul.f32 %v173, %v208
      %v213 = vmul.f32 %v174, %v208
      %v214 = vmul.f32 %v175, %v208
      %v215 = vmul.f32 %v176, %v208
      %v216 = vmul.f32 %v177, %v208
      %v217 = vmul.f32 %v178, %v208
      %v218 = vmul.f32 %v179, %v208
      %v219 = vmul.f32 %v180, %v208
      %v220 = vmul.f32 %v181, %v208
      %v221 = vmul.f32 %v182, %v208
      %v222 = vmul.f32 %v183, %v208
      %v223 = vmul.f32 %v184, %v208
      %v224 = vmul.f32 %v185, %v208
      %v225 = vmul.f32 %v186, %v208
      %v226 = vmul.f32 %v187, %v208
      %v227 = vmul.f32 %v188, %v208
      %v228 = vmul.f32 %v189, %v208
      %v229 = vmul.f32 %v190, %v208
      %v230 = vmul.f32 %v191, %v208
      %v231 = vmul.f32 %v192, %v208
      %v232 = vmul.f32 %v193, %v208
      %v233 = vmul.f32 %v194, %v208
      %v234 = vmul.f32 %v195, %v208
      %v235 = vmul.f32 %v196, %v208
      %v236 = vmul.f32 %v197, %v208
      %v237 = vmul.f32 %v198, %v208
      %v238 = vmul.f32 %v199, %v208
      %v239 = vmul.f32 %v200, %v208
      %v240 = vmul.f32 %v201, %v208
      %v241 = vmul.f32 %v202, %v208
      %v242 = vld [vmem:[%s2] sm:$0x1]
      %v244 = vlaneseq
      %v245 = vshrl.u32 %v244, 7
      %v246 = vsub.s32 0, %v245
      %v247 = vrot.slane %v242, %v246
      %v249 = vadd.f32 %v210, %v247
      %v250 = vadd.f32 %v211, %v247
      %v251 = vadd.f32 %v212, %v247
      %v252 = vadd.f32 %v213, %v247
      %v253 = vadd.f32 %v214, %v247
      %v254 = vadd.f32 %v215, %v247
      %v255 = vadd.f32 %v216, %v247
      %v256 = vadd.f32 %v217, %v247
      %v257 = vadd.f32 %v218, %v247
      %v258 = vadd.f32 %v219, %v247
      %v259 = vadd.f32 %v220, %v247
      %v260 = vadd.f32 %v221, %v247
      %v261 = vadd.f32 %v222, %v247
      %v262 = vadd.f32 %v223, %v247
      %v263 = vadd.f32 %v224, %v247
      %v264 = vadd.f32 %v225, %v247
      %v265 = vadd.f32 %v226, %v247
      %v266 = vadd.f32 %v227, %v247
      %v267 = vadd.f32 %v228, %v247
      %v268 = vadd.f32 %v229, %v247
      %v269 = vadd.f32 %v230, %v247
      %v270 = vadd.f32 %v231, %v247
      %v271 = vadd.f32 %v232, %v247
      %v272 = vadd.f32 %v233, %v247
      %v273 = vadd.f32 %v234, %v247
      %v274 = vadd.f32 %v235, %v247
      %v275 = vadd.f32 %v236, %v247
      %v276 = vadd.f32 %v237, %v247
      %v277 = vadd.f32 %v238, %v247
      %v278 = vadd.f32 %v239, %v247
      %v279 = vadd.f32 %v240, %v247
      %v280 = vadd.f32 %v241, %v247
      %v281 = vmax.f32 %v249, 0.0
      %v282 = vmax.f32 %v250, 0.0
      %v283 = vmax.f32 %v251, 0.0
      %v284 = vmax.f32 %v252, 0.0
      %v285 = vmax.f32 %v253, 0.0
      %v286 = vmax.f32 %v254, 0.0
      %v287 = vmax.f32 %v255, 0.0
      %v288 = vmax.f32 %v256, 0.0
      %v289 = vmax.f32 %v257, 0.0
      %v290 = vmax.f32 %v258, 0.0
      %v291 = vmax.f32 %v259, 0.0
      %v292 = vmax.f32 %v260, 0.0
      %v293 = vmax.f32 %v261, 0.0
      %v294 = vmax.f32 %v262, 0.0
      %v295 = vmax.f32 %v263, 0.0
      %v296 = vmax.f32 %v264, 0.0
      %v297 = vmax.f32 %v265, 0.0
      %v298 = vmax.f32 %v266, 0.0
      %v299 = vmax.f32 %v267, 0.0
      %v300 = vmax.f32 %v268, 0.0
      %v301 = vmax.f32 %v269, 0.0
      %v302 = vmax.f32 %v270, 0.0
      %v303 = vmax.f32 %v271, 0.0
      %v304 = vmax.f32 %v272, 0.0
      %v305 = vmax.f32 %v273, 0.0
      %v306 = vmax.f32 %v274, 0.0
      %v307 = vmax.f32 %v275, 0.0
      %v308 = vmax.f32 %v276, 0.0
      %v309 = vmax.f32 %v277, 0.0
      %v310 = vmax.f32 %v278, 0.0
      %v311 = vmax.f32 %v279, 0.0
      %v312 = vmax.f32 %v280, 0.0
      %313 = vst [vmem:[%s170] sm:$0xff] %v281
      %314 = vst [vmem:[%s170 + $0x8] sm:$0xff] %v282
      %315 = vst [vmem:[%s170 + $0x10] sm:$0xff] %v283
      %316 = vst [vmem:[%s170 + $0x18] sm:$0xff] %v284
      %317 = vst [vmem:[%s170 + $0x20] sm:$0xff] %v285
      %318 = vst [vmem:[%s170 + $0x28] sm:$0xff] %v286
      %319 = vst [vmem:[%s170 + $0x30] sm:$0xff] %v287
      %320 = vst [vmem:[%s170 + $0x38] sm:$0xff] %v288
      %321 = vst [vmem:[%s170 + $0x40] sm:$0xff] %v289
      %322 = vst [vmem:[%s170 + $0x48] sm:$0xff] %v290
      %323 = vst [vmem:[%s170 + $0x50] sm:$0xff] %v291
      %324 = vst [vmem:[%s170 + $0x58] sm:$0xff] %v292
      %325 = vst [vmem:[%s170 + $0x60] sm:$0xff] %v293
      %326 = vst [vmem:[%s170 + $0x68] sm:$0xff] %v294
      %327 = vst [vmem:[%s170 + $0x70] sm:$0xff] %v295
      %328 = vst [vmem:[%s170 + $0x78] sm:$0xff] %v296
      %329 = vst [vmem:[%s170 + $0x80] sm:$0xff] %v297
      %330 = vst [vmem:[%s170 + $0x88] sm:$0xff] %v298
      %331 = vst [vmem:[%s170 + $0x90] sm:$0xff] %v299
      %332 = vst [vmem:[%s170 + $0x98] sm:$0xff] %v300
      %333 = vst [vmem:[%s170 + $0xa0] sm:$0xff] %v301
      %334 = vst [vmem:[%s170 + $0xa8] sm:$0xff] %v302
      %335 = vst [vmem:[%s170 + $0xb0] sm:$0xff] %v303
      %336 = vst [vmem:[%s170 + $0xb8] sm:$0xff] %v304
      %337 = vst [vmem:[%s170 + $0xc0] sm:$0xff] %v305
      %338 = vst [vmem:[%s170 + $0xc8] sm:$0xff] %v306
      %339 = vst [vmem:[%s170 + $0xd0] sm:$0xff] %v307
      %340 = vst [vmem:[%s170 + $0xd8] sm:$0xff] %v308
      %341 = vst [vmem:[%s170 + $0xe0] sm:$0xff] %v309
      %342 = vst [vmem:[%s170 + $0xe8] sm:$0xff] %v310
      %343 = vst [vmem:[%s170 + $0xf0] sm:$0xff] %v311
      %344 = vst [vmem:[%s170 + $0xf8] sm:$0xff] %v312
      %p345 = scmp.lt.s32.totalorder %s14, 1
      %s346 = scalar_select %p345, %s14, 1
      %s347 = smul.addr %s346, 32
      %s348 = smul.addr %s347, 8
      %s349 = scalar_lea.vmem %s3, %s348
      // Predicated region
      $region33: #{double_conv.5} parent=31 // pred_check
        %p350 = pneg %p100
      $region34: #{double_conv.5} parent=31 // pred_check_branch
        %352 = sbr.rel (%p350) target = $region36
      $region35: #{double_conv.5} parent=31 // pred_region
        _
      $region36: #{double_conv.5} parent=31 // pred_fallthru
        _
    $region32: #{double_conv.5} parent=5 // pred_fallthru
      _
    %p353 = scmp.le.s32.totalorder 2, %s9
    // Predicated region
    $region37: #{double_conv.5} parent=5 // pred_check
      %p354 = pneg %p353
    $region38: #{double_conv.5} parent=5 // pred_check_branch
      %356 = sbr.rel (%p354) target = $region40
    $region39: #{double_conv.5} parent=5 // pred_region
      %s357 = ssub.s32 %s9, 2
      // Predicated region
      $region41: #{double_conv.5} parent=39 // pred_check
        %p358 = pneg %p106
      $region42: #{double_conv.5} parent=39 // pred_check_branch
        %360 = sbr.rel (%p358) target = $region44
      $region43: #{double_conv.5} parent=39 // pred_region
        %p361 = scmp.lt.s32.totalorder %s15, 1
        %s362 = scalar_select %p361, %s15, 1
        %s363 = smul.addr %s362, 32
        %s364 = smul.addr %s363, 8
        %s365 = scalar_lea.vmem %s3, %s364
      $region44: #{double_conv.5} parent=39 // pred_fallthru
        _
    $region40: #{double_conv.5} parent=5 // pred_fallthru
      _
  $region6: #{double_conv.5} parent=0 // loop_footer
    %s13 = sadd.s32 1, %s9
  $region7: #{double_conv.5} parent=0 // loop_footer_branch
    %8 = sbr.rel target = $region3
  $region8: #{double_conv.5} parent=0 // loop_exit
    _

// kernel: double_conv.4
$region0: #{double_conv.4}
  #allocation0 [shape = 'u32[]', space=smem, size = 0x4, offset = 0x4, fixed_abs, tag = 'smem constant byte address 0x4 - core index']
  #allocation1 [shape = 'u32[144,128]{1,0:T(1,128)}', space=vmem, size = 0x12000, scoped, tag = 'internal scratch']
  #allocation2 [shape = 'f32[256,128]{1,0:T(8,128)}', space=vmem, size = 0x20000, scoped, tag = 'scratch operand']
  %s0 = inlined_call_operand.vmem [shape: bf16[2,16,16,128], index: 0, kind: input, shape index: {}, may-alias: {0,1,2}]
  %s1 = inlined_call_operand.vmem [shape: bf16[2,16,16,128], index: 1, kind: input, shape index: {}, may-alias: {0,1,2}]
  %s2 = inlined_call_operand.vmem [shape: bf16[2,16,16,128], index: 2, kind: input, shape index: {}, may-alias: {0,1,2}]
  %s3 = inlined_call_operand.vmem [shape: bf16[3,384,128], index: 3, kind: input, shape index: {}]
  %s4 = inlined_call_operand.vmem [shape: f32[1,128], index: 4, kind: input, shape index: {}]
  %s5 = inlined_call_operand.vmem [shape: f32[1,128], index: 5, kind: input, shape index: {}]
  %s6 = inlined_call_operand.vmem [shape: f32[1,128], index: 6, kind: input, shape index: {}]
  %s7 = inlined_call_operand.vmem [shape: f32[2,1,256,128], index: 7, kind: output, shape index: {0}]
  %s8 = inlined_call_operand.vmem [shape: f32[2,1,8,128], index: 8, kind: output, shape index: {1}]
  %9 = xla_tuple %s7, %s8
  %s10 = sld [smem:[#allocation0]]
  $region69: #{double_conv.4} parent=0
    _
  %s12 = ssub.s32 1, %s10
  %s13 = scalar_select 0, %s12, %s10
  loop: start=0, step=1, limit=4
  $region2: #{double_conv.4} parent=0 // loop_pre_header
    _
  $region3: #{double_conv.4} parent=0 // loop_header
    %s15 = sphi 0, %s19
    %p16 = scmp.ge.s32.totalorder %s15, 4
    %s22 = sphi 0, %s34
    %s23 = sphi 0, %s30
    %s24 = sphi 0, %s22
    %s25 = sphi 0, %s23
    %s26 = sphi 0, %s24
    %s27 = sphi 0, %s25
    %s39 = sphi 0, %s41
    %s42 = sphi 0, %s39
    %s43 = sphi 0, %s42
    %s59 = sphi 0, %s43
    %s75 = sphi 0, %s77
    %s78 = sphi 0, %s75
    %s79 = sphi 0, %s78
    %s95 = sphi 0, %s79
    %s111 = sphi 0, %s113
    %s114 = sphi 0, %s111
    %s115 = sphi 0, %s114
    %s131 = sphi 0, %s115
    %s135 = sphi 0, %s135
    %s137 = sphi 0, %s135
    %s138 = sphi 0, %s137
    %s152 = sphi 0, %s138
    %s156 = sphi 0, %s156
    %s158 = sphi 0, %s156
    %s159 = sphi 0, %s158
    %s173 = sphi 0, %s159
    %s177 = sphi 0, %s177
    %s179 = sphi 0, %s177
    %s180 = sphi 0, %s179
    %s194 = sphi 0, %s180
    %s198 = sphi 0, %s198
    %s200 = sphi 0, %s198
    %s201 = sphi 0, %s200
    %s215 = sphi 0, %s201
    %s223 = sphi 0, %s225
    %s226 = sphi 0, %s223
    %s227 = sphi 0, %s226
    %s243 = sphi 0, %s227
    %s251 = sphi 0, %s253
    %s254 = sphi 0, %s251
    %s255 = sphi 0, %s254
    %s271 = sphi 0, %s255
  $region4: #{double_conv.4} parent=0 // loop_header_branch
    %18 = sbr.rel (%p16) target = $region8
  $region5: #{double_conv.4} parent=0 // loop_body
    %s20 = ssub.s32 %s15, 1
    %s21 = ssub.s32 %s15, 2
    %s28 = sadd.s32 1, %s23
    %p29 = scmp.ge.s32.totalorder %s28, 1
    %s30 = scalar_select %p29, 0, %s28
    %s31 = sadd.s32 1, %s22
    %s32 = scalar_select %p29, %s31, %s22
    %p33 = scmp.ge.s32.totalorder %s32, 2
    %s34 = scalar_select %p33, 0, %s32
    %s35 = ssub.s32 %s22, %s34
    %s36 = ssub.s32 %s23, %s30
    %s37 = sor.u32 %s35, %s36
    %p38 = scmp.eq.s32.totalorder %s37, 0
    %s40 = sadd.s32 %s39, 1
    %s41 = scalar_select %p38, %s39, %s40
    %p44 = pneg %p38
    %p45 = scmp.eq.s32.totalorder %s15, 1
    %p46 = por %p44, %p45
    %p47 = scmp.ne.s32.totalorder %s39, %s42
    %p48 = scmp.eq.s32.totalorder %s15, 0
    %p49 = por %p47, %p48
    %p50 = scmp.ne.s32.totalorder %s39, %s42
    %p51 = scmp.eq.s32.totalorder %s20, 1
    %p52 = por %p50, %p51
    %p53 = scmp.ne.s32.totalorder %s42, %s43
    %p54 = scmp.eq.s32.totalorder %s20, 0
    %p55 = por %p53, %p54
    %p56 = scmp.ne.s32.totalorder %s42, %s43
    %p57 = scmp.eq.s32.totalorder %s21, 1
    %p58 = por %p56, %p57
    %p60 = scmp.ne.s32.totalorder %s43, %s59
    %p61 = scmp.eq.s32.totalorder %s21, 0
    %p62 = por %p60, %p61
    %s63 = smul.u32 %s23, 16
    %s64 = ssub.s32 %s63, 1
    %p65 = scmp.gt.s32.totalorder %s64, 0
    %s66 = scalar_select %p65, %s64, 0
    %s67 = smul.u32 %s30, 16
    %s68 = ssub.s32 %s67, 1
    %p69 = scmp.gt.s32.totalorder %s68, 0
    %s70 = scalar_select %p69, %s68, 0
    %s71 = ssub.s32 %s22, %s34
    %s72 = ssub.s32 %s66, %s70
    %s73 = sor.u32 %s71, %s72
    %p74 = scmp.eq.s32.totalorder %s73, 0
    %s76 = sadd.s32 %s75, 1
    %s77 = scalar_select %p74, %s75, %s76
    %p80 = pneg %p74
    %p81 = scmp.eq.s32.totalorder %s15, 1
    %p82 = por %p80, %p81
    %p83 = scmp.ne.s32.totalorder %s75, %s78
    %p84 = scmp.eq.s32.totalorder %s15, 0
    %p85 = por %p83, %p84
    %p86 = scmp.ne.s32.totalorder %s75, %s78
    %p87 = scmp.eq.s32.totalorder %s20, 1
    %p88 = por %p86, %p87
    %p89 = scmp.ne.s32.totalorder %s78, %s79
    %p90 = scmp.eq.s32.totalorder %s20, 0
    %p91 = por %p89, %p90
    %p92 = scmp.ne.s32.totalorder %s78, %s79
    %p93 = scmp.eq.s32.totalorder %s21, 1
    %p94 = por %p92, %p93
    %p96 = scmp.ne.s32.totalorder %s79, %s95
    %p97 = scmp.eq.s32.totalorder %s21, 0
    %p98 = por %p96, %p97
    %s99 = smul.u32 %s23, 16
    %s100 = sadd.s32 %s99, 16
    %p101 = scmp.lt.s32.totalorder %s100, 15
    %s102 = scalar_select %p101, %s100, 15
    %s103 = smul.u32 %s30, 16
    %s104 = sadd.s32 %s103, 16
    %p105 = scmp.lt.s32.totalorder %s104, 15
    %s106 = scalar_select %p105, %s104, 15
    %s107 = ssub.s32 %s22, %s34
    %s108 = ssub.s32 %s102, %s106
    %s109 = sor.u32 %s107, %s108
    %p110 = scmp.eq.s32.totalorder %s109, 0
    %s112 = sadd.s32 %s111, 1
    %s113 = scalar_select %p110, %s111, %s112
    %p116 = pneg %p110
    %p117 = scmp.eq.s32.totalorder %s15, 1
    %p118 = por %p116, %p117
    %p119 = scmp.ne.s32.totalorder %s111, %s114
    %p120 = scmp.eq.s32.totalorder %s15, 0
    %p121 = por %p119, %p120
    %p122 = scmp.ne.s32.totalorder %s111, %s114
    %p123 = scmp.eq.s32.totalorder %s20, 1
    %p124 = por %p122, %p123
    %p125 = scmp.ne.s32.totalorder %s114, %s115
    %p126 = scmp.eq.s32.totalorder %s20, 0
    %p127 = por %p125, %p126
    %p128 = scmp.ne.s32.totalorder %s114, %s115
    %p129 = scmp.eq.s32.totalorder %s21, 1
    %p130 = por %p128, %p129
    %p132 = scmp.ne.s32.totalorder %s115, %s131
    %p133 = scmp.eq.s32.totalorder %s21, 0
    %p134 = por %p132, %p133
    %s136 = sadd.s32 %s135, 1
    %p139 = scmp.eq.s32.totalorder %s15, 1
    %p140 = scmp.ne.s32.totalorder %s135, %s137
    %p141 = scmp.eq.s32.totalorder %s15, 0
    %p142 = por %p140, %p141
    %p143 = scmp.ne.s32.totalorder %s135, %s137
    %p144 = scmp.eq.s32.totalorder %s20, 1
    %p145 = por %p143, %p144
    %p146 = scmp.ne.s32.totalorder %s137, %s138
    %p147 = scmp.eq.s32.totalorder %s20, 0
    %p148 = por %p146, %p147
    %p149 = scmp.ne.s32.totalorder %s137, %s138
    %p150 = scmp.eq.s32.totalorder %s21, 1
    %p151 = por %p149, %p150
    %p153 = scmp.ne.s32.totalorder %s138, %s152
    %p154 = scmp.eq.s32.totalorder %s21, 0
    %p155 = por %p153, %p154
    %s157 = sadd.s32 %s156, 1
    %p160 = scmp.eq.s32.totalorder %s15, 1
    %p161 = scmp.ne.s32.totalorder %s156, %s158
    %p162 = scmp.eq.s32.totalorder %s15, 0
    %p163 = por %p161, %p162
    %p164 = scmp.ne.s32.totalorder %s156, %s158
    %p165 = scmp.eq.s32.totalorder %s20, 1
    %p166 = por %p164, %p165
    %p167 = scmp.ne.s32.totalorder %s158, %s159
    %p168 = scmp.eq.s32.totalorder %s20, 0
    %p169 = por %p167, %p168
    %p170 = scmp.ne.s32.totalorder %s158, %s159
    %p171 = scmp.eq.s32.totalorder %s21, 1
    %p172 = por %p170, %p171
    %p174 = scmp.ne.s32.totalorder %s159, %s173
    %p175 = scmp.eq.s32.totalorder %s21, 0
    %p176 = por %p174, %p175
    %s178 = sadd.s32 %s177, 1
    %p181 = scmp.eq.s32.totalorder %s15, 1
    %p182 = scmp.ne.s32.totalorder %s177, %s179
    %p183 = scmp.eq.s32.totalorder %s15, 0
    %p184 = por %p182, %p183
    %p185 = scmp.ne.s32.totalorder %s177, %s179
    %p186 = scmp.eq.s32.totalorder %s20, 1
    %p187 = por %p185, %p186
    %p188 = scmp.ne.s32.totalorder %s179, %s180
    %p189 = scmp.eq.s32.totalorder %s20, 0
    %p190 = por %p188, %p189
    %p191 = scmp.ne.s32.totalorder %s179, %s180
    %p192 = scmp.eq.s32.totalorder %s21, 1
    %p193 = por %p191, %p192
    %p195 = scmp.ne.s32.totalorder %s180, %s194
    %p196 = scmp.eq.s32.totalorder %s21, 0
    %p197 = por %p195, %p196
    %s199 = sadd.s32 %s198, 1
    %p202 = scmp.eq.s32.totalorder %s15, 1
    %p203 = scmp.ne.s32.totalorder %s198, %s200
    %p204 = scmp.eq.s32.totalorder %s15, 0
    %p205 = por %p203, %p204
    %p206 = scmp.ne.s32.totalorder %s198, %s200
    %p207 = scmp.eq.s32.totalorder %s20, 1
    %p208 = por %p206, %p207
    %p209 = scmp.ne.s32.totalorder %s200, %s201
    %p210 = scmp.eq.s32.totalorder %s20, 0
    %p211 = por %p209, %p210
    %p212 = scmp.ne.s32.totalorder %s200, %s201
    %p213 = scmp.eq.s32.totalorder %s21, 1
    %p214 = por %p212, %p213
    %p216 = scmp.ne.s32.totalorder %s201, %s215
    %p217 = scmp.eq.s32.totalorder %s21, 0
    %p218 = por %p216, %p217
    %s219 = ssub.s32 %s22, %s34
    %s220 = ssub.s32 %s23, %s30
    %s221 = sor.u32 %s219, %s220
    %p222 = scmp.eq.s32.totalorder %s221, 0
    %s224 = sadd.s32 %s223, 1
    %s225 = scalar_select %p222, %s223, %s224
    %p228 = pneg %p222
    %p229 = scmp.eq.s32.totalorder %s15, 1
    %p230 = por %p228, %p229
    %p231 = scmp.ne.s32.totalorder %s223, %s226
    %p232 = scmp.eq.s32.totalorder %s15, 0
    %p233 = por %p231, %p232
    %p234 = scmp.ne.s32.totalorder %s223, %s226
    %p235 = scmp.eq.s32.totalorder %s20, 1
    %p236 = por %p234, %p235
    %p237 = scmp.ne.s32.totalorder %s226, %s227
    %p238 = scmp.eq.s32.totalorder %s20, 0
    %p239 = por %p237, %p238
    %p240 = scmp.ne.s32.totalorder %s226, %s227
    %p241 = scmp.eq.s32.totalorder %s21, 1
    %p242 = por %p240, %p241
    %p244 = scmp.ne.s32.totalorder %s227, %s243
    %p245 = scmp.eq.s32.totalorder %s21, 0
    %p246 = por %p244, %p245
    %s247 = ssub.s32 %s22, %s34
    %s248 = ssub.s32 %s23, %s30
    %s249 = sor.u32 %s247, %s248
    %p250 = scmp.eq.s32.totalorder %s249, 0
    %s252 = sadd.s32 %s251, 1
    %s253 = scalar_select %p250, %s251, %s252
    %p256 = pneg %p250
    %p257 = scmp.eq.s32.totalorder %s15, 1
    %p258 = por %p256, %p257
    %p259 = scmp.ne.s32.totalorder %s251, %s254
    %p260 = scmp.eq.s32.totalorder %s15, 0
    %p261 = por %p259, %p260
    %p262 = scmp.ne.s32.totalorder %s251, %s254
    %p263 = scmp.eq.s32.totalorder %s20, 1
    %p264 = por %p262, %p263
    %p265 = scmp.ne.s32.totalorder %s254, %s255
    %p266 = scmp.eq.s32.totalorder %s20, 0
    %p267 = por %p265, %p266
    %p268 = scmp.ne.s32.totalorder %s254, %s255
    %p269 = scmp.eq.s32.totalorder %s21, 1
    %p270 = por %p268, %p269
    %p272 = scmp.ne.s32.totalorder %s255, %s271
    %p273 = scmp.eq.s32.totalorder %s21, 0
    %p274 = por %p272, %p273
    %p275 = scmp.le.s32.totalorder 1, %s15
    %p276 = scmp.lt.s32.totalorder %s15, 3
    %p277 = pnand %p275, %p276
    %p278 = pneg %p277
    // Predicated region
    $region9: #{double_conv.4} parent=5 // pred_check
      _
    $region10: #{double_conv.4} parent=5 // pred_check_branch
      %280 = sbr.rel (%p277) target = $region12
    $region11: #{double_conv.4} parent=5 // pred_region
      %s281 = ssub.s32 %s15, 1
      // Predicated region
      $region13: #{double_conv.4} parent=11 // pred_check
        %p282 = pneg %p148
      $region14: #{double_conv.4} parent=11 // pred_check_branch
        %284 = sbr.rel (%p282) target = $region16
      $region15: #{double_conv.4} parent=11 // pred_region
        _
      $region16: #{double_conv.4} parent=11 // pred_fallthru
        _
      // Predicated region
      $region17: #{double_conv.4} parent=11 // pred_check
        %p285 = pneg %p169
      $region18: #{double_conv.4} parent=11 // pred_check_branch
        %287 = sbr.rel (%p285) target = $region20
      $region19: #{double_conv.4} parent=11 // pred_region
        _
      $region20: #{double_conv.4} parent=11 // pred_fallthru
        _
      // Predicated region
      $region21: #{double_conv.4} parent=11 // pred_check
        %p288 = pneg %p190
      $region22: #{double_conv.4} parent=11 // pred_check_branch
        %290 = sbr.rel (%p288) target = $region24
      $region23: #{double_conv.4} parent=11 // pred_region
        _
      $region24: #{double_conv.4} parent=11 // pred_fallthru
        _
      // Predicated region
      $region25: #{double_conv.4} parent=11 // pred_check
        %p291 = pneg %p211
      $region26: #{double_conv.4} parent=11 // pred_check_branch
        %293 = sbr.rel (%p291) target = $region28
      $region27: #{double_conv.4} parent=11 // pred_region
        _
      $region28: #{double_conv.4} parent=11 // pred_fallthru
        _
    $region12: #{double_conv.4} parent=5 // pred_fallthru
      _
    %p294 = scmp.lt.s32.totalorder %s15, 2
    // Predicated region
    $region29: #{double_conv.4} parent=5 // pred_check
      %p295 = pneg %p294
    $region30: #{double_conv.4} parent=5 // pred_check_branch
      %297 = sbr.rel (%p295) target = $region32
    $region31: #{double_conv.4} parent=5 // pred_region
      // Predicated region
      $region33: #{double_conv.4} parent=31 // pred_check
        %p298 = pneg %p49
      $region34: #{double_conv.4} parent=31 // pred_check_branch
        %300 = sbr.rel (%p298) target = $region36
      $region35: #{double_conv.4} parent=31 // pred_region
        %s301 = smul.u32 16, %s23
        %p302 = scmp.lt.s32.totalorder %s22, 1
        %s303 = scalar_select %p302, %s22, 1
        %p304 = scmp.lt.s32.totalorder %s301, 15
        %s305 = scalar_select %p304, %s301, 15
        %s306 = smul.addr %s305, 2
        %s307 = smul.addr %s303, 32
        %s308 = sadd.s32 %s306, %s307
        %s309 = smul.addr %s308, 4
        %s310 = scalar_lea.vmem %s0, %s309
        %s311 = smul.u32 16, %s23
      $region36: #{double_conv.4} parent=31 // pred_fallthru
        _
      // Predicated region
      $region37: #{double_conv.4} parent=31 // pred_check
        %p312 = pneg %p85
      $region38: #{double_conv.4} parent=31 // pred_check_branch
        %314 = sbr.rel (%p312) target = $region40
      $region39: #{double_conv.4} parent=31 // pred_region
        %s315 = smul.u32 %s23, 16
        %s316 = ssub.s32 %s315, 1
        %p317 = scmp.gt.s32.totalorder %s316, 0
        %s318 = scalar_select %p317, %s316, 0
        %p319 = scmp.lt.s32.totalorder %s22, 1
        %s320 = scalar_select %p319, %s22, 1
        %p321 = scmp.lt.s32.totalorder %s318, 15
        %s322 = scalar_select %p321, %s318, 15
        %s323 = smul.addr %s322, 2
        %s324 = smul.addr %s320, 32
        %s325 = sadd.s32 %s323, %s324
        %s326 = smul.addr %s325, 4
        %s327 = scalar_lea.vmem %s1, %s326
        %s328 = smul.u32 %s23, 16
        %s329 = ssub.s32 %s328, 1
        %p330 = scmp.gt.s32.totalorder %s329, 0
        %s331 = scalar_select %p330, %s329, 0
      $region40: #{double_conv.4} parent=31 // pred_fallthru
        _
      // Predicated region
      $region41: #{double_conv.4} parent=31 // pred_check
        %p332 = pneg %p121
      $region42: #{double_conv.4} parent=31 // pred_check_branch
        %334 = sbr.rel (%p332) target = $region44
      $region43: #{double_conv.4} parent=31 // pred_region
        %s335 = smul.u32 %s23, 16
        %s336 = sadd.s32 %s335, 16
        %p337 = scmp.lt.s32.totalorder %s336, 15
        %s338 = scalar_select %p337, %s336, 15
        %p339 = scmp.lt.s32.totalorder %s22, 1
        %s340 = scalar_select %p339, %s22, 1
        %p341 = scmp.lt.s32.totalorder %s338, 15
        %s342 = scalar_select %p341, %s338, 15
        %s343 = smul.addr %s342, 2
        %s344 = smul.addr %s340, 32
        %s345 = sadd.s32 %s343, %s344
        %s346 = smul.addr %s345, 4
        %s347 = scalar_lea.vmem %s2, %s346
        %s348 = smul.u32 %s23, 16
        %s349 = sadd.s32 %s348, 16
        %p350 = scmp.lt.s32.totalorder %s349, 15
        %s351 = scalar_select %p350, %s349, 15
      $region44: #{double_conv.4} parent=31 // pred_fallthru
        _
    $region32: #{double_conv.4} parent=5 // pred_fallthru
      _
    %p352 = scmp.le.s32.totalorder 1, %s15
    %p353 = scmp.lt.s32.totalorder %s15, 3
    %p354 = pnand %p352, %p353
    %p355 = pneg %p354
    // Predicated region
    $region45: #{double_conv.4} parent=5 // pred_check
      _
    $region46: #{double_conv.4} parent=5 // pred_check_branch
      %357 = sbr.rel (%p354) target = $region48
    $region47: #{double_conv.4} parent=5 // pred_region
      %s358 = ssub.s32 %s15, 1
      %s359 = smul.u32 16, %s25
      %p360 = scmp.lt.s32.totalorder %s24, 1
      %s361 = scalar_select %p360, %s24, 1
      %p362 = scmp.lt.s32.totalorder %s359, 15
      %s363 = scalar_select %p362, %s359, 15
      %s364 = smul.addr %s363, 2
      %s365 = smul.addr %s361, 32
      %s366 = sadd.s32 %s364, %s365
      %s367 = smul.addr %s366, 4
      %s368 = scalar_lea.vmem %s0, %s367
      %p369 = pneg %p55
      %p370 = pneg %p52
      %s371 = smul.u32 %s25, 16
      %s372 = ssub.s32 %s371, 1
      %p373 = scmp.gt.s32.totalorder %s372, 0
      %s374 = scalar_select %p373, %s372, 0
      %p375 = scmp.lt.s32.totalorder %s24, 1
      %s376 = scalar_select %p375, %s24, 1
      %p377 = scmp.lt.s32.totalorder %s374, 15
      %s378 = scalar_select %p377, %s374, 15
      %s379 = smul.addr %s378, 2
      %s380 = smul.addr %s376, 32
      %s381 = sadd.s32 %s379, %s380
      %s382 = smul.addr %s381, 4
      %s383 = scalar_lea.vmem %s1, %s382
      %p384 = pneg %p91
      %p385 = pneg %p88
      %s386 = smul.u32 %s25, 16
      %s387 = sadd.s32 %s386, 16
      %p388 = scmp.lt.s32.totalorder %s387, 15
      %s389 = scalar_select %p388, %s387, 15
      %p390 = scmp.lt.s32.totalorder %s24, 1
      %s391 = scalar_select %p390, %s24, 1
      %p392 = scmp.lt.s32.totalorder %s389, 15
      %s393 = scalar_select %p392, %s389, 15
      %s394 = smul.addr %s393, 2
      %s395 = smul.addr %s391, 32
      %s396 = sadd.s32 %s394, %s395
      %s397 = smul.addr %s396, 4
      %s398 = scalar_lea.vmem %s2, %s397
      %p399 = pneg %p127
      %p400 = pneg %p124
      %p401 = pneg %p148
      %p402 = pneg %p145
      %p403 = pneg %p169
      %p404 = pneg %p166
      %p405 = pneg %p190
      %p406 = pneg %p187
      %p407 = pneg %p211
      %p408 = pneg %p208
      %p409 = pneg %p239
      %p410 = pneg %p236
      %p411 = scmp.lt.s32.totalorder %s24, 1
      %s412 = scalar_select %p411, %s24, 1
      %p413 = scmp.lt.s32.totalorder %s25, 0
      %s414 = scalar_select %p413, %s25, 0
      %s415 = smul.addr %s414, 32
      %s416 = smul.addr %s412, 32
      %s417 = sadd.s32 %s415, %s416
      %s418 = smul.addr %s417, 8
      %s419 = scalar_lea.vmem %s7, %s418
      %p420 = pneg %p267
      %p421 = pneg %p264
      %p422 = scmp.lt.s32.totalorder %s24, 1
      %s423 = scalar_select %p422, %s24, 1
      %p424 = scmp.lt.s32.totalorder %s25, 0
      %s425 = scalar_select %p424, %s25, 0
      %s426 = sadd.s32 %s425, %s423
      %s427 = smul.addr %s426, 8
      %s428 = scalar_lea.vmem %s8, %s427
      %s429 = smul.u32 16, %s25
      %p430 = scmp.lt.s32.totalorder %s24, 1
      %s431 = scalar_select %p430, %s24, 1
      %p432 = scmp.lt.s32.totalorder %s429, 15
      %s433 = scalar_select %p432, %s429, 15
      %s434 = smul.addr %s433, 2
      %s435 = smul.addr %s431, 32
      %s436 = sadd.s32 %s434, %s435
      %s437 = smul.addr %s436, 4
      %s438 = scalar_lea.vmem %s0, %s437
      %s439 = smul.u32 16, %s25
      %s440 = smul.u32 %s25, 16
      %s441 = ssub.s32 %s440, 1
      %p442 = scmp.gt.s32.totalorder %s441, 0
      %s443 = scalar_select %p442, %s441, 0
      %p444 = scmp.lt.s32.totalorder %s24, 1
      %s445 = scalar_select %p444, %s24, 1
      %p446 = scmp.lt.s32.totalorder %s443, 15
      %s447 = scalar_select %p446, %s443, 15
      %s448 = smul.addr %s447, 2
      %s449 = smul.addr %s445, 32
      %s450 = sadd.s32 %s448, %s449
      %s451 = smul.addr %s450, 4
      %s452 = scalar_lea.vmem %s1, %s451
      %s453 = smul.u32 %s25, 16
      %s454 = ssub.s32 %s453, 1
      %p455 = scmp.gt.s32.totalorder %s454, 0
      %s456 = scalar_select %p455, %s454, 0
      %s457 = smul.u32 %s25, 16
      %s458 = sadd.s32 %s457, 16
      %p459 = scmp.lt.s32.totalorder %s458, 15
      %s460 = scalar_select %p459, %s458, 15
      %p461 = scmp.lt.s32.totalorder %s24, 1
      %s462 = scalar_select %p461, %s24, 1
      %p463 = scmp.lt.s32.totalorder %s460, 15
      %s464 = scalar_select %p463, %s460, 15
      %s465 = smul.addr %s464, 2
      %s466 = smul.addr %s462, 32
      %s467 = sadd.s32 %s465, %s466
      %s468 = smul.addr %s467, 4
      %s469 = scalar_lea.vmem %s2, %s468
      %s470 = smul.u32 %s25, 16
      %s471 = sadd.s32 %s470, 16
      %p472 = scmp.lt.s32.totalorder %s471, 15
      %s473 = scalar_select %p472, %s471, 15
      %p474 = scmp.lt.s32.totalorder %s24, 1
      %s475 = scalar_select %p474, %s24, 1
      %p476 = scmp.lt.s32.totalorder %s25, 0
      %s477 = scalar_select %p476, %s25, 0
      %s478 = smul.addr %s477, 32
      %s479 = smul.addr %s475, 32
      %s480 = sadd.s32 %s478, %s479
      %s481 = smul.addr %s480, 8
      %s482 = scalar_lea.vmem %s7, %s481
      %p483 = scmp.lt.s32.totalorder %s24, 1
      %s484 = scalar_select %p483, %s24, 1
      %p485 = scmp.lt.s32.totalorder %s25, 0
      %s486 = scalar_select %p485, %s25, 0
      %s487 = sadd.s32 %s486, %s484
      %s488 = smul.addr %s487, 8
      %s489 = scalar_lea.vmem %s8, %s488
      %v491 = vld [vmem:[%s5] sm:$0x1]
      %v492 = vld [vmem:[%s6] sm:$0x1]
      %p493 = scmp.gt.s32.totalorder %s25, 0
      %s494 = scalar_select %p493, 1.0, 0.0
      %p495 = scmp.lt.s32.totalorder %s25, 0
      %s496 = scalar_select %p495, 1.0, 0.0
      %v497 = vld [vmem:[%s452] sm:$0xf]
      %v498 = vld [vmem:[%s452 + $0x4] sm:$0xf]
      %v499 = vunpack.c.l.bf16 %v497
      %v500 = vunpack.c.l.bf16 %v498
      %v502 = vlaneseq
      %v503 = vshrl.u32 %v502, 7
      %v504 = vsub.s32 0, %v503
      %v505 = vrot.slane %v491, %v504
      %v507 = vmul.f32 %v499, %v505
      %v508 = vmul.f32 %v500, %v505
      %v510 = vlaneseq
      %v511 = vshrl.u32 %v510, 7
      %v512 = vsub.s32 0, %v511
      %v513 = vrot.slane %v492, %v512
      %v515 = vadd.f32 %v507, %v513
      %v516 = vadd.f32 %v508, %v513
      %v517 = vmax.f32 %v515, 0.0
      %v518 = vmax.f32 %v516, 0.0
      %v519 = vstv %s494
      %v520 = vmul.f32 %v517, %v519
      %v521 = vmul.f32 %v518, %v519
      %v522 = vld [vmem:[%s438] sm:$0xf]
      %v523 = vld [vmem:[%s438 + $0x4] sm:$0xf]
      %v524 = vld [vmem:[%s438 + $0x8] sm:$0xf]
      %v525 = vld [vmem:[%s438 + $0xc] sm:$0xf]
      %v526 = vld [vmem:[%s438 + $0x10] sm:$0xf]
      %v527 = vld [vmem:[%s438 + $0x14] sm:$0xf]
      %v528 = vld [vmem:[%s438 + $0x18] sm:$0xf]
      %v529 = vld [vmem:[%s438 + $0x1c] sm:$0xf]
      %v530 = vld [vmem:[%s438 + $0x20] sm:$0xf]
      %v531 = vld [vmem:[%s438 + $0x24] sm:$0xf]
      %v532 = vld [vmem:[%s438 + $0x28] sm:$0xf]
      %v533 = vld [vmem:[%s438 + $0x2c] sm:$0xf]
      %v534 = vld [vmem:[%s438 + $0x30] sm:$0xf]
      %v535 = vld [vmem:[%s438 + $0x34] sm:$0xf]
      %v536 = vld [vmem:[%s438 + $0x38] sm:$0xf]
      %v537 = vld [vmem:[%s438 + $0x3c] sm:$0xf]
      %v538 = vld [vmem:[%s438 + $0x40] sm:$0xf]
      %v539 = vld [vmem:[%s438 + $0x44] sm:$0xf]
      %v540 = vld [vmem:[%s438 + $0x48] sm:$0xf]
      %v541 = vld [vmem:[%s438 + $0x4c] sm:$0xf]
      %v542 = vld [vmem:[%s438 + $0x50] sm:$0xf]
      %v543 = vld [vmem:[%s438 + $0x54] sm:$0xf]
      %v544 = vld [vmem:[%s438 + $0x58] sm:$0xf]
      %v545 = vld [vmem:[%s438 + $0x5c] sm:$0xf]
      %v546 = vld [vmem:[%s438 + $0x60] sm:$0xf]
      %v547 = vld [vmem:[%s438 + $0x64] sm:$0xf]
      %v548 = vld [vmem:[%s438 + $0x68] sm:$0xf]
      %v549 = vld [vmem:[%s438 + $0x6c] sm:$0xf]
      %v550 = vld [vmem:[%s438 + $0x70] sm:$0xf]
      %v551 = vld [vmem:[%s438 + $0x74] sm:$0xf]
      %v552 = vld [vmem:[%s438 + $0x78] sm:$0xf]
      %v553 = vld [vmem:[%s438 + $0x7c] sm:$0xf]
      %v554 = vunpack.c.l.bf16 %v522
      %v555 = vunpack.c.l.bf16 %v523
      %v556 = vunpack.c.l.bf16 %v524
      %v557 = vunpack.c.l.bf16 %v525
      %v558 = vunpack.c.l.bf16 %v526
      %v559 = vunpack.c.l.bf16 %v527
      %v560 = vunpack.c.l.bf16 %v528
      %v561 = vunpack.c.l.bf16 %v529
      %v562 = vunpack.c.l.bf16 %v530
      %v563 = vunpack.c.l.bf16 %v531
      %v564 = vunpack.c.l.bf16 %v532
      %v565 = vunpack.c.l.bf16 %v533
      %v566 = vunpack.c.l.bf16 %v534
      %v567 = vunpack.c.l.bf16 %v535
      %v568 = vunpack.c.l.bf16 %v536
      %v569 = vunpack.c.l.bf16 %v537
      %v570 = vunpack.c.l.bf16 %v538
      %v571 = vunpack.c.l.bf16 %v539
      %v572 = vunpack.c.l.bf16 %v540
      %v573 = vunpack.c.l.bf16 %v541
      %v574 = vunpack.c.l.bf16 %v542
      %v575 = vunpack.c.l.bf16 %v543
      %v576 = vunpack.c.l.bf16 %v544
      %v577 = vunpack.c.l.bf16 %v545
      %v578 = vunpack.c.l.bf16 %v546
      %v579 = vunpack.c.l.bf16 %v547
      %v580 = vunpack.c.l.bf16 %v548
      %v581 = vunpack.c.l.bf16 %v549
      %v582 = vunpack.c.l.bf16 %v550
      %v583 = vunpack.c.l.bf16 %v551
      %v584 = vunpack.c.l.bf16 %v552
      %v585 = vunpack.c.l.bf16 %v553
      %v586 = vmul.f32 %v554, %v505
      %v587 = vmul.f32 %v555, %v505
      %v588 = vmul.f32 %v556, %v505
      %v589 = vmul.f32 %v557, %v505
      %v590 = vmul.f32 %v558, %v505
      %v591 = vmul.f32 %v559, %v505
      %v592 = vmul.f32 %v560, %v505
      %v593 = vmul.f32 %v561, %v505
      %v594 = vmul.f32 %v562, %v505
      %v595 = vmul.f32 %v563, %v505
      %v596 = vmul.f32 %v564, %v505
      %v597 = vmul.f32 %v565, %v505
      %v598 = vmul.f32 %v566, %v505
      %v599 = vmul.f32 %v567, %v505
      %v600 = vmul.f32 %v568, %v505
      %v601 = vmul.f32 %v569, %v505
      %v602 = vmul.f32 %v570, %v505
      %v603 = vmul.f32 %v571, %v505
      %v604 = vmul.f32 %v572, %v505
      %v605 = vmul.f32 %v573, %v505
      %v606 = vmul.f32 %v574, %v505
      %v607 = vmul.f32 %v575, %v505
      %v608 = vmul.f32 %v576, %v505
      %v609 = vmul.f32 %v577, %v505
      %v610 = vmul.f32 %v578, %v505
      %v611 = vmul.f32 %v579, %v505
      %v612 = vmul.f32 %v580, %v505
      %v613 = vmul.f32 %v581, %v505
      %v614 = vmul.f32 %v582, %v505
      %v615 = vmul.f32 %v583, %v505
      %v616 = vmul.f32 %v584, %v505
      %v617 = vmul.f32 %v585, %v505
      %v618 = vadd.f32 %v586, %v513
      %v619 = vadd.f32 %v587, %v513
      %v620 = vadd.f32 %v588, %v513
      %v621 = vadd.f32 %v589, %v513
      %v622 = vadd.f32 %v590, %v513
      %v623 = vadd.f32 %v591, %v513
      %v624 = vadd.f32 %v592, %v513
      %v625 = vadd.f32 %v593, %v513
      %v626 = vadd.f32 %v594, %v513
      %v627 = vadd.f32 %v595, %v513
      %v628 = vadd.f32 %v596, %v513
      %v629 = vadd.f32 %v597, %v513
      %v630 = vadd.f32 %v598, %v513
      %v631 = vadd.f32 %v599, %v513
      %v632 = vadd.f32 %v600, %v513
      %v633 = vadd.f32 %v601, %v513
      %v634 = vadd.f32 %v602, %v513
      %v635 = vadd.f32 %v603, %v513
      %v636 = vadd.f32 %v604, %v513
      %v637 = vadd.f32 %v605, %v513
      %v638 = vadd.f32 %v606, %v513
      %v639 = vadd.f32 %v607, %v513
      %v640 = vadd.f32 %v608, %v513
      %v641 = vadd.f32 %v609, %v513
      %v642 = vadd.f32 %v610, %v513
      %v643 = vadd.f32 %v611, %v513
      %v644 = vadd.f32 %v612, %v513
      %v645 = vadd.f32 %v613, %v513
      %v646 = vadd.f32 %v614, %v513
      %v647 = vadd.f32 %v615, %v513
      %v648 = vadd.f32 %v616, %v513
      %v649 = vadd.f32 %v617, %v513
      %v650 = vmax.f32 %v618, 0.0
      %v651 = vmax.f32 %v619, 0.0
      %v652 = vmax.f32 %v620, 0.0
      %v653 = vmax.f32 %v621, 0.0
      %v654 = vmax.f32 %v622, 0.0
      %v655 = vmax.f32 %v623, 0.0
      %v656 = vmax.f32 %v624, 0.0
      %v657 = vmax.f32 %v625, 0.0
      %v658 = vmax.f32 %v626, 0.0
      %v659 = vmax.f32 %v627, 0.0
      %v660 = vmax.f32 %v628, 0.0
      %v661 = vmax.f32 %v629, 0.0
      %v662 = vmax.f32 %v630, 0.0
      %v663 = vmax.f32 %v631, 0.0
      %v664 = vmax.f32 %v632, 0.0
      %v665 = vmax.f32 %v633, 0.0
      %v666 = vmax.f32 %v634, 0.0
      %v667 = vmax.f32 %v635, 0.0
      %v668 = vmax.f32 %v636, 0.0
      %v669 = vmax.f32 %v637, 0.0
      %v670 = vmax.f32 %v638, 0.0
      %v671 = vmax.f32 %v639, 0.0
      %v672 = vmax.f32 %v640, 0.0
      %v673 = vmax.f32 %v641, 0.0
      %v674 = vmax.f32 %v642, 0.0
      %v675 = vmax.f32 %v643, 0.0
      %v676 = vmax.f32 %v644, 0.0
      %v677 = vmax.f32 %v645, 0.0
      %v678 = vmax.f32 %v646, 0.0
      %v679 = vmax.f32 %v647, 0.0
      %v680 = vmax.f32 %v648, 0.0
      %v681 = vmax.f32 %v649, 0.0
      %v682 = vld [vmem:[%s469] sm:$0xf]
      %v683 = vld [vmem:[%s469 + $0x4] sm:$0xf]
      %v684 = vunpack.c.l.bf16 %v682
      %v685 = vunpack.c.l.bf16 %v683
      %v686 = vmul.f32 %v684, %v505
      %v687 = vmul.f32 %v685, %v505
      %v688 = vadd.f32 %v686, %v513
      %v689 = vadd.f32 %v687, %v513
      %v690 = vmax.f32 %v688, 0.0
      %v691 = vmax.f32 %v689, 0.0
      %v692 = vstv %s496
      %v693 = vmul.f32 %v690, %v692
      %v694 = vmul.f32 %v691, %v692
      %vm731 = vcmask 1040384
      %v732 = vrot.slane %v520, 7
      %v733 = vrot.slane %v521, 7
      %v734 = vsel %vm731, %v732, %v733
      %v735 = vrot.slane %v650, 7
      %v736 = vrot.slane %v651, 7
      %v737 = vsel %vm731, %v735, %v736
      %v738 = vrot.slane %v652, 7
      %v739 = vrot.slane %v653, 7
      %v740 = vsel %vm731, %v738, %v739
      %v741 = vrot.slane %v654, 7
      %v742 = vrot.slane %v655, 7
      %v743 = vsel %vm731, %v741, %v742
      %v744 = vrot.slane %v656, 7
      %v745 = vrot.slane %v657, 7
      %v746 = vsel %vm731, %v744, %v745
      %v747 = vrot.slane %v658, 7
      %v748 = vrot.slane %v659, 7
      %v749 = vsel %vm731, %v747, %v748
      %v750 = vrot.slane %v660, 7
      %v751 = vrot.slane %v661, 7
      %v752 = vsel %vm731, %v750, %v751
      %v753 = vrot.slane %v662, 7
      %v754 = vrot.slane %v663, 7
      %v755 = vsel %vm731, %v753, %v754
      %v756 = vrot.slane %v664, 7
      %v757 = vrot.slane %v665, 7
      %v758 = vsel %vm731, %v756, %v757
      %v759 = vrot.slane %v666, 7
      %v760 = vrot.slane %v667, 7
      %v761 = vsel %vm731, %v759, %v760
      %v762 = vrot.slane %v668, 7
      %v763 = vrot.slane %v669, 7
      %v764 = vsel %vm731, %v762, %v763
      %v765 = vrot.slane %v670, 7
      %v766 = vrot.slane %v671, 7
      %v767 = vsel %vm731, %v765, %v766
      %v768 = vrot.slane %v672, 7
      %v769 = vrot.slane %v673, 7
      %v770 = vsel %vm731, %v768, %v769
      %v771 = vrot.slane %v674, 7
      %v772 = vrot.slane %v675, 7
      %v773 = vsel %vm731, %v771, %v772
      %v774 = vrot.slane %v676, 7
      %v775 = vrot.slane %v677, 7
      %v776 = vsel %vm731, %v774, %v775
      %v777 = vrot.slane %v678, 7
      %v778 = vrot.slane %v679, 7
      %v779 = vsel %vm731, %v777, %v778
      %v780 = vrot.slane %v680, 7
      %v781 = vrot.slane %v681, 7
      %v782 = vsel %vm731, %v780, %v781
      %v783 = vrot.slane %v693, 7
      %v784 = vrot.slane %v694, 7
      %v785 = vsel %vm731, %v783, %v784
      %v840 = vsel %vm731, 0.0, %v732
      %v841 = vsel %vm731, 0.0, %v735
      %v842 = vsel %vm731, 0.0, %v738
      %v843 = vsel %vm731, 0.0, %v741
      %v844 = vsel %vm731, 0.0, %v744
      %v845 = vsel %vm731, 0.0, %v747
      %v846 = vsel %vm731, 0.0, %v750
      %v847 = vsel %vm731, 0.0, %v753
      %v848 = vsel %vm731, 0.0, %v756
      %v849 = vsel %vm731, 0.0, %v759
      %v850 = vsel %vm731, 0.0, %v762
      %v851 = vsel %vm731, 0.0, %v765
      %v852 = vsel %vm731, 0.0, %v768
      %v853 = vsel %vm731, 0.0, %v771
      %v854 = vsel %vm731, 0.0, %v774
      %v855 = vsel %vm731, 0.0, %v777
      %v856 = vsel %vm731, 0.0, %v780
      %v857 = vsel %vm731, 0.0, %v783
      %v858 = vsel %vm731, %v733, 0.0
      %v859 = vsel %vm731, %v736, 0.0
      %v860 = vsel %vm731, %v739, 0.0
      %v861 = vsel %vm731, %v742, 0.0
      %v862 = vsel %vm731, %v745, 0.0
      %v863 = vsel %vm731, %v748, 0.0
      %v864 = vsel %vm731, %v751, 0.0
      %v865 = vsel %vm731, %v754, 0.0
      %v866 = vsel %vm731, %v757, 0.0
      %v867 = vsel %vm731, %v760, 0.0
      %v868 = vsel %vm731, %v763, 0.0
      %v869 = vsel %vm731, %v766, 0.0
      %v870 = vsel %vm731, %v769, 0.0
      %v871 = vsel %vm731, %v772, 0.0
      %v872 = vsel %vm731, %v775, 0.0
      %v873 = vsel %vm731, %v778, 0.0
      %v874 = vsel %vm731, %v781, 0.0
      %v875 = vsel %vm731, %v784, 0.0
      %v876 = vpack.c.bf16 %v734, %v840
      %v877 = vpack.c.bf16 %v858, %v858
      %v878 = vpack.c.bf16 %v737, %v841
      %v879 = vpack.c.bf16 %v859, %v859
      %v880 = vpack.c.bf16 %v740, %v842
      %v881 = vpack.c.bf16 %v860, %v860
      %v882 = vpack.c.bf16 %v743, %v843
      %v883 = vpack.c.bf16 %v861, %v861
      %v884 = vpack.c.bf16 %v746, %v844
      %v885 = vpack.c.bf16 %v862, %v862
      %v886 = vpack.c.bf16 %v749, %v845
      %v887 = vpack.c.bf16 %v863, %v863
      %v888 = vpack.c.bf16 %v752, %v846
      %v889 = vpack.c.bf16 %v864, %v864
      %v890 = vpack.c.bf16 %v755, %v847
      %v891 = vpack.c.bf16 %v865, %v865
      %v892 = vpack.c.bf16 %v758, %v848
      %v893 = vpack.c.bf16 %v866, %v866
      %v894 = vpack.c.bf16 %v761, %v849
      %v895 = vpack.c.bf16 %v867, %v867
      %v896 = vpack.c.bf16 %v764, %v850
      %v897 = vpack.c.bf16 %v868, %v868
      %v898 = vpack.c.bf16 %v767, %v851
      %v899 = vpack.c.bf16 %v869, %v869
      %v900 = vpack.c.bf16 %v770, %v852
      %v901 = vpack.c.bf16 %v870, %v870
      %v902 = vpack.c.bf16 %v773, %v853
      %v903 = vpack.c.bf16 %v871, %v871
      %v904 = vpack.c.bf16 %v776, %v854
      %v905 = vpack.c.bf16 %v872, %v872
      %v906 = vpack.c.bf16 %v779, %v855
      %v907 = vpack.c.bf16 %v873, %v873
      %v908 = vpack.c.bf16 %v782, %v856
      %v909 = vpack.c.bf16 %v874, %v874
      %v910 = vpack.c.bf16 %v785, %v857
      %v911 = vpack.c.bf16 %v875, %v875
      %912 = vst [vmem:[#allocation2] sm:$0xff] 0.0
      %913 = vst [vmem:[#allocation2 + $0x8] sm:$0xff] 0.0
      %914 = vst [vmem:[#allocation2 + $0x10] sm:$0xff] 0.0
      %915 = vst [vmem:[#allocation2 + $0x18] sm:$0xff] 0.0
      %916 = vst [vmem:[#allocation2 + $0x20] sm:$0xff] 0.0
      %917 = vst [vmem:[#allocation2 + $0x28] sm:$0xff] 0.0
      %918 = vst [vmem:[#allocation2 + $0x30] sm:$0xff] 0.0
      %919 = vst [vmem:[#allocation2 + $0x38] sm:$0xff] 0.0
      %920 = vst [vmem:[#allocation2 + $0x40] sm:$0xff] 0.0
      %921 = vst [vmem:[#allocation2 + $0x48] sm:$0xff] 0.0
      %922 = vst [vmem:[#allocation2 + $0x50] sm:$0xff] 0.0
      %923 = vst [vmem:[#allocation2 + $0x58] sm:$0xff] 0.0
      %924 = vst [vmem:[#allocation2 + $0x60] sm:$0xff] 0.0
      %925 = vst [vmem:[#allocation2 + $0x68] sm:$0xff] 0.0
      %926 = vst [vmem:[#allocation2 + $0x70] sm:$0xff] 0.0
      %927 = vst [vmem:[#allocation2 + $0x78] sm:$0xff] 0.0
      %928 = vst [vmem:[#allocation2 + $0x80] sm:$0xff] 0.0
      %929 = vst [vmem:[#allocation2 + $0x88] sm:$0xff] 0.0
      %930 = vst [vmem:[#allocation2 + $0x90] sm:$0xff] 0.0
      %931 = vst [vmem:[#allocation2 + $0x98] sm:$0xff] 0.0
      %932 = vst [vmem:[#allocation2 + $0xa0] sm:$0xff] 0.0
      %933 = vst [vmem:[#allocation2 + $0xa8] sm:$0xff] 0.0
      %934 = vst [vmem:[#allocation2 + $0xb0] sm:$0xff] 0.0
      %935 = vst [vmem:[#allocation2 + $0xb8] sm:$0xff] 0.0
      %936 = vst [vmem:[#allocation2 + $0xc0] sm:$0xff] 0.0
      %937 = vst [vmem:[#allocation2 + $0xc8] sm:$0xff] 0.0
      %938 = vst [vmem:[#allocation2 + $0xd0] sm:$0xff] 0.0
      %939 = vst [vmem:[#allocation2 + $0xd8] sm:$0xff] 0.0
      %940 = vst [vmem:[#allocation2 + $0xe0] sm:$0xff] 0.0
      %941 = vst [vmem:[#allocation2 + $0xe8] sm:$0xff] 0.0
      %942 = vst [vmem:[#allocation2 + $0xf0] sm:$0xff] 0.0
      %943 = vst [vmem:[#allocation2 + $0xf8] sm:$0xff] 0.0
      %vm944 = vsmask.f32 7424
      %v946 = vshrl.u32 %v876, 16
      %v948 = vshll.u32 %v876, 16
      %v950 = vrot.slane %v948, 1
      %v951 = vor.u32 %v946, %v950
      %v953 = vshll.u32 %v877, 16
      %v955 = vrot.slane %v953, 1
      %v956 = vsel %vm944, %v951, %v955
      %v958 = vshrl.u32 %v878, 16
      %v960 = vshll.u32 %v878, 16
      %v962 = vrot.slane %v960, 1
      %v963 = vor.u32 %v958, %v962
      %v965 = vshll.u32 %v879, 16
      %v967 = vrot.slane %v965, 1
      %v968 = vsel %vm944, %v963, %v967
      %v970 = vshrl.u32 %v880, 16
      %v972 = vshll.u32 %v880, 16
      %v974 = vrot.slane %v972, 1
      %v975 = vor.u32 %v970, %v974
      %v977 = vshll.u32 %v881, 16
      %v979 = vrot.slane %v977, 1
      %v980 = vsel %vm944, %v975, %v979
      %v982 = vshrl.u32 %v882, 16
      %v984 = vshll.u32 %v882, 16
      %v986 = vrot.slane %v984, 1
      %v987 = vor.u32 %v982, %v986
      %v989 = vshll.u32 %v883, 16
      %v991 = vrot.slane %v989, 1
      %v992 = vsel %vm944, %v987, %v991
      %v994 = vshrl.u32 %v884, 16
      %v996 = vshll.u32 %v884, 16
      %v998 = vrot.slane %v996, 1
      %v999 = vor.u32 %v994, %v998
      %v1001 = vshll.u32 %v885, 16
      %v1003 = vrot.slane %v1001, 1
      %v1004 = vsel %vm944, %v999, %v1003
      %v1006 = vshrl.u32 %v886, 16
      %v1008 = vshll.u32 %v886, 16
      %v1010 = vrot.slane %v1008, 1
      %v1011 = vor.u32 %v1006, %v1010
      %v1013 = vshll.u32 %v887, 16
      %v1015 = vrot.slane %v1013, 1
      %v1016 = vsel %vm944, %v1011, %v1015
      %v1018 = vshrl.u32 %v888, 16
      %v1020 = vshll.u32 %v888, 16
      %v1022 = vrot.slane %v1020, 1
      %v1023 = vor.u32 %v1018, %v1022
      %v1025 = vshll.u32 %v889, 16
      %v1027 = vrot.slane %v1025, 1
      %v1028 = vsel %vm944, %v1023, %v1027
      %v1030 = vshrl.u32 %v890, 16
      %v1032 = vshll.u32 %v890, 16
      %v1034 = vrot.slane %v1032, 1
      %v1035 = vor.u32 %v1030, %v1034
      %v1037 = vshll.u32 %v891, 16
      %v1039 = vrot.slane %v1037, 1
      %v1040 = vsel %vm944, %v1035, %v1039
      %v1042 = vshrl.u32 %v892, 16
      %v1044 = vshll.u32 %v892, 16
      %v1046 = vrot.slane %v1044, 1
      %v1047 = vor.u32 %v1042, %v1046
      %v1049 = vshll.u32 %v893, 16
      %v1051 = vrot.slane %v1049, 1
      %v1052 = vsel %vm944, %v1047, %v1051
      %v1054 = vshrl.u32 %v894, 16
      %v1056 = vshll.u32 %v894, 16
      %v1058 = vrot.slane %v1056, 1
      %v1059 = vor.u32 %v1054, %v1058
      %v1061 = vshll.u32 %v895, 16
      %v1063 = vrot.slane %v1061, 1
      %v1064 = vsel %vm944, %v1059, %v1063
      %v1066 = vshrl.u32 %v896, 16
      %v1068 = vshll.u32 %v896, 16
      %v1070 = vrot.slane %v1068, 1
      %v1071 = vor.u32 %v1066, %v1070
      %v1073 = vshll.u32 %v897, 16
      %v1075 = vrot.slane %v1073, 1
      %v1076 = vsel %vm944, %v1071, %v1075
      %v1078 = vshrl.u32 %v898, 16
      %v1080 = vshll.u32 %v898, 16
      %v1082 = vrot.slane %v1080, 1
      %v1083 = vor.u32 %v1078, %v1082
      %v1085 = vshll.u32 %v899, 16
      %v1087 = vrot.slane %v1085, 1
      %v1088 = vsel %vm944, %v1083, %v1087
      %v1090 = vshrl.u32 %v900, 16
      %v1092 = vshll.u32 %v900, 16
      %v1094 = vrot.slane %v1092, 1
      %v1095 = vor.u32 %v1090, %v1094
      %v1097 = vshll.u32 %v901, 16
      %v1099 = vrot.slane %v1097, 1
      %v1100 = vsel %vm944, %v1095, %v1099
      %v1102 = vshrl.u32 %v902, 16
      %v1104 = vshll.u32 %v902, 16
      %v1106 = vrot.slane %v1104, 1
      %v1107 = vor.u32 %v1102, %v1106
      %v1109 = vshll.u32 %v903, 16
      %v1111 = vrot.slane %v1109, 1
      %v1112 = vsel %vm944, %v1107, %v1111
      %v1114 = vshrl.u32 %v904, 16
      %v1116 = vshll.u32 %v904, 16
      %v1118 = vrot.slane %v1116, 1
      %v1119 = vor.u32 %v1114, %v1118
      %v1121 = vshll.u32 %v905, 16
      %v1123 = vrot.slane %v1121, 1
      %v1124 = vsel %vm944, %v1119, %v1123
      %v1126 = vshrl.u32 %v906, 16
      %v1128 = vshll.u32 %v906, 16
      %v1130 = vrot.slane %v1128, 1
      %v1131 = vor.u32 %v1126, %v1130
      %v1133 = vshll.u32 %v907, 16
      %v1135 = vrot.slane %v1133, 1
      %v1136 = vsel %vm944, %v1131, %v1135
      %vm1185 = vcmask 1046528
      %v1186 = vrot.slane %v876, 1
      %v1187 = vrot.slane %v877, 1
      %v1188 = vsel %vm1185, %v1186, %v1187
      %v1189 = vrot.slane %v878, 1
      %v1190 = vrot.slane %v879, 1
      %v1191 = vsel %vm1185, %v1189, %v1190
      %v1192 = vrot.slane %v880, 1
      %v1193 = vrot.slane %v881, 1
      %v1194 = vsel %vm1185, %v1192, %v1193
      %v1195 = vrot.slane %v882, 1
      %v1196 = vrot.slane %v883, 1
      %v1197 = vsel %vm1185, %v1195, %v1196
      %v1198 = vrot.slane %v884, 1
      %v1199 = vrot.slane %v885, 1
      %v1200 = vsel %vm1185, %v1198, %v1199
      %v1201 = vrot.slane %v886, 1
      %v1202 = vrot.slane %v887, 1
      %v1203 = vsel %vm1185, %v1201, %v1202
      %v1204 = vrot.slane %v888, 1
      %v1205 = vrot.slane %v889, 1
      %v1206 = vsel %vm1185, %v1204, %v1205
      %v1207 = vrot.slane %v890, 1
      %v1208 = vrot.slane %v891, 1
      %v1209 = vsel %vm1185, %v1207, %v1208
      %v1210 = vrot.slane %v892, 1
      %v1211 = vrot.slane %v893, 1
      %v1212 = vsel %vm1185, %v1210, %v1211
      %v1213 = vrot.slane %v894, 1
      %v1214 = vrot.slane %v895, 1
      %v1215 = vsel %vm1185, %v1213, %v1214
      %v1216 = vrot.slane %v896, 1
      %v1217 = vrot.slane %v897, 1
      %v1218 = vsel %vm1185, %v1216, %v1217
      %v1219 = vrot.slane %v898, 1
      %v1220 = vrot.slane %v899, 1
      %v1221 = vsel %vm1185, %v1219, %v1220
      %v1222 = vrot.slane %v900, 1
      %v1223 = vrot.slane %v901, 1
      %v1224 = vsel %vm1185, %v1222, %v1223
      %v1225 = vrot.slane %v902, 1
      %v1226 = vrot.slane %v903, 1
      %v1227 = vsel %vm1185, %v1225, %v1226
      %v1228 = vrot.slane %v904, 1
      %v1229 = vrot.slane %v905, 1
      %v1230 = vsel %vm1185, %v1228, %v1229
      %v1231 = vrot.slane %v906, 1
      %v1232 = vrot.slane %v907, 1
      %v1233 = vsel %vm1185, %v1231, %v1232
      %v1250 = vld [vmem:[#allocation2] sm:$0xff]
      %v1251 = vld [vmem:[#allocation2 + $0x8] sm:$0xff]
      %v1252 = vld [vmem:[#allocation2 + $0x10] sm:$0xff]
      %v1253 = vld [vmem:[#allocation2 + $0x18] sm:$0xff]
      %v1254 = vld [vmem:[#allocation2 + $0x20] sm:$0xff]
      %v1255 = vld [vmem:[#allocation2 + $0x28] sm:$0xff]
      %v1256 = vld [vmem:[#allocation2 + $0x30] sm:$0xff]
      %v1257 = vld [vmem:[#allocation2 + $0x38] sm:$0xff]
      %v1258 = vld [vmem:[#allocation2 + $0x40] sm:$0xff]
      %v1259 = vld [vmem:[#allocation2 + $0x48] sm:$0xff]
      %v1260 = vld [vmem:[#allocation2 + $0x50] sm:$0xff]
      %v1261 = vld [vmem:[#allocation2 + $0x58] sm:$0xff]
      %v1262 = vld [vmem:[#allocation2 + $0x60] sm:$0xff]
      %v1263 = vld [vmem:[#allocation2 + $0x68] sm:$0xff]
      %v1264 = vld [vmem:[#allocation2 + $0x70] sm:$0xff]
      %v1265 = vld [vmem:[#allocation2 + $0x78] sm:$0xff]
      %v1266 = vld [vmem:[#allocation2 + $0x80] sm:$0xff]
      %v1267 = vld [vmem:[#allocation2 + $0x88] sm:$0xff]
      %v1268 = vld [vmem:[#allocation2 + $0x90] sm:$0xff]
      %v1269 = vld [vmem:[#allocation2 + $0x98] sm:$0xff]
      %v1270 = vld [vmem:[#allocation2 + $0xa0] sm:$0xff]
      %v1271 = vld [vmem:[#allocation2 + $0xa8] sm:$0xff]
      %v1272 = vld [vmem:[#allocation2 + $0xb0] sm:$0xff]
      %v1273 = vld [vmem:[#allocation2 + $0xb8] sm:$0xff]
      %v1274 = vld [vmem:[#allocation2 + $0xc0] sm:$0xff]
      %v1275 = vld [vmem:[#allocation2 + $0xc8] sm:$0xff]
      %v1276 = vld [vmem:[#allocation2 + $0xd0] sm:$0xff]
      %v1277 = vld [vmem:[#allocation2 + $0xd8] sm:$0xff]
      %v1278 = vld [vmem:[#allocation2 + $0xe0] sm:$0xff]
      %v1279 = vld [vmem:[#allocation2 + $0xe8] sm:$0xff]
      %v1280 = vld [vmem:[#allocation2 + $0xf0] sm:$0xff]
      %v1281 = vld [vmem:[#allocation2 + $0xf8] sm:$0xff]
      %v1282 = vld [vmem:[%s3] sm:$0xf]
      %v1283 = vld [vmem:[%s3 + $0x4] sm:$0xf]
      %v1284 = vld [vmem:[%s3 + $0x8] sm:$0xf]
      %v1285 = vld [vmem:[%s3 + $0xc] sm:$0xf]
      %v1286 = vld [vmem:[%s3 + $0x10] sm:$0xf]
      %v1287 = vld [vmem:[%s3 + $0x14] sm:$0xf]
      %v1288 = vld [vmem:[%s3 + $0x18] sm:$0xf]
      %v1289 = vld [vmem:[%s3 + $0x1c] sm:$0xf]
      %v1290 = vld [vmem:[%s3 + $0x20] sm:$0xf]
      %v1291 = vld [vmem:[%s3 + $0x24] sm:$0xf]
      %v1292 = vld [vmem:[%s3 + $0x28] sm:$0xf]
      %v1293 = vld [vmem:[%s3 + $0x2c] sm:$0xf]
      %v1294 = vld [vmem:[%s3 + $0x30] sm:$0xf]
      %v1295 = vld [vmem:[%s3 + $0x34] sm:$0xf]
      %v1296 = vld [vmem:[%s3 + $0x38] sm:$0xf]
      %v1297 = vld [vmem:[%s3 + $0x3c] sm:$0xf]
      %v1298 = vld [vmem:[%s3 + $0x40] sm:$0xf]
      %v1299 = vld [vmem:[%s3 + $0x44] sm:$0xf]
      %v1300 = vld [vmem:[%s3 + $0x48] sm:$0xf]
      %v1301 = vld [vmem:[%s3 + $0x4c] sm:$0xf]
      %v1302 = vld [vmem:[%s3 + $0x50] sm:$0xf]
      %v1303 = vld [vmem:[%s3 + $0x54] sm:$0xf]
      %v1304 = vld [vmem:[%s3 + $0x58] sm:$0xf]
      %v1305 = vld [vmem:[%s3 + $0x5c] sm:$0xf]
      %v1306 = vld [vmem:[%s3 + $0x60] sm:$0xf]
      %v1307 = vld [vmem:[%s3 + $0x64] sm:$0xf]
      %v1308 = vld [vmem:[%s3 + $0x68] sm:$0xf]
      %v1309 = vld [vmem:[%s3 + $0x6c] sm:$0xf]
      %v1310 = vld [vmem:[%s3 + $0x70] sm:$0xf]
      %v1311 = vld [vmem:[%s3 + $0x74] sm:$0xf]
      %v1312 = vld [vmem:[%s3 + $0x78] sm:$0xf]
      %v1313 = vld [vmem:[%s3 + $0x7c] sm:$0xf]
      %v1314 = vld [vmem:[%s3 + $0x80] sm:$0xf]
      %v1315 = vld [vmem:[%s3 + $0x84] sm:$0xf]
      %v1316 = vld [vmem:[%s3 + $0x88] sm:$0xf]
      %v1317 = vld [vmem:[%s3 + $0x8c] sm:$0xf]
      %v1318 = vld [vmem:[%s3 + $0x90] sm:$0xf]
      %v1319 = vld [vmem:[%s3 + $0x94] sm:$0xf]
      %v1320 = vld [vmem:[%s3 + $0x98] sm:$0xf]
      %v1321 = vld [vmem:[%s3 + $0x9c] sm:$0xf]
      %v1322 = vld [vmem:[%s3 + $0xa0] sm:$0xf]
      %v1323 = vld [vmem:[%s3 + $0xa4] sm:$0xf]
      %v1324 = vld [vmem:[%s3 + $0xa8] sm:$0xf]
      %v1325 = vld [vmem:[%s3 + $0xac] sm:$0xf]
      %v1326 = vld [vmem:[%s3 + $0xb0] sm:$0xf]
      %v1327 = vld [vmem:[%s3 + $0xb4] sm:$0xf]
      %v1328 = vld [vmem:[%s3 + $0xb8] sm:$0xf]
      %v1329 = vld [vmem:[%s3 + $0xbc] sm:$0xf]
      %v1378 = vunpack.c.l.b16 %v1282
      %v1379 = vunpack.c.l.b16 %v1283
      %v1380 = vunpack.c.l.b16 %v1284
      %v1381 = vunpack.c.l.b16 %v1285
      %v1382 = vunpack.c.l.b16 %v1286
      %v1383 = vunpack.c.l.b16 %v1287
      %v1384 = vunpack.c.l.b16 %v1288
      %v1385 = vunpack.c.l.b16 %v1289
      %v1386 = vunpack.c.l.b16 %v1290
      %v1387 = vunpack.c.l.b16 %v1291
      %v1388 = vunpack.c.l.b16 %v1292
      %v1389 = vunpack.c.l.b16 %v1293
      %v1390 = vunpack.c.l.b16 %v1294
      %v1391 = vunpack.c.l.b16 %v1295
      %v1392 = vunpack.c.l.b16 %v1296
      %v1393 = vunpack.c.l.b16 %v1297
      %v1394 = vunpack.c.l.b16 %v1298
      %v1395 = vunpack.c.l.b16 %v1299
      %v1396 = vunpack.c.l.b16 %v1300
      %v1397 = vunpack.c.l.b16 %v1301
      %v1398 = vunpack.c.l.b16 %v1302
      %v1399 = vunpack.c.l.b16 %v1303
      %v1400 = vunpack.c.l.b16 %v1304
      %v1401 = vunpack.c.l.b16 %v1305
      %v1402 = vunpack.c.l.b16 %v1306
      %v1403 = vunpack.c.l.b16 %v1307
      %v1404 = vunpack.c.l.b16 %v1308
      %v1405 = vunpack.c.l.b16 %v1309
      %v1406 = vunpack.c.l.b16 %v1310
      %v1407 = vunpack.c.l.b16 %v1311
      %v1408 = vunpack.c.l.b16 %v1312
      %v1409 = vunpack.c.l.b16 %v1313
      %v1410 = vunpack.c.l.b16 %v1314
      %v1411 = vunpack.c.l.b16 %v1315
      %v1412 = vunpack.c.l.b16 %v1316
      %v1413 = vunpack.c.l.b16 %v1317
      %v1414 = vunpack.c.l.b16 %v1318
      %v1415 = vunpack.c.l.b16 %v1319
      %v1416 = vunpack.c.l.b16 %v1320
      %v1417 = vunpack.c.l.b16 %v1321
      %v1418 = vunpack.c.l.b16 %v1322
      %v1419 = vunpack.c.l.b16 %v1323
      %v1420 = vunpack.c.l.b16 %v1324
      %v1421 = vunpack.c.l.b16 %v1325
      %v1422 = vunpack.c.l.b16 %v1326
      %v1423 = vunpack.c.l.b16 %v1327
      %v1424 = vunpack.c.l.b16 %v1328
      %v1425 = vunpack.c.l.b16 %v1329
      %v1426 = vpack.c.b16 %v1379, %v1378
      %v1427 = vpack.c.b16 %v1381, %v1380
      %v1428 = vpack.c.b16 %v1383, %v1382
      %v1429 = vpack.c.b16 %v1385, %v1384
      %v1430 = vpack.c.b16 %v1387, %v1386
      %v1431 = vpack.c.b16 %v1389, %v1388
      %v1432 = vpack.c.b16 %v1391, %v1390
      %v1433 = vpack.c.b16 %v1393, %v1392
      %v1434 = vpack.c.b16 %v1395, %v1394
      %v1435 = vpack.c.b16 %v1397, %v1396
      %v1436 = vpack.c.b16 %v1399, %v1398
      %v1437 = vpack.c.b16 %v1401, %v1400
      %v1438 = vpack.c.b16 %v1403, %v1402
      %v1439 = vpack.c.b16 %v1405, %v1404
      %v1440 = vpack.c.b16 %v1407, %v1406
      %v1441 = vpack.c.b16 %v1409, %v1408
      %v1442 = vpack.c.b16 %v1411, %v1410
      %v1443 = vpack.c.b16 %v1413, %v1412
      %v1444 = vpack.c.b16 %v1415, %v1414
      %v1445 = vpack.c.b16 %v1417, %v1416
      %v1446 = vpack.c.b16 %v1419, %v1418
      %v1447 = vpack.c.b16 %v1421, %v1420
      %v1448 = vpack.c.b16 %v1423, %v1422
      %v1449 = vpack.c.b16 %v1425, %v1424
      %1474 = vmatprep.subr.bf16.mxu0 0
      %1475 = vmatpush1.bf16.msra.mxu0 %v1426
      %1476 = vmatprep.subr.bf16.mxu0 0
      %1477 = vmatpush1.bf16.msra.mxu0 %v1427
      %1478 = vmatprep.subr.bf16.mxu0 0
      %1479 = vmatpush1.bf16.msra.mxu0 %v1428
      %1480 = vmatprep.subr.bf16.mxu0 0
      %1481 = vmatpush1.bf16.msra.mxu0 %v1429
      %1482 = vmatprep.subr.bf16.mxu0 0
      %1483 = vmatpush1.bf16.msra.mxu0 %v1430
      %1484 = vmatprep.subr.bf16.mxu0 0
      %1485 = vmatpush1.bf16.msra.mxu0 %v1431
      %1486 = vmatprep.subr.bf16.mxu0 0
      %1487 = vmatpush1.bf16.msra.mxu0 %v1432
      %1488 = vmatprep.subr.bf16.mxu0 0
      %1489 = vmatpush1.bf16.msra.mxu0 %v1433
      %1490 = vmatprep.subr.bf16.mxu0 0
      %1491 = vmatpush1.bf16.msra.mxu0 %v1434
      %1492 = vmatprep.subr.bf16.mxu0 0
      %1493 = vmatpush1.bf16.msra.mxu0 %v1435
      %1494 = vmatprep.subr.bf16.mxu0 0
      %1495 = vmatpush1.bf16.msra.mxu0 %v1436
      %1496 = vmatprep.subr.bf16.mxu0 0
      %1497 = vmatpush1.bf16.msra.mxu0 %v1437
      %1498 = vmatprep.subr.bf16.mxu0 0
      %1499 = vmatpush1.bf16.msra.mxu0 %v1438
      %1500 = vmatprep.subr.bf16.mxu0 0
      %1501 = vmatpush1.bf16.msra.mxu0 %v1439
      %1502 = vmatprep.subr.bf16.mxu0 0
      %1503 = vmatpush1.bf16.msra.mxu0 %v1440
      %1504 = vmatprep.subr.bf16.mxu0 0
      %1505 = vmatpush1.bf16.msra.mxu0 %v1441
      %1506 = vmatprep.mubr.bf16.mxu0 %v956
      %1507 = vmatmul.mubr.bf16.gmra.mrb[0].mxu0 %v876
      %v1508 = vpop.f32.mrb[0].mxu0
      %v1509 = vadd.f32 0.0, %v1508
      %v1510 = vpop.f32.mrb[0].mxu0
      %v1511 = vpop.f32.mrb[0].mxu0
      %v1512 = vadd.f32 0.0, %v1511
      %v1513 = vpop.f32.mrb[0].mxu0
      %1514 = vmatprep.mubr.bf16.mxu0 %v968
      %1515 = vmatmul.mubr.bf16.gmra.mrb[0].mxu0 %v878
      %v1516 = vpop.f32.mrb[0].mxu0
      %v1517 = vadd.f32 0.0, %v1516
      %v1518 = vpop.f32.mrb[0].mxu0
      %v1519 = vpop.f32.mrb[0].mxu0
      %v1520 = vadd.f32 0.0, %v1519
      %v1521 = vpop.f32.mrb[0].mxu0
      %1522 = vmatprep.mubr.bf16.mxu0 %v980
      %1523 = vmatmul.mubr.bf16.gmra.mrb[0].mxu0 %v880
      %v1524 = vpop.f32.mrb[0].mxu0
      %v1525 = vadd.f32 0.0, %v1524
      %v1526 = vpop.f32.mrb[0].mxu0
      %v1527 = vpop.f32.mrb[0].mxu0
      %v1528 = vadd.f32 0.0, %v1527
      %v1529 = vpop.f32.mrb[0].mxu0
      %1530 = vmatprep.mubr.bf16.mxu0 %v992
      %1531 = vmatmul.mubr.bf16.gmra.mrb[0].mxu0 %v882
      %v1532 = vpop.f32.mrb[0].mxu0
      %v1533 = vadd.f32 0.0, %v1532
      %v1534 = vpop.f32.mrb[0].mxu0
      %v1535 = vpop.f32.mrb[0].mxu0
      %v1536 = vadd.f32 0.0, %v1535
      %v1537 = vpop.f32.mrb[0].mxu0
      %1538 = vmatprep.mubr.bf16.mxu0 %v1004
      %1539 = vmatmul.mubr.bf16.gmra.mrb[0].mxu0 %v884
      %v1540 = vpop.f32.mrb[0].mxu0
      %v1541 = vadd.f32 0.0, %v1540
      %v1542 = vpop.f32.mrb[0].mxu0
      %v1543 = vpop.f32.mrb[0].mxu0
      %v1544 = vadd.f32 0.0, %v1543
      %v1545 = vpop.f32.mrb[0].mxu0
      %1546 = vmatprep.mubr.bf16.mxu0 %v1016
      %1547 = vmatmul.mubr.bf16.gmra.mrb[0].mxu0 %v886
      %v1548 = vpop.f32.mrb[0].mxu0
      %v1549 = vadd.f32 0.0, %v1548
      %v1550 = vpop.f32.mrb[0].mxu0
      %v1551 = vpop.f32.mrb[0].mxu0
      %v1552 = vadd.f32 0.0, %v1551
      %v1553 = vpop.f32.mrb[0].mxu0
      %1554 = vmatprep.mubr.bf16.mxu0 %v1028
      %1555 = vmatmul.mubr.bf16.gmra.mrb[0].mxu0 %v888
      %v1556 = vpop.f32.mrb[0].mxu0
      %v1557 = vadd.f32 0.0, %v1556
      %v1558 = vpop.f32.mrb[0].mxu0
      %v1559 = vpop.f32.mrb[0].mxu0
      %v1560 = vadd.f32 0.0, %v1559
      %v1561 = vpop.f32.mrb[0].mxu0
      %1562 = vmatprep.mubr.bf16.mxu0 %v1040
      %1563 = vmatmul.mubr.bf16.gmra.mrb[0].mxu0 %v890
      %v1564 = vpop.f32.mrb[0].mxu0
      %v1565 = vadd.f32 0.0, %v1564
      %v1566 = vpop.f32.mrb[0].mxu0
      %v1567 = vpop.f32.mrb[0].mxu0
      %v1568 = vadd.f32 0.0, %v1567
      %v1569 = vpop.f32.mrb[0].mxu0
      %1570 = vmatprep.mubr.bf16.mxu0 %v1052
      %1571 = vmatmul.mubr.bf16.gmra.mrb[0].mxu0 %v892
      %v1572 = vpop.f32.mrb[0].mxu0
      %v1573 = vadd.f32 0.0, %v1572
      %v1574 = vpop.f32.mrb[0].mxu0
      %v1575 = vpop.f32.mrb[0].mxu0
      %v1576 = vadd.f32 0.0, %v1575
      %v1577 = vpop.f32.mrb[0].mxu0
      %1578 = vmatprep.mubr.bf16.mxu0 %v1064
      %1579 = vmatmul.mubr.bf16.gmra.mrb[0].mxu0 %v894
      %v1580 = vpop.f32.mrb[0].mxu0
      %v1581 = vadd.f32 0.0, %v1580
      %v1582 = vpop.f32.mrb[0].mxu0
      %v1583 = vpop.f32.mrb[0].mxu0
      %v1584 = vadd.f32 0.0, %v1583
      %v1585 = vpop.f32.mrb[0].mxu0
      %1586 = vmatprep.mubr.bf16.mxu0 %v1076
      %1587 = vmatmul.mubr.bf16.gmra.mrb[0].mxu0 %v896
      %v1588 = vpop.f32.mrb[0].mxu0
      %v1589 = vadd.f32 0.0, %v1588
      %v1590 = vpop.f32.mrb[0].mxu0
      %v1591 = vpop.f32.mrb[0].mxu0
      %v1592 = vadd.f32 0.0, %v1591
      %v1593 = vpop.f32.mrb[0].mxu0
      %1594 = vmatprep.mubr.bf16.mxu0 %v1088
      %1595 = vmatmul.mubr.bf16.gmra.mrb[0].mxu0 %v898
      %v1596 = vpop.f32.mrb[0].mxu0
      %v1597 = vadd.f32 0.0, %v1596
      %v1598 = vpop.f32.mrb[0].mxu0
      %v1599 = vpop.f32.mrb[0].mxu0
      %v1600 = vadd.f32 0.0, %v1599
      %v1601 = vpop.f32.mrb[0].mxu0
      %1602 = vmatprep.mubr.bf16.mxu0 %v1100
      %1603 = vmatmul.mubr.bf16.gmra.mrb[0].mxu0 %v900
      %v1604 = vpop.f32.mrb[0].mxu0
      %v1605 = vadd.f32 0.0, %v1604
      %v1606 = vpop.f32.mrb[0].mxu0
      %v1607 = vpop.f32.mrb[0].mxu0
      %v1608 = vadd.f32 0.0, %v1607
      %v1609 = vpop.f32.mrb[0].mxu0
      %1610 = vmatprep.mubr.bf16.mxu0 %v1112
      %1611 = vmatmul.mubr.bf16.gmra.mrb[0].mxu0 %v902
      %v1612 = vpop.f32.mrb[0].mxu0
      %v1613 = vadd.f32 0.0, %v1612
      %v1614 = vpop.f32.mrb[0].mxu0
      %v1615 = vpop.f32.mrb[0].mxu0
      %v1616 = vadd.f32 0.0, %v1615
      %v1617 = vpop.f32.mrb[0].mxu0
      %1618 = vmatprep.mubr.bf16.mxu0 %v1124
      %1619 = vmatmul.mubr.bf16.gmra.mrb[0].mxu0 %v904
      %v1620 = vpop.f32.mrb[0].mxu0
      %v1621 = vadd.f32 0.0, %v1620
      %v1622 = vpop.f32.mrb[0].mxu0
      %v1623 = vpop.f32.mrb[0].mxu0
      %v1624 = vadd.f32 0.0, %v1623
      %v1625 = vpop.f32.mrb[0].mxu0
      %1626 = vmatprep.mubr.bf16.mxu0 %v1136
      %1627 = vmatmul.mubr.bf16.gmra.mrb[0].mxu0 %v906
      %v1628 = vpop.f32.mrb[0].mxu0
      %v1629 = vadd.f32 0.0, %v1628
      %v1630 = vpop.f32.mrb[0].mxu0
      %v1631 = vpop.f32.mrb[0].mxu0
      %v1632 = vadd.f32 0.0, %v1631
      %v1633 = vpop.f32.mrb[0].mxu0
      %1634 = vdwg.mxu0
      %1635 = vmatprep.subr.bf16.mxu0 0
      %1636 = vmatpush1.bf16.msra.mxu0 %v1442
      %1637 = vmatprep.subr.bf16.mxu0 0
      %1638 = vmatpush1.bf16.msra.mxu0 %v1443
      %1639 = vmatprep.subr.bf16.mxu0 0
      %1640 = vmatpush1.bf16.msra.mxu0 %v1444
      %1641 = vmatprep.subr.bf16.mxu0 0
      %1642 = vmatpush1.bf16.msra.mxu0 %v1445
      %1643 = vmatprep.subr.bf16.mxu0 0
      %1644 = vmatpush1.bf16.msra.mxu0 %v1446
      %1645 = vmatprep.subr.bf16.mxu0 0
      %1646 = vmatpush1.bf16.msra.mxu0 %v1447
      %1647 = vmatprep.subr.bf16.mxu0 0
      %1648 = vmatpush1.bf16.msra.mxu0 %v1448
      %1649 = vmatprep.subr.bf16.mxu0 0
      %1650 = vmatpush1.bf16.msra.mxu0 %v1449
      %1651 = vmatprep.subr.bf16.mxu0 0
      %1652 = vmatpush1.bf16.msra.mxu0 0
      %1653 = vmatprep.subr.bf16.mxu0 0
      %1654 = vmatpush1.bf16.msra.mxu0 0
      %1655 = vmatprep.subr.bf16.mxu0 0
      %1656 = vmatpush1.bf16.msra.mxu0 0
      %1657 = vmatprep.subr.bf16.mxu0 0
      %1658 = vmatpush1.bf16.msra.mxu0 0
      %1659 = vmatprep.subr.bf16.mxu0 0
      %1660 = vmatpush1.bf16.msra.mxu0 0
      %1661 = vmatprep.subr.bf16.mxu0 0
      %1662 = vmatpush1.bf16.msra.mxu0 0
      %1663 = vmatprep.subr.bf16.mxu0 0
      %1664 = vmatpush1.bf16.msra.mxu0 0
      %1665 = vmatprep.subr.bf16.mxu0 0
      %1666 = vmatpush1.bf16.msra.mxu0 0
      %1667 = vmatprep.mubr.bf16.mxu0 0
      %1668 = vmatmul.mubr.bf16.gmra.mrb[0].mxu0 %v1188
      %v1669 = vpop.f32.mrb[0].mxu0
      %v1670 = vadd.f32 %v1509, %v1669
      %v1671 = vpop.f32.mrb[0].mxu0
      %v1672 = vpop.f32.mrb[0].mxu0
      %v1673 = vadd.f32 %v1512, %v1672
      %v1674 = vpop.f32.mrb[0].mxu0
      %1675 = vmatprep.mubr.bf16.mxu0 0
      %1676 = vmatmul.mubr.bf16.gmra.mrb[0].mxu0 %v1191
      %v1677 = vpop.f32.mrb[0].mxu0
      %v1678 = vadd.f32 %v1517, %v1677
      %v1679 = vpop.f32.mrb[0].mxu0
      %v1680 = vpop.f32.mrb[0].mxu0
      %v1681 = vadd.f32 %v1520, %v1680
      %v1682 = vpop.f32.mrb[0].mxu0
      %1683 = vmatprep.mubr.bf16.mxu0 0
      %1684 = vmatmul.mubr.bf16.gmra.mrb[0].mxu0 %v1194
      %v1685 = vpop.f32.mrb[0].mxu0
      %v1686 = vadd.f32 %v1525, %v1685
      %v1687 = vpop.f32.mrb[0].mxu0
      %v1688 = vpop.f32.mrb[0].mxu0
      %v1689 = vadd.f32 %v1528, %v1688
      %v1690 = vpop.f32.mrb[0].mxu0
      %1691 = vmatprep.mubr.bf16.mxu0 0
      %1692 = vmatmul.mubr.bf16.gmra.mrb[0].mxu0 %v1197
      %v1693 = vpop.f32.mrb[0].mxu0
      %v1694 = vadd.f32 %v1533, %v1693
      %v1695 = vpop.f32.mrb[0].mxu0
      %v1696 = vpop.f32.mrb[0].mxu0
      %v1697 = vadd.f32 %v1536, %v1696
      %v1698 = vpop.f32.mrb[0].mxu0
      %1699 = vmatprep.mubr.bf16.mxu0 0
      %1700 = vmatmul.mubr.bf16.gmra.mrb[0].mxu0 %v1200
      %v1701 = vpop.f32.mrb[0].mxu0
      %v1702 = vadd.f32 %v1541, %v1701
      %v1703 = vpop.f32.mrb[0].mxu0
      %v1704 = vpop.f32.mrb[0].mxu0
      %v1705 = vadd.f32 %v1544, %v1704
      %v1706 = vpop.f32.mrb[0].mxu0
      %1707 = vmatprep.mubr.bf16.mxu0 0
      %1708 = vmatmul.mubr.bf16.gmra.mrb[0].mxu0 %v1203
      %v1709 = vpop.f32.mrb[0].mxu0
      %v1710 = vadd.f32 %v1549, %v1709
      %v1711 = vpop.f32.mrb[0].mxu0
      %v1712 = vpop.f32.mrb[0].mxu0
      %v1713 = vadd.f32 %v1552, %v1712
      %v1714 = vpop.f32.mrb[0].mxu0
      %1715 = vmatprep.mubr.bf16.mxu0 0
      %1716 = vmatmul.mubr.bf16.gmra.mrb[0].mxu0 %v1206
      %v1717 = vpop.f32.mrb[0].mxu0
      %v1718 = vadd.f32 %v1557, %v1717
      %v1719 = vpop.f32.mrb[0].mxu0
      %v1720 = vpop.f32.mrb[0].mxu0
      %v1721 = vadd.f32 %v1560, %v1720
      %v1722 = vpop.f32.mrb[0].mxu0
      %1723 = vmatprep.mubr.bf16.mxu0 0
      %1724 = vmatmul.mubr.bf16.gmra.mrb[0].mxu0 %v1209
      %v1725 = vpop.f32.mrb[0].mxu0
      %v1726 = vadd.f32 %v1565, %v1725
      %v1727 = vpop.f32.mrb[0].mxu0
      %v1728 = vpop.f32.mrb[0].mxu0
      %v1729 = vadd.f32 %v1568, %v1728
      %v1730 = vpop.f32.mrb[0].mxu0
      %1731 = vmatprep.mubr.bf16.mxu0 0
      %1732 = vmatmul.mubr.bf16.gmra.mrb[0].mxu0 %v1212
      %v1733 = vpop.f32.mrb[0].mxu0
      %v1734 = vadd.f32 %v1573, %v1733
      %v1735 = vpop.f32.mrb[0].mxu0
      %v1736 = vpop.f32.mrb[0].mxu0
      %v1737 = vadd.f32 %v1576, %v1736
      %v1738 = vpop.f32.mrb[0].mxu0
      %1739 = vmatprep.mubr.bf16.mxu0 0
      %1740 = vmatmul.mubr.bf16.gmra.mrb[0].mxu0 %v1215
      %v1741 = vpop.f32.mrb[0].mxu0
      %v1742 = vadd.f32 %v1581, %v1741
      %v1743 = vpop.f32.mrb[0].mxu0
      %v1744 = vpop.f32.mrb[0].mxu0
      %v1745 = vadd.f32 %v1584, %v1744
      %v1746 = vpop.f32.mrb[0].mxu0
      %1747 = vmatprep.mubr.bf16.mxu0 0
      %1748 = vmatmul.mubr.bf16.gmra.mrb[0].mxu0 %v1218
      %v1749 = vpop.f32.mrb[0].mxu0
      %v1750 = vadd.f32 %v1589, %v1749
      %v1751 = vpop.f32.mrb[0].mxu0
      %v1752 = vpop.f32.mrb[0].mxu0
      %v1753 = vadd.f32 %v1592, %v1752
      %v1754 = vpop.f32.mrb[0].mxu0
      %1755 = vmatprep.mubr.bf16.mxu0 0
      %1756 = vmatmul.mubr.bf16.gmra.mrb[0].mxu0 %v1221
      %v1757 = vpop.f32.mrb[0].mxu0
      %v1758 = vadd.f32 %v1597, %v1757
      %v1759 = vpop.f32.mrb[0].mxu0
      %v1760 = vpop.f32.mrb[0].mxu0
      %v1761 = vadd.f32 %v1600, %v1760
      %v1762 = vpop.f32.mrb[0].mxu0
      %1763 = vmatprep.mubr.bf16.mxu0 0
      %1764 = vmatmul.mubr.bf16.gmra.mrb[0].mxu0 %v1224
      %v1765 = vpop.f32.mrb[0].mxu0
      %v1766 = vadd.f32 %v1605, %v1765
      %v1767 = vpop.f32.mrb[0].mxu0
      %v1768 = vpop.f32.mrb[0].mxu0
      %v1769 = vadd.f32 %v1608, %v1768
      %v1770 = vpop.f32.mrb[0].mxu0
      %1771 = vmatprep.mubr.bf16.mxu0 0
      %1772 = vmatmul.mubr.bf16.gmra.mrb[0].mxu0 %v1227
      %v1773 = vpop.f32.mrb[0].mxu0
      %v1774 = vadd.f32 %v1613, %v1773
      %v1775 = vpop.f32.mrb[0].mxu0
      %v1776 = vpop.f32.mrb[0].mxu0
      %v1777 = vadd.f32 %v1616, %v1776
      %v1778 = vpop.f32.mrb[0].mxu0
      %1779 = vmatprep.mubr.bf16.mxu0 0
      %1780 = vmatmul.mubr.bf16.gmra.mrb[0].mxu0 %v1230
      %v1781 = vpop.f32.mrb[0].mxu0
      %v1782 = vadd.f32 %v1621, %v1781
      %v1783 = vpop.f32.mrb[0].mxu0
      %v1784 = vpop.f32.mrb[0].mxu0
      %v1785 = vadd.f32 %v1624, %v1784
      %v1786 = vpop.f32.mrb[0].mxu0
      %1787 = vmatprep.mubr.bf16.mxu0 0
      %1788 = vmatmul.mubr.bf16.gmra.mrb[0].mxu0 %v1233
      %v1789 = vpop.f32.mrb[0].mxu0
      %v1790 = vadd.f32 %v1629, %v1789
      %v1791 = vpop.f32.mrb[0].mxu0
      %v1792 = vpop.f32.mrb[0].mxu0
      %v1793 = vadd.f32 %v1632, %v1792
      %v1794 = vpop.f32.mrb[0].mxu0
      %1795 = vdwg.mxu0
      %v1796 = vadd.f32 %v1250, %v1670
      %v1797 = vadd.f32 %v1251, %v1673
      %v1798 = vadd.f32 %v1252, %v1678
      %v1799 = vadd.f32 %v1253, %v1681
      %v1800 = vadd.f32 %v1254, %v1686
      %v1801 = vadd.f32 %v1255, %v1689
      %v1802 = vadd.f32 %v1256, %v1694
      %v1803 = vadd.f32 %v1257, %v1697
      %v1804 = vadd.f32 %v1258, %v1702
      %v1805 = vadd.f32 %v1259, %v1705
      %v1806 = vadd.f32 %v1260, %v1710
      %v1807 = vadd.f32 %v1261, %v1713
      %v1808 = vadd.f32 %v1262, %v1718
      %v1809 = vadd.f32 %v1263, %v1721
      %v1810 = vadd.f32 %v1264, %v1726
      %v1811 = vadd.f32 %v1265, %v1729
      %v1812 = vadd.f32 %v1266, %v1734
      %v1813 = vadd.f32 %v1267, %v1737
      %v1814 = vadd.f32 %v1268, %v1742
      %v1815 = vadd.f32 %v1269, %v1745
      %v1816 = vadd.f32 %v1270, %v1750
      %v1817 = vadd.f32 %v1271, %v1753
      %v1818 = vadd.f32 %v1272, %v1758
      %v1819 = vadd.f32 %v1273, %v1761
      %v1820 = vadd.f32 %v1274, %v1766
      %v1821 = vadd.f32 %v1275, %v1769
      %v1822 = vadd.f32 %v1276, %v1774
      %v1823 = vadd.f32 %v1277, %v1777
      %v1824 = vadd.f32 %v1278, %v1782
      %v1825 = vadd.f32 %v1279, %v1785
      %v1826 = vadd.f32 %v1280, %v1790
      %v1827 = vadd.f32 %v1281, %v1793
      %1828 = vst [vmem:[#allocation2] sm:$0xff] %v1796
      %1829 = vst [vmem:[#allocation2 + $0x8] sm:$0xff] %v1797
      %1830 = vst [vmem:[#allocation2 + $0x10] sm:$0xff] %v1798
      %1831 = vst [vmem:[#allocation2 + $0x18] sm:$0xff] %v1799
      %1832 = vst [vmem:[#allocation2 + $0x20] sm:$0xff] %v1800
      %1833 = vst [vmem:[#allocation2 + $0x28] sm:$0xff] %v1801
      %1834 = vst [vmem:[#allocation2 + $0x30] sm:$0xff] %v1802
      %1835 = vst [vmem:[#allocation2 + $0x38] sm:$0xff] %v1803
      %1836 = vst [vmem:[#allocation2 + $0x40] sm:$0xff] %v1804
      %1837 = vst [vmem:[#allocation2 + $0x48] sm:$0xff] %v1805
      %1838 = vst [vmem:[#allocation2 + $0x50] sm:$0xff] %v1806
      %1839 = vst [vmem:[#allocation2 + $0x58] sm:$0xff] %v1807
      %1840 = vst [vmem:[#allocation2 + $0x60] sm:$0xff] %v1808
      %1841 = vst [vmem:[#allocation2 + $0x68] sm:$0xff] %v1809
      %1842 = vst [vmem:[#allocation2 + $0x70] sm:$0xff] %v1810
      %1843 = vst [vmem:[#allocation2 + $0x78] sm:$0xff] %v1811
      %1844 = vst [vmem:[#allocation2 + $0x80] sm:$0xff] %v1812
      %1845 = vst [vmem:[#allocation2 + $0x88] sm:$0xff] %v1813
      %1846 = vst [vmem:[#allocation2 + $0x90] sm:$0xff] %v1814
      %1847 = vst [vmem:[#allocation2 + $0x98] sm:$0xff] %v1815
      %1848 = vst [vmem:[#allocation2 + $0xa0] sm:$0xff] %v1816
      %1849 = vst [vmem:[#allocation2 + $0xa8] sm:$0xff] %v1817
      %1850 = vst [vmem:[#allocation2 + $0xb0] sm:$0xff] %v1818
      %1851 = vst [vmem:[#allocation2 + $0xb8] sm:$0xff] %v1819
      %1852 = vst [vmem:[#allocation2 + $0xc0] sm:$0xff] %v1820
      %1853 = vst [vmem:[#allocation2 + $0xc8] sm:$0xff] %v1821
      %1854 = vst [vmem:[#allocation2 + $0xd0] sm:$0xff] %v1822
      %1855 = vst [vmem:[#allocation2 + $0xd8] sm:$0xff] %v1823
      %1856 = vst [vmem:[#allocation2 + $0xe0] sm:$0xff] %v1824
      %1857 = vst [vmem:[#allocation2 + $0xe8] sm:$0xff] %v1825
      %1858 = vst [vmem:[#allocation2 + $0xf0] sm:$0xff] %v1826
      %1859 = vst [vmem:[#allocation2 + $0xf8] sm:$0xff] %v1827
      %v1861 = vshrl.u32 %v908, 16
      %v1863 = vshll.u32 %v908, 16
      %v1865 = vrot.slane %v1863, 1
      %v1866 = vor.u32 %v1861, %v1865
      %v1868 = vshll.u32 %v909, 16
      %v1870 = vrot.slane %v1868, 1
      %v1871 = vsel %vm944, %v1866, %v1870
      %v1875 = vrot.slane %v908, 1
      %v1876 = vrot.slane %v909, 1
      %v1877 = vsel %vm1185, %v1875, %v1876
      %v1879 = vld [vmem:[#allocation2] sm:$0xff]
      %v1880 = vld [vmem:[#allocation2 + $0x8] sm:$0xff]
      %v1881 = vld [vmem:[#allocation2 + $0x10] sm:$0xff]
      %v1882 = vld [vmem:[#allocation2 + $0x18] sm:$0xff]
      %v1883 = vld [vmem:[#allocation2 + $0x20] sm:$0xff]
      %v1884 = vld [vmem:[#allocation2 + $0x28] sm:$0xff]
      %v1885 = vld [vmem:[#allocation2 + $0x30] sm:$0xff]
      %v1886 = vld [vmem:[#allocation2 + $0x38] sm:$0xff]
      %v1887 = vld [vmem:[#allocation2 + $0x40] sm:$0xff]
      %v1888 = vld [vmem:[#allocation2 + $0x48] sm:$0xff]
      %v1889 = vld [vmem:[#allocation2 + $0x50] sm:$0xff]
      %v1890 = vld [vmem:[#allocation2 + $0x58] sm:$0xff]
      %v1891 = vld [vmem:[#allocation2 + $0x60] sm:$0xff]
      %v1892 = vld [vmem:[#allocation2 + $0x68] sm:$0xff]
      %v1893 = vld [vmem:[#allocation2 + $0x70] sm:$0xff]
      %v1894 = vld [vmem:[#allocation2 + $0x78] sm:$0xff]
      %v1895 = vld [vmem:[#allocation2 + $0x80] sm:$0xff]
      %v1896 = vld [vmem:[#allocation2 + $0x88] sm:$0xff]
      %v1897 = vld [vmem:[#allocation2 + $0x90] sm:$0xff]
      %v1898 = vld [vmem:[#allocation2 + $0x98] sm:$0xff]
      %v1899 = vld [vmem:[#allocation2 + $0xa0] sm:$0xff]
      %v1900 = vld [vmem:[#allocation2 + $0xa8] sm:$0xff]
      %v1901 = vld [vmem:[#allocation2 + $0xb0] sm:$0xff]
      %v1902 = vld [vmem:[#allocation2 + $0xb8] sm:$0xff]
      %v1903 = vld [vmem:[#allocation2 + $0xc0] sm:$0xff]
      %v1904 = vld [vmem:[#allocation2 + $0xc8] sm:$0xff]
      %v1905 = vld [vmem:[#allocation2 + $0xd0] sm:$0xff]
      %v1906 = vld [vmem:[#allocation2 + $0xd8] sm:$0xff]
      %v1907 = vld [vmem:[#allocation2 + $0xe0] sm:$0xff]
      %v1908 = vld [vmem:[#allocation2 + $0xe8] sm:$0xff]
      %v1909 = vld [vmem:[#allocation2 + $0xf0] sm:$0xff]
      %v1910 = vld [vmem:[#allocation2 + $0xf8] sm:$0xff]
      %s1911 = scalar_lea.vmem %s3, 192
      %v1912 = vld [vmem:[%s1911] sm:$0xf]
      %v1913 = vld [vmem:[%s1911 + $0x4] sm:$0xf]
      %v1914 = vld [vmem:[%s1911 + $0x8] sm:$0xf]
      %v1915 = vld [vmem:[%s1911 + $0xc] sm:$0xf]
      %v1916 = vld [vmem:[%s1911 + $0x10] sm:$0xf]
      %v1917 = vld [vmem:[%s1911 + $0x14] sm:$0xf]
      %v1918 = vld [vmem:[%s1911 + $0x18] sm:$0xf]
      %v1919 = vld [vmem:[%s1911 + $0x1c] sm:$0xf]
      %v1920 = vld [vmem:[%s1911 + $0x20] sm:$0xf]
      %v1921 = vld [vmem:[%s1911 + $0x24] sm:$0xf]
      %v1922 = vld [vmem:[%s1911 + $0x28] sm:$0xf]
      %v1923 = vld [vmem:[%s1911 + $0x2c] sm:$0xf]
      %v1924 = vld [vmem:[%s1911 + $0x30] sm:$0xf]
      %v1925 = vld [vmem:[%s1911 + $0x34] sm:$0xf]
      %v1926 = vld [vmem:[%s1911 + $0x38] sm:$0xf]
      %v1927 = vld [vmem:[%s1911 + $0x3c] sm:$0xf]
      %v1928 = vld [vmem:[%s1911 + $0x40] sm:$0xf]
      %v1929 = vld [vmem:[%s1911 + $0x44] sm:$0xf]
      %v1930 = vld [vmem:[%s1911 + $0x48] sm:$0xf]
      %v1931 = vld [vmem:[%s1911 + $0x4c] sm:$0xf]
      %v1932 = vld [vmem:[%s1911 + $0x50] sm:$0xf]
      %v1933 = vld [vmem:[%s1911 + $0x54] sm:$0xf]
      %v1934 = vld [vmem:[%s1911 + $0x58] sm:$0xf]
      %v1935 = vld [vmem:[%s1911 + $0x5c] sm:$0xf]
      %v1936 = vld [vmem:[%s1911 + $0x60] sm:$0xf]
      %v1937 = vld [vmem:[%s1911 + $0x64] sm:$0xf]
      %v1938 = vld [vmem:[%s1911 + $0x68] sm:$0xf]
      %v1939 = vld [vmem:[%s1911 + $0x6c] sm:$0xf]
      %v1940 = vld [vmem:[%s1911 + $0x70] sm:$0xf]
      %v1941 = vld [vmem:[%s1911 + $0x74] sm:$0xf]
      %v1942 = vld [vmem:[%s1911 + $0x78] sm:$0xf]
      %v1943 = vld [vmem:[%s1911 + $0x7c] sm:$0xf]
      %v1944 = vld [vmem:[%s1911 + $0x80] sm:$0xf]
      %v1945 = vld [vmem:[%s1911 + $0x84] sm:$0xf]
      %v1946 = vld [vmem:[%s1911 + $0x88] sm:$0xf]
      %v1947 = vld [vmem:[%s1911 + $0x8c] sm:$0xf]
      %v1948 = vld [vmem:[%s1911 + $0x90] sm:$0xf]
      %v1949 = vld [vmem:[%s1911 + $0x94] sm:$0xf]
      %v1950 = vld [vmem:[%s1911 + $0x98] sm:$0xf]
      %v1951 = vld [vmem:[%s1911 + $0x9c] sm:$0xf]
      %v1952 = vld [vmem:[%s1911 + $0xa0] sm:$0xf]
      %v1953 = vld [vmem:[%s1911 + $0xa4] sm:$0xf]
      %v1954 = vld [vmem:[%s1911 + $0xa8] sm:$0xf]
      %v1955 = vld [vmem:[%s1911 + $0xac] sm:$0xf]
      %v1956 = vld [vmem:[%s1911 + $0xb0] sm:$0xf]
      %v1957 = vld [vmem:[%s1911 + $0xb4] sm:$0xf]
      %v1958 = vld [vmem:[%s1911 + $0xb8] sm:$0xf]
      %v1959 = vld [vmem:[%s1911 + $0xbc] sm:$0xf]
      %v2008 = vunpack.c.l.b16 %v1912
      %v2009 = vunpack.c.l.b16 %v1913
      %v2010 = vunpack.c.l.b16 %v1914
      %v2011 = vunpack.c.l.b16 %v1915
      %v2012 = vunpack.c.l.b16 %v1916
      %v2013 = vunpack.c.l.b16 %v1917
      %v2014 = vunpack.c.l.b16 %v1918
      %v2015 = vunpack.c.l.b16 %v1919
      %v2016 = vunpack.c.l.b16 %v1920
      %v2017 = vunpack.c.l.b16 %v1921
      %v2018 = vunpack.c.l.b16 %v1922
      %v2019 = vunpack.c.l.b16 %v1923
      %v2020 = vunpack.c.l.b16 %v1924
      %v2021 = vunpack.c.l.b16 %v1925
      %v2022 = vunpack.c.l.b16 %v1926
      %v2023 = vunpack.c.l.b16 %v1927
      %v2024 = vunpack.c.l.b16 %v1928
      %v2025 = vunpack.c.l.b16 %v1929
      %v2026 = vunpack.c.l.b16 %v1930
      %v2027 = vunpack.c.l.b16 %v1931
      %v2028 = vunpack.c.l.b16 %v1932
      %v2029 = vunpack.c.l.b16 %v1933
      %v2030 = vunpack.c.l.b16 %v1934
      %v2031 = vunpack.c.l.b16 %v1935
      %v2032 = vunpack.c.l.b16 %v1936
      %v2033 = vunpack.c.l.b16 %v1937
      %v2034 = vunpack.c.l.b16 %v1938
      %v2035 = vunpack.c.l.b16 %v1939
      %v2036 = vunpack.c.l.b16 %v1940
      %v2037 = vunpack.c.l.b16 %v1941
      %v2038 = vunpack.c.l.b16 %v1942
      %v2039 = vunpack.c.l.b16 %v1943
      %v2040 = vunpack.c.l.b16 %v1944
      %v2041 = vunpack.c.l.b16 %v1945
      %v2042 = vunpack.c.l.b16 %v1946
      %v2043 = vunpack.c.l.b16 %v1947
      %v2044 = vunpack.c.l.b16 %v1948
      %v2045 = vunpack.c.l.b16 %v1949
      %v2046 = vunpack.c.l.b16 %v1950
      %v2047 = vunpack.c.l.b16 %v1951
      %v2048 = vunpack.c.l.b16 %v1952
      %v2049 = vunpack.c.l.b16 %v1953
      %v2050 = vunpack.c.l.b16 %v1954
      %v2051 = vunpack.c.l.b16 %v1955
      %v2052 = vunpack.c.l.b16 %v1956
      %v2053 = vunpack.c.l.b16 %v1957
      %v2054 = vunpack.c.l.b16 %v1958
      %v2055 = vunpack.c.l.b16 %v1959
      %v2056 = vpack.c.b16 %v2009, %v2008
      %v2057 = vpack.c.b16 %v2011, %v2010
      %v2058 = vpack.c.b16 %v2013, %v2012
      %v2059 = vpack.c.b16 %v2015, %v2014
      %v2060 = vpack.c.b16 %v2017, %v2016
      %v2061 = vpack.c.b16 %v2019, %v2018
      %v2062 = vpack.c.b16 %v2021, %v2020
      %v2063 = vpack.c.b16 %v2023, %v2022
      %v2064 = vpack.c.b16 %v2025, %v2024
      %v2065 = vpack.c.b16 %v2027, %v2026
      %v2066 = vpack.c.b16 %v2029, %v2028
      %v2067 = vpack.c.b16 %v2031, %v2030
      %v2068 = vpack.c.b16 %v2033, %v2032
      %v2069 = vpack.c.b16 %v2035, %v2034
      %v2070 = vpack.c.b16 %v2037, %v2036
      %v2071 = vpack.c.b16 %v2039, %v2038
      %v2072 = vpack.c.b16 %v2041, %v2040
      %v2073 = vpack.c.b16 %v2043, %v2042
      %v2074 = vpack.c.b16 %v2045, %v2044
      %v2075 = vpack.c.b16 %v2047, %v2046
      %v2076 = vpack.c.b16 %v2049, %v2048
      %v2077 = vpack.c.b16 %v2051, %v2050
      %v2078 = vpack.c.b16 %v2053, %v2052
      %v2079 = vpack.c.b16 %v2055, %v2054
      %2104 = vmatprep.subr.bf16.mxu0 0
      %2105 = vmatpush1.bf16.msra.mxu0 %v2056
      %2106 = vmatprep.subr.bf16.mxu0 0
      %2107 = vmatpush1.bf16.msra.mxu0 %v2057
      %2108 = vmatprep.subr.bf16.mxu0 0
      %2109 = vmatpush1.bf16.msra.mxu0 %v2058
      %2110 = vmatprep.subr.bf16.mxu0 0
      %2111 = vmatpush1.bf16.msra.mxu0 %v2059
      %2112 = vmatprep.subr.bf16.mxu0 0
      %2113 = vmatpush1.bf16.msra.mxu0 %v2060
      %2114 = vmatprep.subr.bf16.mxu0 0
      %2115 = vmatpush1.bf16.msra.mxu0 %v2061
      %2116 = vmatprep.subr.bf16.mxu0 0
      %2117 = vmatpush1.bf16.msra.mxu0 %v2062
      %2118 = vmatprep.subr.bf16.mxu0 0
      %2119 = vmatpush1.bf16.msra.mxu0 %v2063
      %2120 = vmatprep.subr.bf16.mxu0 0
      %2121 = vmatpush1.bf16.msra.mxu0 %v2064
      %2122 = vmatprep.subr.bf16.mxu0 0
      %2123 = vmatpush1.bf16.msra.mxu0 %v2065
      %2124 = vmatprep.subr.bf16.mxu0 0
      %2125 = vmatpush1.bf16.msra.mxu0 %v2066
      %2126 = vmatprep.subr.bf16.mxu0 0
      %2127 = vmatpush1.bf16.msra.mxu0 %v2067
      %2128 = vmatprep.subr.bf16.mxu0 0
      %2129 = vmatpush1.bf16.msra.mxu0 %v2068
      %2130 = vmatprep.subr.bf16.mxu0 0
      %2131 = vmatpush1.bf16.msra.mxu0 %v2069
      %2132 = vmatprep.subr.bf16.mxu0 0
      %2133 = vmatpush1.bf16.msra.mxu0 %v2070
      %2134 = vmatprep.subr.bf16.mxu0 0
      %2135 = vmatpush1.bf16.msra.mxu0 %v2071
      %2136 = vmatprep.mubr.bf16.mxu0 %v968
      %2137 = vmatmul.mubr.bf16.gmra.mrb[0].mxu0 %v878
      %v2138 = vpop.f32.mrb[0].mxu0
      %v2139 = vadd.f32 0.0, %v2138
      %v2140 = vpop.f32.mrb[0].mxu0
      %v2141 = vpop.f32.mrb[0].mxu0
      %v2142 = vadd.f32 0.0, %v2141
      %v2143 = vpop.f32.mrb[0].mxu0
      %2144 = vmatprep.mubr.bf16.mxu0 %v980
      %2145 = vmatmul.mubr.bf16.gmra.mrb[0].mxu0 %v880
      %v2146 = vpop.f32.mrb[0].mxu0
      %v2147 = vadd.f32 0.0, %v2146
      %v2148 = vpop.f32.mrb[0].mxu0
      %v2149 = vpop.f32.mrb[0].mxu0
      %v2150 = vadd.f32 0.0, %v2149
      %v2151 = vpop.f32.mrb[0].mxu0
      %2152 = vmatprep.mubr.bf16.mxu0 %v992
      %2153 = vmatmul.mubr.bf16.gmra.mrb[0].mxu0 %v882
      %v2154 = vpop.f32.mrb[0].mxu0
      %v2155 = vadd.f32 0.0, %v2154
      %v2156 = vpop.f32.mrb[0].mxu0
      %v2157 = vpop.f32.mrb[0].mxu0
      %v2158 = vadd.f32 0.0, %v2157
      %v2159 = vpop.f32.mrb[0].mxu0
      %2160 = vmatprep.mubr.bf16.mxu0 %v1004
      %2161 = vmatmul.mubr.bf16.gmra.mrb[0].mxu0 %v884
      %v2162 = vpop.f32.mrb[0].mxu0
      %v2163 = vadd.f32 0.0, %v2162
      %v2164 = vpop.f32.mrb[0].mxu0
      %v2165 = vpop.f32.mrb[0].mxu0
      %v2166 = vadd.f32 0.0, %v2165
      %v2167 = vpop.f32.mrb[0].mxu0
      %2168 = vmatprep.mubr.bf16.mxu0 %v1016
      %2169 = vmatmul.mubr.bf16.gmra.mrb[0].mxu0 %v886
      %v2170 = vpop.f32.mrb[0].mxu0
      %v2171 = vadd.f32 0.0, %v2170
      %v2172 = vpop.f32.mrb[0].mxu0
      %v2173 = vpop.f32.mrb[0].mxu0
      %v2174 = vadd.f32 0.0, %v2173
      %v2175 = vpop.f32.mrb[0].mxu0
      %2176 = vmatprep.mubr.bf16.mxu0 %v1028
      %2177 = vmatmul.mubr.bf16.gmra.mrb[0].mxu0 %v888
      %v2178 = vpop.f32.mrb[0].mxu0
      %v2179 = vadd.f32 0.0, %v2178
      %v2180 = vpop.f32.mrb[0].mxu0
      %v2181 = vpop.f32.mrb[0].mxu0
      %v2182 = vadd.f32 0.0, %v2181
      %v2183 = vpop.f32.mrb[0].mxu0
      %2184 = vmatprep.mubr.bf16.mxu0 %v1040
      %2185 = vmatmul.mubr.bf16.gmra.mrb[0].mxu0 %v890
      %v2186 = vpop.f32.mrb[0].mxu0
      %v2187 = vadd.f32 0.0, %v2186
      %v2188 = vpop.f32.mrb[0].mxu0
      %v2189 = vpop.f32.mrb[0].mxu0
      %v2190 = vadd.f32 0.0, %v2189
      %v2191 = vpop.f32.mrb[0].mxu0
      %2192 = vmatprep.mubr.bf16.mxu0 %v1052
      %2193 = vmatmul.mubr.bf16.gmra.mrb[0].mxu0 %v892
      %v2194 = vpop.f32.mrb[0].mxu0
      %v2195 = vadd.f32 0.0, %v2194
      %v2196 = vpop.f32.mrb[0].mxu0
      %v2197 = vpop.f32.mrb[0].mxu0
      %v2198 = vadd.f32 0.0, %v2197
      %v2199 = vpop.f32.mrb[0].mxu0
      %2200 = vmatprep.mubr.bf16.mxu0 %v1064
      %2201 = vmatmul.mubr.bf16.gmra.mrb[0].mxu0 %v894
      %v2202 = vpop.f32.mrb[0].mxu0
      %v2203 = vadd.f32 0.0, %v2202
      %v2204 = vpop.f32.mrb[0].mxu0
      %v2205 = vpop.f32.mrb[0].mxu0
      %v2206 = vadd.f32 0.0, %v2205
      %v2207 = vpop.f32.mrb[0].mxu0
      %2208 = vmatprep.mubr.bf16.mxu0 %v1076
      %2209 = vmatmul.mubr.bf16.gmra.mrb[0].mxu0 %v896
      %v2210 = vpop.f32.mrb[0].mxu0
      %v2211 = vadd.f32 0.0, %v2210
      %v2212 = vpop.f32.mrb[0].mxu0
      %v2213 = vpop.f32.mrb[0].mxu0
      %v2214 = vadd.f32 0.0, %v2213
      %v2215 = vpop.f32.mrb[0].mxu0
      %2216 = vmatprep.mubr.bf16.mxu0 %v1088
      %2217 = vmatmul.mubr.bf16.gmra.mrb[0].mxu0 %v898
      %v2218 = vpop.f32.mrb[0].mxu0
      %v2219 = vadd.f32 0.0, %v2218
      %v2220 = vpop.f32.mrb[0].mxu0
      %v2221 = vpop.f32.mrb[0].mxu0
      %v2222 = vadd.f32 0.0, %v2221
      %v2223 = vpop.f32.mrb[0].mxu0
      %2224 = vmatprep.mubr.bf16.mxu0 %v1100
      %2225 = vmatmul.mubr.bf16.gmra.mrb[0].mxu0 %v900
      %v2226 = vpop.f32.mrb[0].mxu0
      %v2227 = vadd.f32 0.0, %v2226
      %v2228 = vpop.f32.mrb[0].mxu0
      %v2229 = vpop.f32.mrb[0].mxu0
      %v2230 = vadd.f32 0.0, %v2229
      %v2231 = vpop.f32.mrb[0].mxu0
      %2232 = vmatprep.mubr.bf16.mxu0 %v1112
      %2233 = vmatmul.mubr.bf16.gmra.mrb[0].mxu0 %v902
      %v2234 = vpop.f32.mrb[0].mxu0
      %v2235 = vadd.f32 0.0, %v2234
      %v2236 = vpop.f32.mrb[0].mxu0
      %v2237 = vpop.f32.mrb[0].mxu0
      %v2238 = vadd.f32 0.0, %v2237
      %v2239 = vpop.f32.mrb[0].mxu0
      %2240 = vmatprep.mubr.bf16.mxu0 %v1124
      %2241 = vmatmul.mubr.bf16.gmra.mrb[0].mxu0 %v904
      %v2242 = vpop.f32.mrb[0].mxu0
      %v2243 = vadd.f32 0.0, %v2242
      %v2244 = vpop.f32.mrb[0].mxu0
      %v2245 = vpop.f32.mrb[0].mxu0
      %v2246 = vadd.f32 0.0, %v2245
      %v2247 = vpop.f32.mrb[0].mxu0
      %2248 = vmatprep.mubr.bf16.mxu0 %v1136
      %2249 = vmatmul.mubr.bf16.gmra.mrb[0].mxu0 %v906
      %v2250 = vpop.f32.mrb[0].mxu0
      %v2251 = vadd.f32 0.0, %v2250
      %v2252 = vpop.f32.mrb[0].mxu0
      %v2253 = vpop.f32.mrb[0].mxu0
      %v2254 = vadd.f32 0.0, %v2253
      %v2255 = vpop.f32.mrb[0].mxu0
      %2256 = vmatprep.mubr.bf16.mxu0 %v1871
      %2257 = vmatmul.mubr.bf16.gmra.mrb[0].mxu0 %v908
      %v2258 = vpop.f32.mrb[0].mxu0
      %v2259 = vadd.f32 0.0, %v2258
      %v2260 = vpop.f32.mrb[0].mxu0
      %v2261 = vpop.f32.mrb[0].mxu0
      %v2262 = vadd.f32 0.0, %v2261
      %v2263 = vpop.f32.mrb[0].mxu0
      %2264 = vdwg.mxu0
      %2265 = vmatprep.subr.bf16.mxu0 0
      %2266 = vmatpush1.bf16.msra.mxu0 %v2072
      %2267 = vmatprep.subr.bf16.mxu0 0
      %2268 = vmatpush1.bf16.msra.mxu0 %v2073
      %2269 = vmatprep.subr.bf16.mxu0 0
      %2270 = vmatpush1.bf16.msra.mxu0 %v2074
      %2271 = vmatprep.subr.bf16.mxu0 0
      %2272 = vmatpush1.bf16.msra.mxu0 %v2075
      %2273 = vmatprep.subr.bf16.mxu0 0
      %2274 = vmatpush1.bf16.msra.mxu0 %v2076
      %2275 = vmatprep.subr.bf16.mxu0 0
      %2276 = vmatpush1.bf16.msra.mxu0 %v2077
      %2277 = vmatprep.subr.bf16.mxu0 0
      %2278 = vmatpush1.bf16.msra.mxu0 %v2078
      %2279 = vmatprep.subr.bf16.mxu0 0
      %2280 = vmatpush1.bf16.msra.mxu0 %v2079
      %2281 = vmatprep.subr.bf16.mxu0 0
      %2282 = vmatpush1.bf16.msra.mxu0 0
      %2283 = vmatprep.subr.bf16.mxu0 0
      %2284 = vmatpush1.bf16.msra.mxu0 0
      %2285 = vmatprep.subr.bf16.mxu0 0
      %2286 = vmatpush1.bf16.msra.mxu0 0
      %2287 = vmatprep.subr.bf16.mxu0 0
      %2288 = vmatpush1.bf16.msra.mxu0 0
      %2289 = vmatprep.subr.bf16.mxu0 0
      %2290 = vmatpush1.bf16.msra.mxu0 0
      %2291 = vmatprep.subr.bf16.mxu0 0
      %2292 = vmatpush1.bf16.msra.mxu0 0
      %2293 = vmatprep.subr.bf16.mxu0 0
      %2294 = vmatpush1.bf16.msra.mxu0 0
      %2295 = vmatprep.subr.bf16.mxu0 0
      %2296 = vmatpush1.bf16.msra.mxu0 0
      %2297 = vmatprep.mubr.bf16.mxu0 0
      %2298 = vmatmul.mubr.bf16.gmra.mrb[0].mxu0 %v1191
      %v2299 = vpop.f32.mrb[0].mxu0
      %v2300 = vadd.f32 %v2139, %v2299
      %v2301 = vpop.f32.mrb[0].mxu0
      %v2302 = vpop.f32.mrb[0].mxu0
      %v2303 = vadd.f32 %v2142, %v2302
      %v2304 = vpop.f32.mrb[0].mxu0
      %2305 = vmatprep.mubr.bf16.mxu0 0
      %2306 = vmatmul.mubr.bf16.gmra.mrb[0].mxu0 %v1194
      %v2307 = vpop.f32.mrb[0].mxu0
      %v2308 = vadd.f32 %v2147, %v2307
      %v2309 = vpop.f32.mrb[0].mxu0
      %v2310 = vpop.f32.mrb[0].mxu0
      %v2311 = vadd.f32 %v2150, %v2310
      %v2312 = vpop.f32.mrb[0].mxu0
      %2313 = vmatprep.mubr.bf16.mxu0 0
      %2314 = vmatmul.mubr.bf16.gmra.mrb[0].mxu0 %v1197
      %v2315 = vpop.f32.mrb[0].mxu0
      %v2316 = vadd.f32 %v2155, %v2315
      %v2317 = vpop.f32.mrb[0].mxu0
      %v2318 = vpop.f32.mrb[0].mxu0
      %v2319 = vadd.f32 %v2158, %v2318
      %v2320 = vpop.f32.mrb[0].mxu0
      %2321 = vmatprep.mubr.bf16.mxu0 0
      %2322 = vmatmul.mubr.bf16.gmra.mrb[0].mxu0 %v1200
      %v2323 = vpop.f32.mrb[0].mxu0
      %v2324 = vadd.f32 %v2163, %v2323
      %v2325 = vpop.f32.mrb[0].mxu0
      %v2326 = vpop.f32.mrb[0].mxu0
      %v2327 = vadd.f32 %v2166, %v2326
      %v2328 = vpop.f32.mrb[0].mxu0
      %2329 = vmatprep.mubr.bf16.mxu0 0
      %2330 = vmatmul.mubr.bf16.gmra.mrb[0].mxu0 %v1203
      %v2331 = vpop.f32.mrb[0].mxu0
      %v2332 = vadd.f32 %v2171, %v2331
      %v2333 = vpop.f32.mrb[0].mxu0
      %v2334 = vpop.f32.mrb[0].mxu0
      %v2335 = vadd.f32 %v2174, %v2334
      %v2336 = vpop.f32.mrb[0].mxu0
      %2337 = vmatprep.mubr.bf16.mxu0 0
      %2338 = vmatmul.mubr.bf16.gmra.mrb[0].mxu0 %v1206
      %v2339 = vpop.f32.mrb[0].mxu0
      %v2340 = vadd.f32 %v2179, %v2339
      %v2341 = vpop.f32.mrb[0].mxu0
      %v2342 = vpop.f32.mrb[0].mxu0
      %v2343 = vadd.f32 %v2182, %v2342
      %v2344 = vpop.f32.mrb[0].mxu0
      %2345 = vmatprep.mubr.bf16.mxu0 0
      %2346 = vmatmul.mubr.bf16.gmra.mrb[0].mxu0 %v1209
      %v2347 = vpop.f32.mrb[0].mxu0
      %v2348 = vadd.f32 %v2187, %v2347
      %v2349 = vpop.f32.mrb[0].mxu0
      %v2350 = vpop.f32.mrb[0].mxu0
      %v2351 = vadd.f32 %v2190, %v2350
      %v2352 = vpop.f32.mrb[0].mxu0
      %2353 = vmatprep.mubr.bf16.mxu0 0
      %2354 = vmatmul.mubr.bf16.gmra.mrb[0].mxu0 %v1212
      %v2355 = vpop.f32.mrb[0].mxu0
      %v2356 = vadd.f32 %v2195, %v2355
      %v2357 = vpop.f32.mrb[0].mxu0
      %v2358 = vpop.f32.mrb[0].mxu0
      %v2359 = vadd.f32 %v2198, %v2358
      %v2360 = vpop.f32.mrb[0].mxu0
      %2361 = vmatprep.mubr.bf16.mxu0 0
      %2362 = vmatmul.mubr.bf16.gmra.mrb[0].mxu0 %v1215
      %v2363 = vpop.f32.mrb[0].mxu0
      %v2364 = vadd.f32 %v2203, %v2363
      %v2365 = vpop.f32.mrb[0].mxu0
      %v2366 = vpop.f32.mrb[0].mxu0
      %v2367 = vadd.f32 %v2206, %v2366
      %v2368 = vpop.f32.mrb[0].mxu0
      %2369 = vmatprep.mubr.bf16.mxu0 0
      %2370 = vmatmul.mubr.bf16.gmra.mrb[0].mxu0 %v1218
      %v2371 = vpop.f32.mrb[0].mxu0
      %v2372 = vadd.f32 %v2211, %v2371
      %v2373 = vpop.f32.mrb[0].mxu0
      %v2374 = vpop.f32.mrb[0].mxu0
      %v2375 = vadd.f32 %v2214, %v2374
      %v2376 = vpop.f32.mrb[0].mxu0
      %2377 = vmatprep.mubr.bf16.mxu0 0
      %2378 = vmatmul.mubr.bf16.gmra.mrb[0].mxu0 %v1221
      %v2379 = vpop.f32.mrb[0].mxu0
      %v2380 = vadd.f32 %v2219, %v2379
      %v2381 = vpop.f32.mrb[0].mxu0
      %v2382 = vpop.f32.mrb[0].mxu0
      %v2383 = vadd.f32 %v2222, %v2382
      %v2384 = vpop.f32.mrb[0].mxu0
      %2385 = vmatprep.mubr.bf16.mxu0 0
      %2386 = vmatmul.mubr.bf16.gmra.mrb[0].mxu0 %v1224
      %v2387 = vpop.f32.mrb[0].mxu0
      %v2388 = vadd.f32 %v2227, %v2387
      %v2389 = vpop.f32.mrb[0].mxu0
      %v2390 = vpop.f32.mrb[0].mxu0
      %v2391 = vadd.f32 %v2230, %v2390
      %v2392 = vpop.f32.mrb[0].mxu0
      %2393 = vmatprep.mubr.bf16.mxu0 0
      %2394 = vmatmul.mubr.bf16.gmra.mrb[0].mxu0 %v1227
      %v2395 = vpop.f32.mrb[0].mxu0
      %v2396 = vadd.f32 %v2235, %v2395
      %v2397 = vpop.f32.mrb[0].mxu0
      %v2398 = vpop.f32.mrb[0].mxu0
      %v2399 = vadd.f32 %v2238, %v2398
      %v2400 = vpop.f32.mrb[0].mxu0
      %2401 = vmatprep.mubr.bf16.mxu0 0
      %2402 = vmatmul.mubr.bf16.gmra.mrb[0].mxu0 %v1230
      %v2403 = vpop.f32.mrb[0].mxu0
      %v2404 = vadd.f32 %v2243, %v2403
      %v2405 = vpop.f32.mrb[0].mxu0
      %v2406 = vpop.f32.mrb[0].mxu0
      %v2407 = vadd.f32 %v2246, %v2406
      %v2408 = vpop.f32.mrb[0].mxu0
      %2409 = vmatprep.mubr.bf16.mxu0 0
      %2410 = vmatmul.mubr.bf16.gmra.mrb[0].mxu0 %v1233
      %v2411 = vpop.f32.mrb[0].mxu0
      %v2412 = vadd.f32 %v2251, %v2411
      %v2413 = vpop.f32.mrb[0].mxu0
      %v2414 = vpop.f32.mrb[0].mxu0
      %v2415 = vadd.f32 %v2254, %v2414
      %v2416 = vpop.f32.mrb[0].mxu0
      %2417 = vmatprep.mubr.bf16.mxu0 0
      %2418 = vmatmul.mubr.bf16.gmra.mrb[0].mxu0 %v1877
      %v2419 = vpop.f32.mrb[0].mxu0
      %v2420 = vadd.f32 %v2259, %v2419
      %v2421 = vpop.f32.mrb[0].mxu0
      %v2422 = vpop.f32.mrb[0].mxu0
      %v2423 = vadd.f32 %v2262, %v2422
      %v2424 = vpop.f32.mrb[0].mxu0
      %2425 = vdwg.mxu0
      %v2426 = vadd.f32 %v1879, %v2300
      %v2427 = vadd.f32 %v1880, %v2303
      %v2428 = vadd.f32 %v1881, %v2308
      %v2429 = vadd.f32 %v1882, %v2311
      %v2430 = vadd.f32 %v1883, %v2316
      %v2431 = vadd.f32 %v1884, %v2319
      %v2432 = vadd.f32 %v1885, %v2324
      %v2433 = vadd.f32 %v1886, %v2327
      %v2434 = vadd.f32 %v1887, %v2332
      %v2435 = vadd.f32 %v1888, %v2335
      %v2436 = vadd.f32 %v1889, %v2340
      %v2437 = vadd.f32 %v1890, %v2343
      %v2438 = vadd.f32 %v1891, %v2348
      %v2439 = vadd.f32 %v1892, %v2351
      %v2440 = vadd.f32 %v1893, %v2356
      %v2441 = vadd.f32 %v1894, %v2359
      %v2442 = vadd.f32 %v1895, %v2364
      %v2443 = vadd.f32 %v1896, %v2367
      %v2444 = vadd.f32 %v1897, %v2372
      %v2445 = vadd.f32 %v1898, %v2375
      %v2446 = vadd.f32 %v1899, %v2380
      %v2447 = vadd.f32 %v1900, %v2383
      %v2448 = vadd.f32 %v1901, %v2388
      %v2449 = vadd.f32 %v1902, %v2391
      %v2450 = vadd.f32 %v1903, %v2396
      %v2451 = vadd.f32 %v1904, %v2399
      %v2452 = vadd.f32 %v1905, %v2404
      %v2453 = vadd.f32 %v1906, %v2407
      %v2454 = vadd.f32 %v1907, %v2412
      %v2455 = vadd.f32 %v1908, %v2415
      %v2456 = vadd.f32 %v1909, %v2420
      %v2457 = vadd.f32 %v1910, %v2423
      %2458 = vst [vmem:[#allocation2] sm:$0xff] %v2426
      %2459 = vst [vmem:[#allocation2 + $0x8] sm:$0xff] %v2427
      %2460 = vst [vmem:[#allocation2 + $0x10] sm:$0xff] %v2428
      %2461 = vst [vmem:[#allocation2 + $0x18] sm:$0xff] %v2429
      %2462 = vst [vmem:[#allocation2 + $0x20] sm:$0xff] %v2430
      %2463 = vst [vmem:[#allocation2 + $0x28] sm:$0xff] %v2431
      %2464 = vst [vmem:[#allocation2 + $0x30] sm:$0xff] %v2432
      %2465 = vst [vmem:[#allocation2 + $0x38] sm:$0xff] %v2433
      %2466 = vst [vmem:[#allocation2 + $0x40] sm:$0xff] %v2434
      %2467 = vst [vmem:[#allocation2 + $0x48] sm:$0xff] %v2435
      %2468 = vst [vmem:[#allocation2 + $0x50] sm:$0xff] %v2436
      %2469 = vst [vmem:[#allocation2 + $0x58] sm:$0xff] %v2437
      %2470 = vst [vmem:[#allocation2 + $0x60] sm:$0xff] %v2438
      %2471 = vst [vmem:[#allocation2 + $0x68] sm:$0xff] %v2439
      %2472 = vst [vmem:[#allocation2 + $0x70] sm:$0xff] %v2440
      %2473 = vst [vmem:[#allocation2 + $0x78] sm:$0xff] %v2441
      %2474 = vst [vmem:[#allocation2 + $0x80] sm:$0xff] %v2442
      %2475 = vst [vmem:[#allocation2 + $0x88] sm:$0xff] %v2443
      %2476 = vst [vmem:[#allocation2 + $0x90] sm:$0xff] %v2444
      %2477 = vst [vmem:[#allocation2 + $0x98] sm:$0xff] %v2445
      %2478 = vst [vmem:[#allocation2 + $0xa0] sm:$0xff] %v2446
      %2479 = vst [vmem:[#allocation2 + $0xa8] sm:$0xff] %v2447
      %2480 = vst [vmem:[#allocation2 + $0xb0] sm:$0xff] %v2448
      %2481 = vst [vmem:[#allocation2 + $0xb8] sm:$0xff] %v2449
      %2482 = vst [vmem:[#allocation2 + $0xc0] sm:$0xff] %v2450
      %2483 = vst [vmem:[#allocation2 + $0xc8] sm:$0xff] %v2451
      %2484 = vst [vmem:[#allocation2 + $0xd0] sm:$0xff] %v2452
      %2485 = vst [vmem:[#allocation2 + $0xd8] sm:$0xff] %v2453
      %2486 = vst [vmem:[#allocation2 + $0xe0] sm:$0xff] %v2454
      %2487 = vst [vmem:[#allocation2 + $0xe8] sm:$0xff] %v2455
      %2488 = vst [vmem:[#allocation2 + $0xf0] sm:$0xff] %v2456
      %2489 = vst [vmem:[#allocation2 + $0xf8] sm:$0xff] %v2457
      %v2491 = vshrl.u32 %v910, 16
      %v2493 = vshll.u32 %v910, 16
      %v2495 = vrot.slane %v2493, 1
      %v2496 = vor.u32 %v2491, %v2495
      %v2498 = vshll.u32 %v911, 16
      %v2500 = vrot.slane %v2498, 1
      %v2501 = vsel %vm944, %v2496, %v2500
      %v2505 = vrot.slane %v910, 1
      %v2506 = vrot.slane %v911, 1
      %v2507 = vsel %vm1185, %v2505, %v2506
      %v2509 = vld [vmem:[#allocation2] sm:$0xff]
      %v2510 = vld [vmem:[#allocation2 + $0x8] sm:$0xff]
      %v2511 = vld [vmem:[#allocation2 + $0x10] sm:$0xff]
      %v2512 = vld [vmem:[#allocation2 + $0x18] sm:$0xff]
      %v2513 = vld [vmem:[#allocation2 + $0x20] sm:$0xff]
      %v2514 = vld [vmem:[#allocation2 + $0x28] sm:$0xff]
      %v2515 = vld [vmem:[#allocation2 + $0x30] sm:$0xff]
      %v2516 = vld [vmem:[#allocation2 + $0x38] sm:$0xff]
      %v2517 = vld [vmem:[#allocation2 + $0x40] sm:$0xff]
      %v2518 = vld [vmem:[#allocation2 + $0x48] sm:$0xff]
      %v2519 = vld [vmem:[#allocation2 + $0x50] sm:$0xff]
      %v2520 = vld [vmem:[#allocation2 + $0x58] sm:$0xff]
      %v2521 = vld [vmem:[#allocation2 + $0x60] sm:$0xff]
      %v2522 = vld [vmem:[#allocation2 + $0x68] sm:$0xff]
      %v2523 = vld [vmem:[#allocation2 + $0x70] sm:$0xff]
      %v2524 = vld [vmem:[#allocation2 + $0x78] sm:$0xff]
      %v2525 = vld [vmem:[#allocation2 + $0x80] sm:$0xff]
      %v2526 = vld [vmem:[#allocation2 + $0x88] sm:$0xff]
      %v2527 = vld [vmem:[#allocation2 + $0x90] sm:$0xff]
      %v2528 = vld [vmem:[#allocation2 + $0x98] sm:$0xff]
      %v2529 = vld [vmem:[#allocation2 + $0xa0] sm:$0xff]
      %v2530 = vld [vmem:[#allocation2 + $0xa8] sm:$0xff]
      %v2531 = vld [vmem:[#allocation2 + $0xb0] sm:$0xff]
      %v2532 = vld [vmem:[#allocation2 + $0xb8] sm:$0xff]
      %v2533 = vld [vmem:[#allocation2 + $0xc0] sm:$0xff]
      %v2534 = vld [vmem:[#allocation2 + $0xc8] sm:$0xff]
      %v2535 = vld [vmem:[#allocation2 + $0xd0] sm:$0xff]
      %v2536 = vld [vmem:[#allocation2 + $0xd8] sm:$0xff]
      %v2537 = vld [vmem:[#allocation2 + $0xe0] sm:$0xff]
      %v2538 = vld [vmem:[#allocation2 + $0xe8] sm:$0xff]
      %v2539 = vld [vmem:[#allocation2 + $0xf0] sm:$0xff]
      %v2540 = vld [vmem:[#allocation2 + $0xf8] sm:$0xff]
      %s2541 = scalar_lea.vmem %s3, 384
      %v2542 = vld [vmem:[%s2541] sm:$0xf]
      %v2543 = vld [vmem:[%s2541 + $0x4] sm:$0xf]
      %v2544 = vld [vmem:[%s2541 + $0x8] sm:$0xf]
      %v2545 = vld [vmem:[%s2541 + $0xc] sm:$0xf]
      %v2546 = vld [vmem:[%s2541 + $0x10] sm:$0xf]
      %v2547 = vld [vmem:[%s2541 + $0x14] sm:$0xf]
      %v2548 = vld [vmem:[%s2541 + $0x18] sm:$0xf]
      %v2549 = vld [vmem:[%s2541 + $0x1c] sm:$0xf]
      %v2550 = vld [vmem:[%s2541 + $0x20] sm:$0xf]
      %v2551 = vld [vmem:[%s2541 + $0x24] sm:$0xf]
      %v2552 = vld [vmem:[%s2541 + $0x28] sm:$0xf]
      %v2553 = vld [vmem:[%s2541 + $0x2c] sm:$0xf]
      %v2554 = vld [vmem:[%s2541 + $0x30] sm:$0xf]
      %v2555 = vld [vmem:[%s2541 + $0x34] sm:$0xf]
      %v2556 = vld [vmem:[%s2541 + $0x38] sm:$0xf]
      %v2557 = vld [vmem:[%s2541 + $0x3c] sm:$0xf]
      %v2558 = vld [vmem:[%s2541 + $0x40] sm:$0xf]
      %v2559 = vld [vmem:[%s2541 + $0x44] sm:$0xf]
      %v2560 = vld [vmem:[%s2541 + $0x48] sm:$0xf]
      %v2561 = vld [vmem:[%s2541 + $0x4c] sm:$0xf]
      %v2562 = vld [vmem:[%s2541 + $0x50] sm:$0xf]
      %v2563 = vld [vmem:[%s2541 + $0x54] sm:$0xf]
      %v2564 = vld [vmem:[%s2541 + $0x58] sm:$0xf]
      %v2565 = vld [vmem:[%s2541 + $0x5c] sm:$0xf]
      %v2566 = vld [vmem:[%s2541 + $0x60] sm:$0xf]
      %v2567 = vld [vmem:[%s2541 + $0x64] sm:$0xf]
      %v2568 = vld [vmem:[%s2541 + $0x68] sm:$0xf]
      %v2569 = vld [vmem:[%s2541 + $0x6c] sm:$0xf]
      %v2570 = vld [vmem:[%s2541 + $0x70] sm:$0xf]
      %v2571 = vld [vmem:[%s2541 + $0x74] sm:$0xf]
      %v2572 = vld [vmem:[%s2541 + $0x78] sm:$0xf]
      %v2573 = vld [vmem:[%s2541 + $0x7c] sm:$0xf]
      %v2574 = vld [vmem:[%s2541 + $0x80] sm:$0xf]
      %v2575 = vld [vmem:[%s2541 + $0x84] sm:$0xf]
      %v2576 = vld [vmem:[%s2541 + $0x88] sm:$0xf]
      %v2577 = vld [vmem:[%s2541 + $0x8c] sm:$0xf]
      %v2578 = vld [vmem:[%s2541 + $0x90] sm:$0xf]
      %v2579 = vld [vmem:[%s2541 + $0x94] sm:$0xf]
      %v2580 = vld [vmem:[%s2541 + $0x98] sm:$0xf]
      %v2581 = vld [vmem:[%s2541 + $0x9c] sm:$0xf]
      %v2582 = vld [vmem:[%s2541 + $0xa0] sm:$0xf]
      %v2583 = vld [vmem:[%s2541 + $0xa4] sm:$0xf]
      %v2584 = vld [vmem:[%s2541 + $0xa8] sm:$0xf]
      %v2585 = vld [vmem:[%s2541 + $0xac] sm:$0xf]
      %v2586 = vld [vmem:[%s2541 + $0xb0] sm:$0xf]
      %v2587 = vld [vmem:[%s2541 + $0xb4] sm:$0xf]
      %v2588 = vld [vmem:[%s2541 + $0xb8] sm:$0xf]
      %v2589 = vld [vmem:[%s2541 + $0xbc] sm:$0xf]
      %v2638 = vunpack.c.l.b16 %v2542
      %v2639 = vunpack.c.l.b16 %v2543
      %v2640 = vunpack.c.l.b16 %v2544
      %v2641 = vunpack.c.l.b16 %v2545
      %v2642 = vunpack.c.l.b16 %v2546
      %v2643 = vunpack.c.l.b16 %v2547
      %v2644 = vunpack.c.l.b16 %v2548
      %v2645 = vunpack.c.l.b16 %v2549
      %v2646 = vunpack.c.l.b16 %v2550
      %v2647 = vunpack.c.l.b16 %v2551
      %v2648 = vunpack.c.l.b16 %v2552
      %v2649 = vunpack.c.l.b16 %v2553
      %v2650 = vunpack.c.l.b16 %v2554
      %v2651 = vunpack.c.l.b16 %v2555
      %v2652 = vunpack.c.l.b16 %v2556
      %v2653 = vunpack.c.l.b16 %v2557
      %v2654 = vunpack.c.l.b16 %v2558
      %v2655 = vunpack.c.l.b16 %v2559
      %v2656 = vunpack.c.l.b16 %v2560
      %v2657 = vunpack.c.l.b16 %v2561
      %v2658 = vunpack.c.l.b16 %v2562
      %v2659 = vunpack.c.l.b16 %v2563
      %v2660 = vunpack.c.l.b16 %v2564
      %v2661 = vunpack.c.l.b16 %v2565
      %v2662 = vunpack.c.l.b16 %v2566
      %v2663 = vunpack.c.l.b16 %v2567
      %v2664 = vunpack.c.l.b16 %v2568
      %v2665 = vunpack.c.l.b16 %v2569
      %v2666 = vunpack.c.l.b16 %v2570
      %v2667 = vunpack.c.l.b16 %v2571
      %v2668 = vunpack.c.l.b16 %v2572
      %v2669 = vunpack.c.l.b16 %v2573
      %v2670 = vunpack.c.l.b16 %v2574
      %v2671 = vunpack.c.l.b16 %v2575
      %v2672 = vunpack.c.l.b16 %v2576
      %v2673 = vunpack.c.l.b16 %v2577
      %v2674 = vunpack.c.l.b16 %v2578
      %v2675 = vunpack.c.l.b16 %v2579
      %v2676 = vunpack.c.l.b16 %v2580
      %v2677 = vunpack.c.l.b16 %v2581
      %v2678 = vunpack.c.l.b16 %v2582
      %v2679 = vunpack.c.l.b16 %v2583
      %v2680 = vunpack.c.l.b16 %v2584
      %v2681 = vunpack.c.l.b16 %v2585
      %v2682 = vunpack.c.l.b16 %v2586
      %v2683 = vunpack.c.l.b16 %v2587
      %v2684 = vunpack.c.l.b16 %v2588
      %v2685 = vunpack.c.l.b16 %v2589
      %v2686 = vpack.c.b16 %v2639, %v2638
      %v2687 = vpack.c.b16 %v2641, %v2640
      %v2688 = vpack.c.b16 %v2643, %v2642
      %v2689 = vpack.c.b16 %v2645, %v2644
      %v2690 = vpack.c.b16 %v2647, %v2646
      %v2691 = vpack.c.b16 %v2649, %v2648
      %v2692 = vpack.c.b16 %v2651, %v2650
      %v2693 = vpack.c.b16 %v2653, %v2652
      %v2694 = vpack.c.b16 %v2655, %v2654
      %v2695 = vpack.c.b16 %v2657, %v2656
      %v2696 = vpack.c.b16 %v2659, %v2658
      %v2697 = vpack.c.b16 %v2661, %v2660
      %v2698 = vpack.c.b16 %v2663, %v2662
      %v2699 = vpack.c.b16 %v2665, %v2664
      %v2700 = vpack.c.b16 %v2667, %v2666
      %v2701 = vpack.c.b16 %v2669, %v2668
      %v2702 = vpack.c.b16 %v2671, %v2670
      %v2703 = vpack.c.b16 %v2673, %v2672
      %v2704 = vpack.c.b16 %v2675, %v2674
      %v2705 = vpack.c.b16 %v2677, %v2676
      %v2706 = vpack.c.b16 %v2679, %v2678
      %v2707 = vpack.c.b16 %v2681, %v2680
      %v2708 = vpack.c.b16 %v2683, %v2682
      %v2709 = vpack.c.b16 %v2685, %v2684
      %2734 = vmatprep.subr.bf16.mxu0 0
      %2735 = vmatpush1.bf16.msra.mxu0 %v2686
      %2736 = vmatprep.subr.bf16.mxu0 0
      %2737 = vmatpush1.bf16.msra.mxu0 %v2687
      %2738 = vmatprep.subr.bf16.mxu0 0
      %2739 = vmatpush1.bf16.msra.mxu0 %v2688
      %2740 = vmatprep.subr.bf16.mxu0 0
      %2741 = vmatpush1.bf16.msra.mxu0 %v2689
      %2742 = vmatprep.subr.bf16.mxu0 0
      %2743 = vmatpush1.bf16.msra.mxu0 %v2690
      %2744 = vmatprep.subr.bf16.mxu0 0
      %2745 = vmatpush1.bf16.msra.mxu0 %v2691
      %2746 = vmatprep.subr.bf16.mxu0 0
      %2747 = vmatpush1.bf16.msra.mxu0 %v2692
      %2748 = vmatprep.subr.bf16.mxu0 0
      %2749 = vmatpush1.bf16.msra.mxu0 %v2693
      %2750 = vmatprep.subr.bf16.mxu0 0
      %2751 = vmatpush1.bf16.msra.mxu0 %v2694
      %2752 = vmatprep.subr.bf16.mxu0 0
      %2753 = vmatpush1.bf16.msra.mxu0 %v2695
      %2754 = vmatprep.subr.bf16.mxu0 0
      %2755 = vmatpush1.bf16.msra.mxu0 %v2696
      %2756 = vmatprep.subr.bf16.mxu0 0
      %2757 = vmatpush1.bf16.msra.mxu0 %v2697
      %2758 = vmatprep.subr.bf16.mxu0 0
      %2759 = vmatpush1.bf16.msra.mxu0 %v2698
      %2760 = vmatprep.subr.bf16.mxu0 0
      %2761 = vmatpush1.bf16.msra.mxu0 %v2699
      %2762 = vmatprep.subr.bf16.mxu0 0
      %2763 = vmatpush1.bf16.msra.mxu0 %v2700
      %2764 = vmatprep.subr.bf16.mxu0 0
      %2765 = vmatpush1.bf16.msra.mxu0 %v2701
      %2766 = vmatprep.mubr.bf16.mxu0 %v980
      %2767 = vmatmul.mubr.bf16.gmra.mrb[0].mxu0 %v880
      %v2768 = vpop.f32.mrb[0].mxu0
      %v2769 = vadd.f32 0.0, %v2768
      %v2770 = vpop.f32.mrb[0].mxu0
      %v2771 = vpop.f32.mrb[0].mxu0
      %v2772 = vadd.f32 0.0, %v2771
      %v2773 = vpop.f32.mrb[0].mxu0
      %2774 = vmatprep.mubr.bf16.mxu0 %v992
      %2775 = vmatmul.mubr.bf16.gmra.mrb[0].mxu0 %v882
      %v2776 = vpop.f32.mrb[0].mxu0
      %v2777 = vadd.f32 0.0, %v2776
      %v2778 = vpop.f32.mrb[0].mxu0
      %v2779 = vpop.f32.mrb[0].mxu0
      %v2780 = vadd.f32 0.0, %v2779
      %v2781 = vpop.f32.mrb[0].mxu0
      %2782 = vmatprep.mubr.bf16.mxu0 %v1004
      %2783 = vmatmul.mubr.bf16.gmra.mrb[0].mxu0 %v884
      %v2784 = vpop.f32.mrb[0].mxu0
      %v2785 = vadd.f32 0.0, %v2784
      %v2786 = vpop.f32.mrb[0].mxu0
      %v2787 = vpop.f32.mrb[0].mxu0
      %v2788 = vadd.f32 0.0, %v2787
      %v2789 = vpop.f32.mrb[0].mxu0
      %2790 = vmatprep.mubr.bf16.mxu0 %v1016
      %2791 = vmatmul.mubr.bf16.gmra.mrb[0].mxu0 %v886
      %v2792 = vpop.f32.mrb[0].mxu0
      %v2793 = vadd.f32 0.0, %v2792
      %v2794 = vpop.f32.mrb[0].mxu0
      %v2795 = vpop.f32.mrb[0].mxu0
      %v2796 = vadd.f32 0.0, %v2795
      %v2797 = vpop.f32.mrb[0].mxu0
      %2798 = vmatprep.mubr.bf16.mxu0 %v1028
      %2799 = vmatmul.mubr.bf16.gmra.mrb[0].mxu0 %v888
      %v2800 = vpop.f32.mrb[0].mxu0
      %v2801 = vadd.f32 0.0, %v2800
      %v2802 = vpop.f32.mrb[0].mxu0
      %v2803 = vpop.f32.mrb[0].mxu0
      %v2804 = vadd.f32 0.0, %v2803
      %v2805 = vpop.f32.mrb[0].mxu0
      %2806 = vmatprep.mubr.bf16.mxu0 %v1040
      %2807 = vmatmul.mubr.bf16.gmra.mrb[0].mxu0 %v890
      %v2808 = vpop.f32.mrb[0].mxu0
      %v2809 = vadd.f32 0.0, %v2808
      %v2810 = vpop.f32.mrb[0].mxu0
      %v2811 = vpop.f32.mrb[0].mxu0
      %v2812 = vadd.f32 0.0, %v2811
      %v2813 = vpop.f32.mrb[0].mxu0
      %2814 = vmatprep.mubr.bf16.mxu0 %v1052
      %2815 = vmatmul.mubr.bf16.gmra.mrb[0].mxu0 %v892
      %v2816 = vpop.f32.mrb[0].mxu0
      %v2817 = vadd.f32 0.0, %v2816
      %v2818 = vpop.f32.mrb[0].mxu0
      %v2819 = vpop.f32.mrb[0].mxu0
      %v2820 = vadd.f32 0.0, %v2819
      %v2821 = vpop.f32.mrb[0].mxu0
      %2822 = vmatprep.mubr.bf16.mxu0 %v1064
      %2823 = vmatmul.mubr.bf16.gmra.mrb[0].mxu0 %v894
      %v2824 = vpop.f32.mrb[0].mxu0
      %v2825 = vadd.f32 0.0, %v2824
      %v2826 = vpop.f32.mrb[0].mxu0
      %v2827 = vpop.f32.mrb[0].mxu0
      %v2828 = vadd.f32 0.0, %v2827
      %v2829 = vpop.f32.mrb[0].mxu0
      %2830 = vmatprep.mubr.bf16.mxu0 %v1076
      %2831 = vmatmul.mubr.bf16.gmra.mrb[0].mxu0 %v896
      %v2832 = vpop.f32.mrb[0].mxu0
      %v2833 = vadd.f32 0.0, %v2832
      %v2834 = vpop.f32.mrb[0].mxu0
      %v2835 = vpop.f32.mrb[0].mxu0
      %v2836 = vadd.f32 0.0, %v2835
      %v2837 = vpop.f32.mrb[0].mxu0
      %2838 = vmatprep.mubr.bf16.mxu0 %v1088
      %2839 = vmatmul.mubr.bf16.gmra.mrb[0].mxu0 %v898
      %v2840 = vpop.f32.mrb[0].mxu0
      %v2841 = vadd.f32 0.0, %v2840
      %v2842 = vpop.f32.mrb[0].mxu0
      %v2843 = vpop.f32.mrb[0].mxu0
      %v2844 = vadd.f32 0.0, %v2843
      %v2845 = vpop.f32.mrb[0].mxu0
      %2846 = vmatprep.mubr.bf16.mxu0 %v1100
      %2847 = vmatmul.mubr.bf16.gmra.mrb[0].mxu0 %v900
      %v2848 = vpop.f32.mrb[0].mxu0
      %v2849 = vadd.f32 0.0, %v2848
      %v2850 = vpop.f32.mrb[0].mxu0
      %v2851 = vpop.f32.mrb[0].mxu0
      %v2852 = vadd.f32 0.0, %v2851
      %v2853 = vpop.f32.mrb[0].mxu0
      %2854 = vmatprep.mubr.bf16.mxu0 %v1112
      %2855 = vmatmul.mubr.bf16.gmra.mrb[0].mxu0 %v902
      %v2856 = vpop.f32.mrb[0].mxu0
      %v2857 = vadd.f32 0.0, %v2856
      %v2858 = vpop.f32.mrb[0].mxu0
      %v2859 = vpop.f32.mrb[0].mxu0
      %v2860 = vadd.f32 0.0, %v2859
      %v2861 = vpop.f32.mrb[0].mxu0
      %2862 = vmatprep.mubr.bf16.mxu0 %v1124
      %2863 = vmatmul.mubr.bf16.gmra.mrb[0].mxu0 %v904
      %v2864 = vpop.f32.mrb[0].mxu0
      %v2865 = vadd.f32 0.0, %v2864
      %v2866 = vpop.f32.mrb[0].mxu0
      %v2867 = vpop.f32.mrb[0].mxu0
      %v2868 = vadd.f32 0.0, %v2867
      %v2869 = vpop.f32.mrb[0].mxu0
      %2870 = vmatprep.mubr.bf16.mxu0 %v1136
      %2871 = vmatmul.mubr.bf16.gmra.mrb[0].mxu0 %v906
      %v2872 = vpop.f32.mrb[0].mxu0
      %v2873 = vadd.f32 0.0, %v2872
      %v2874 = vpop.f32.mrb[0].mxu0
      %v2875 = vpop.f32.mrb[0].mxu0
      %v2876 = vadd.f32 0.0, %v2875
      %v2877 = vpop.f32.mrb[0].mxu0
      %2878 = vmatprep.mubr.bf16.mxu0 %v1871
      %2879 = vmatmul.mubr.bf16.gmra.mrb[0].mxu0 %v908
      %v2880 = vpop.f32.mrb[0].mxu0
      %v2881 = vadd.f32 0.0, %v2880
      %v2882 = vpop.f32.mrb[0].mxu0
      %v2883 = vpop.f32.mrb[0].mxu0
      %v2884 = vadd.f32 0.0, %v2883
      %v2885 = vpop.f32.mrb[0].mxu0
      %2886 = vmatprep.mubr.bf16.mxu0 %v2501
      %2887 = vmatmul.mubr.bf16.gmra.mrb[0].mxu0 %v910
      %v2888 = vpop.f32.mrb[0].mxu0
      %v2889 = vadd.f32 0.0, %v2888
      %v2890 = vpop.f32.mrb[0].mxu0
      %v2891 = vpop.f32.mrb[0].mxu0
      %v2892 = vadd.f32 0.0, %v2891
      %v2893 = vpop.f32.mrb[0].mxu0
      %2894 = vdwg.mxu0
      %2895 = vmatprep.subr.bf16.mxu0 0
      %2896 = vmatpush1.bf16.msra.mxu0 %v2702
      %2897 = vmatprep.subr.bf16.mxu0 0
      %2898 = vmatpush1.bf16.msra.mxu0 %v2703
      %2899 = vmatprep.subr.bf16.mxu0 0
      %2900 = vmatpush1.bf16.msra.mxu0 %v2704
      %2901 = vmatprep.subr.bf16.mxu0 0
      %2902 = vmatpush1.bf16.msra.mxu0 %v2705
      %2903 = vmatprep.subr.bf16.mxu0 0
      %2904 = vmatpush1.bf16.msra.mxu0 %v2706
      %2905 = vmatprep.subr.bf16.mxu0 0
      %2906 = vmatpush1.bf16.msra.mxu0 %v2707
      %2907 = vmatprep.subr.bf16.mxu0 0
      %2908 = vmatpush1.bf16.msra.mxu0 %v2708
      %2909 = vmatprep.subr.bf16.mxu0 0
      %2910 = vmatpush1.bf16.msra.mxu0 %v2709
      %2911 = vmatprep.subr.bf16.mxu0 0
      %2912 = vmatpush1.bf16.msra.mxu0 0
      %2913 = vmatprep.subr.bf16.mxu0 0
      %2914 = vmatpush1.bf16.msra.mxu0 0
      %2915 = vmatprep.subr.bf16.mxu0 0
      %2916 = vmatpush1.bf16.msra.mxu0 0
      %2917 = vmatprep.subr.bf16.mxu0 0
      %2918 = vmatpush1.bf16.msra.mxu0 0
      %2919 = vmatprep.subr.bf16.mxu0 0
      %2920 = vmatpush1.bf16.msra.mxu0 0
      %2921 = vmatprep.subr.bf16.mxu0 0
      %2922 = vmatpush1.bf16.msra.mxu0 0
      %2923 = vmatprep.subr.bf16.mxu0 0
      %2924 = vmatpush1.bf16.msra.mxu0 0
      %2925 = vmatprep.subr.bf16.mxu0 0
      %2926 = vmatpush1.bf16.msra.mxu0 0
      %2927 = vmatprep.mubr.bf16.mxu0 0
      %2928 = vmatmul.mubr.bf16.gmra.mrb[0].mxu0 %v1194
      %v2929 = vpop.f32.mrb[0].mxu0
      %v2930 = vadd.f32 %v2769, %v2929
      %v2931 = vpop.f32.mrb[0].mxu0
      %v2932 = vpop.f32.mrb[0].mxu0
      %v2933 = vadd.f32 %v2772, %v2932
      %v2934 = vpop.f32.mrb[0].mxu0
      %2935 = vmatprep.mubr.bf16.mxu0 0
      %2936 = vmatmul.mubr.bf16.gmra.mrb[0].mxu0 %v1197
      %v2937 = vpop.f32.mrb[0].mxu0
      %v2938 = vadd.f32 %v2777, %v2937
      %v2939 = vpop.f32.mrb[0].mxu0
      %v2940 = vpop.f32.mrb[0].mxu0
      %v2941 = vadd.f32 %v2780, %v2940
      %v2942 = vpop.f32.mrb[0].mxu0
      %2943 = vmatprep.mubr.bf16.mxu0 0
      %2944 = vmatmul.mubr.bf16.gmra.mrb[0].mxu0 %v1200
      %v2945 = vpop.f32.mrb[0].mxu0
      %v2946 = vadd.f32 %v2785, %v2945
      %v2947 = vpop.f32.mrb[0].mxu0
      %v2948 = vpop.f32.mrb[0].mxu0
      %v2949 = vadd.f32 %v2788, %v2948
      %v2950 = vpop.f32.mrb[0].mxu0
      %2951 = vmatprep.mubr.bf16.mxu0 0
      %2952 = vmatmul.mubr.bf16.gmra.mrb[0].mxu0 %v1203
      %v2953 = vpop.f32.mrb[0].mxu0
      %v2954 = vadd.f32 %v2793, %v2953
      %v2955 = vpop.f32.mrb[0].mxu0
      %v2956 = vpop.f32.mrb[0].mxu0
      %v2957 = vadd.f32 %v2796, %v2956
      %v2958 = vpop.f32.mrb[0].mxu0
      %2959 = vmatprep.mubr.bf16.mxu0 0
      %2960 = vmatmul.mubr.bf16.gmra.mrb[0].mxu0 %v1206
      %v2961 = vpop.f32.mrb[0].mxu0
      %v2962 = vadd.f32 %v2801, %v2961
      %v2963 = vpop.f32.mrb[0].mxu0
      %v2964 = vpop.f32.mrb[0].mxu0
      %v2965 = vadd.f32 %v2804, %v2964
      %v2966 = vpop.f32.mrb[0].mxu0
      %2967 = vmatprep.mubr.bf16.mxu0 0
      %2968 = vmatmul.mubr.bf16.gmra.mrb[0].mxu0 %v1209
      %v2969 = vpop.f32.mrb[0].mxu0
      %v2970 = vadd.f32 %v2809, %v2969
      %v2971 = vpop.f32.mrb[0].mxu0
      %v2972 = vpop.f32.mrb[0].mxu0
      %v2973 = vadd.f32 %v2812, %v2972
      %v2974 = vpop.f32.mrb[0].mxu0
      %2975 = vmatprep.mubr.bf16.mxu0 0
      %2976 = vmatmul.mubr.bf16.gmra.mrb[0].mxu0 %v1212
      %v2977 = vpop.f32.mrb[0].mxu0
      %v2978 = vadd.f32 %v2817, %v2977
      %v2979 = vpop.f32.mrb[0].mxu0
      %v2980 = vpop.f32.mrb[0].mxu0
      %v2981 = vadd.f32 %v2820, %v2980
      %v2982 = vpop.f32.mrb[0].mxu0
      %2983 = vmatprep.mubr.bf16.mxu0 0
      %2984 = vmatmul.mubr.bf16.gmra.mrb[0].mxu0 %v1215
      %v2985 = vpop.f32.mrb[0].mxu0
      %v2986 = vadd.f32 %v2825, %v2985
      %v2987 = vpop.f32.mrb[0].mxu0
      %v2988 = vpop.f32.mrb[0].mxu0
      %v2989 = vadd.f32 %v2828, %v2988
      %v2990 = vpop.f32.mrb[0].mxu0
      %2991 = vmatprep.mubr.bf16.mxu0 0
      %2992 = vmatmul.mubr.bf16.gmra.mrb[0].mxu0 %v1218
      %v2993 = vpop.f32.mrb[0].mxu0
      %v2994 = vadd.f32 %v2833, %v2993
      %v2995 = vpop.f32.mrb[0].mxu0
      %v2996 = vpop.f32.mrb[0].mxu0
      %v2997 = vadd.f32 %v2836, %v2996
      %v2998 = vpop.f32.mrb[0].mxu0
      %2999 = vmatprep.mubr.bf16.mxu0 0
      %3000 = vmatmul.mubr.bf16.gmra.mrb[0].mxu0 %v1221
      %v3001 = vpop.f32.mrb[0].mxu0
      %v3002 = vadd.f32 %v2841, %v3001
      %v3003 = vpop.f32.mrb[0].mxu0
      %v3004 = vpop.f32.mrb[0].mxu0
      %v3005 = vadd.f32 %v2844, %v3004
      %v3006 = vpop.f32.mrb[0].mxu0
      %3007 = vmatprep.mubr.bf16.mxu0 0
      %3008 = vmatmul.mubr.bf16.gmra.mrb[0].mxu0 %v1224
      %v3009 = vpop.f32.mrb[0].mxu0
      %v3010 = vadd.f32 %v2849, %v3009
      %v3011 = vpop.f32.mrb[0].mxu0
      %v3012 = vpop.f32.mrb[0].mxu0
      %v3013 = vadd.f32 %v2852, %v3012
      %v3014 = vpop.f32.mrb[0].mxu0
      %3015 = vmatprep.mubr.bf16.mxu0 0
      %3016 = vmatmul.mubr.bf16.gmra.mrb[0].mxu0 %v1227
      %v3017 = vpop.f32.mrb[0].mxu0
      %v3018 = vadd.f32 %v2857, %v3017
      %v3019 = vpop.f32.mrb[0].mxu0
      %v3020 = vpop.f32.mrb[0].mxu0
      %v3021 = vadd.f32 %v2860, %v3020
      %v3022 = vpop.f32.mrb[0].mxu0
      %3023 = vmatprep.mubr.bf16.mxu0 0
      %3024 = vmatmul.mubr.bf16.gmra.mrb[0].mxu0 %v1230
      %v3025 = vpop.f32.mrb[0].mxu0
      %v3026 = vadd.f32 %v2865, %v3025
      %v3027 = vpop.f32.mrb[0].mxu0
      %v3028 = vpop.f32.mrb[0].mxu0
      %v3029 = vadd.f32 %v2868, %v3028
      %v3030 = vpop.f32.mrb[0].mxu0
      %3031 = vmatprep.mubr.bf16.mxu0 0
      %3032 = vmatmul.mubr.bf16.gmra.mrb[0].mxu0 %v1233
      %v3033 = vpop.f32.mrb[0].mxu0
      %v3034 = vadd.f32 %v2873, %v3033
      %v3035 = vpop.f32.mrb[0].mxu0
      %v3036 = vpop.f32.mrb[0].mxu0
      %v3037 = vadd.f32 %v2876, %v3036
      %v3038 = vpop.f32.mrb[0].mxu0
      %3039 = vmatprep.mubr.bf16.mxu0 0
      %3040 = vmatmul.mubr.bf16.gmra.mrb[0].mxu0 %v1877
      %v3041 = vpop.f32.mrb[0].mxu0
      %v3042 = vadd.f32 %v2881, %v3041
      %v3043 = vpop.f32.mrb[0].mxu0
      %v3044 = vpop.f32.mrb[0].mxu0
      %v3045 = vadd.f32 %v2884, %v3044
      %v3046 = vpop.f32.mrb[0].mxu0
      %3047 = vmatprep.mubr.bf16.mxu0 0
      %3048 = vmatmul.mubr.bf16.gmra.mrb[0].mxu0 %v2507
      %v3049 = vpop.f32.mrb[0].mxu0
      %v3050 = vadd.f32 %v2889, %v3049
      %v3051 = vpop.f32.mrb[0].mxu0
      %v3052 = vpop.f32.mrb[0].mxu0
      %v3053 = vadd.f32 %v2892, %v3052
      %v3054 = vpop.f32.mrb[0].mxu0
      %3055 = vdwg.mxu0
      %v3056 = vadd.f32 %v2509, %v2930
      %v3057 = vadd.f32 %v2510, %v2933
      %v3058 = vadd.f32 %v2511, %v2938
      %v3059 = vadd.f32 %v2512, %v2941
      %v3060 = vadd.f32 %v2513, %v2946
      %v3061 = vadd.f32 %v2514, %v2949
      %v3062 = vadd.f32 %v2515, %v2954
      %v3063 = vadd.f32 %v2516, %v2957
      %v3064 = vadd.f32 %v2517, %v2962
      %v3065 = vadd.f32 %v2518, %v2965
      %v3066 = vadd.f32 %v2519, %v2970
      %v3067 = vadd.f32 %v2520, %v2973
      %v3068 = vadd.f32 %v2521, %v2978
      %v3069 = vadd.f32 %v2522, %v2981
      %v3070 = vadd.f32 %v2523, %v2986
      %v3071 = vadd.f32 %v2524, %v2989
      %v3072 = vadd.f32 %v2525, %v2994
      %v3073 = vadd.f32 %v2526, %v2997
      %v3074 = vadd.f32 %v2527, %v3002
      %v3075 = vadd.f32 %v2528, %v3005
      %v3076 = vadd.f32 %v2529, %v3010
      %v3077 = vadd.f32 %v2530, %v3013
      %v3078 = vadd.f32 %v2531, %v3018
      %v3079 = vadd.f32 %v2532, %v3021
      %v3080 = vadd.f32 %v2533, %v3026
      %v3081 = vadd.f32 %v2534, %v3029
      %v3082 = vadd.f32 %v2535, %v3034
      %v3083 = vadd.f32 %v2536, %v3037
      %v3084 = vadd.f32 %v2537, %v3042
      %v3085 = vadd.f32 %v2538, %v3045
      %v3086 = vadd.f32 %v2539, %v3050
      %v3087 = vadd.f32 %v2540, %v3053
      %3088 = vst [vmem:[#allocation2] sm:$0xff] %v3056
      %3089 = vst [vmem:[#allocation2 + $0x8] sm:$0xff] %v3057
      %3090 = vst [vmem:[#allocation2 + $0x10] sm:$0xff] %v3058
      %3091 = vst [vmem:[#allocation2 + $0x18] sm:$0xff] %v3059
      %3092 = vst [vmem:[#allocation2 + $0x20] sm:$0xff] %v3060
      %3093 = vst [vmem:[#allocation2 + $0x28] sm:$0xff] %v3061
      %3094 = vst [vmem:[#allocation2 + $0x30] sm:$0xff] %v3062
      %3095 = vst [vmem:[#allocation2 + $0x38] sm:$0xff] %v3063
      %3096 = vst [vmem:[#allocation2 + $0x40] sm:$0xff] %v3064
      %3097 = vst [vmem:[#allocation2 + $0x48] sm:$0xff] %v3065
      %3098 = vst [vmem:[#allocation2 + $0x50] sm:$0xff] %v3066
      %3099 = vst [vmem:[#allocation2 + $0x58] sm:$0xff] %v3067
      %3100 = vst [vmem:[#allocation2 + $0x60] sm:$0xff] %v3068
      %3101 = vst [vmem:[#allocation2 + $0x68] sm:$0xff] %v3069
      %3102 = vst [vmem:[#allocation2 + $0x70] sm:$0xff] %v3070
      %3103 = vst [vmem:[#allocation2 + $0x78] sm:$0xff] %v3071
      %3104 = vst [vmem:[#allocation2 + $0x80] sm:$0xff] %v3072
      %3105 = vst [vmem:[#allocation2 + $0x88] sm:$0xff] %v3073
      %3106 = vst [vmem:[#allocation2 + $0x90] sm:$0xff] %v3074
      %3107 = vst [vmem:[#allocation2 + $0x98] sm:$0xff] %v3075
      %3108 = vst [vmem:[#allocation2 + $0xa0] sm:$0xff] %v3076
      %3109 = vst [vmem:[#allocation2 + $0xa8] sm:$0xff] %v3077
      %3110 = vst [vmem:[#allocation2 + $0xb0] sm:$0xff] %v3078
      %3111 = vst [vmem:[#allocation2 + $0xb8] sm:$0xff] %v3079
      %3112 = vst [vmem:[#allocation2 + $0xc0] sm:$0xff] %v3080
      %3113 = vst [vmem:[#allocation2 + $0xc8] sm:$0xff] %v3081
      %3114 = vst [vmem:[#allocation2 + $0xd0] sm:$0xff] %v3082
      %3115 = vst [vmem:[#allocation2 + $0xd8] sm:$0xff] %v3083
      %3116 = vst [vmem:[#allocation2 + $0xe0] sm:$0xff] %v3084
      %3117 = vst [vmem:[#allocation2 + $0xe8] sm:$0xff] %v3085
      %3118 = vst [vmem:[#allocation2 + $0xf0] sm:$0xff] %v3086
      %3119 = vst [vmem:[#allocation2 + $0xf8] sm:$0xff] %v3087
      %v3120 = vld [vmem:[#allocation2] sm:$0xff]
      %v3121 = vld [vmem:[#allocation2 + $0x8] sm:$0xff]
      %v3122 = vld [vmem:[#allocation2 + $0x10] sm:$0xff]
      %v3123 = vld [vmem:[#allocation2 + $0x18] sm:$0xff]
      %v3124 = vld [vmem:[#allocation2 + $0x20] sm:$0xff]
      %v3125 = vld [vmem:[#allocation2 + $0x28] sm:$0xff]
      %v3126 = vld [vmem:[#allocation2 + $0x30] sm:$0xff]
      %v3127 = vld [vmem:[#allocation2 + $0x38] sm:$0xff]
      %v3128 = vld [vmem:[#allocation2 + $0x40] sm:$0xff]
      %v3129 = vld [vmem:[#allocation2 + $0x48] sm:$0xff]
      %v3130 = vld [vmem:[#allocation2 + $0x50] sm:$0xff]
      %v3131 = vld [vmem:[#allocation2 + $0x58] sm:$0xff]
      %v3132 = vld [vmem:[#allocation2 + $0x60] sm:$0xff]
      %v3133 = vld [vmem:[#allocation2 + $0x68] sm:$0xff]
      %v3134 = vld [vmem:[#allocation2 + $0x70] sm:$0xff]
      %v3135 = vld [vmem:[#allocation2 + $0x78] sm:$0xff]
      %v3136 = vld [vmem:[#allocation2 + $0x80] sm:$0xff]
      %v3137 = vld [vmem:[#allocation2 + $0x88] sm:$0xff]
      %v3138 = vld [vmem:[#allocation2 + $0x90] sm:$0xff]
      %v3139 = vld [vmem:[#allocation2 + $0x98] sm:$0xff]
      %v3140 = vld [vmem:[#allocation2 + $0xa0] sm:$0xff]
      %v3141 = vld [vmem:[#allocation2 + $0xa8] sm:$0xff]
      %v3142 = vld [vmem:[#allocation2 + $0xb0] sm:$0xff]
      %v3143 = vld [vmem:[#allocation2 + $0xb8] sm:$0xff]
      %v3144 = vld [vmem:[#allocation2 + $0xc0] sm:$0xff]
      %v3145 = vld [vmem:[#allocation2 + $0xc8] sm:$0xff]
      %v3146 = vld [vmem:[#allocation2 + $0xd0] sm:$0xff]
      %v3147 = vld [vmem:[#allocation2 + $0xd8] sm:$0xff]
      %v3148 = vld [vmem:[#allocation2 + $0xe0] sm:$0xff]
      %v3149 = vld [vmem:[#allocation2 + $0xe8] sm:$0xff]
      %v3150 = vld [vmem:[#allocation2 + $0xf0] sm:$0xff]
      %v3151 = vld [vmem:[#allocation2 + $0xf8] sm:$0xff]
      %v3152 = vld [vmem:[%s4] sm:$0x1]
      %v3154 = vlaneseq
      %v3155 = vshrl.u32 %v3154, 7
      %v3156 = vsub.s32 0, %v3155
      %v3157 = vrot.slane %v3152, %v3156
      %v3159 = vadd.f32 %v3120, %v3157
      %v3160 = vadd.f32 %v3121, %v3157
      %v3161 = vadd.f32 %v3122, %v3157
      %v3162 = vadd.f32 %v3123, %v3157
      %v3163 = vadd.f32 %v3124, %v3157
      %v3164 = vadd.f32 %v3125, %v3157
      %v3165 = vadd.f32 %v3126, %v3157
      %v3166 = vadd.f32 %v3127, %v3157
      %v3167 = vadd.f32 %v3128, %v3157
      %v3168 = vadd.f32 %v3129, %v3157
      %v3169 = vadd.f32 %v3130, %v3157
      %v3170 = vadd.f32 %v3131, %v3157
      %v3171 = vadd.f32 %v3132, %v3157
      %v3172 = vadd.f32 %v3133, %v3157
      %v3173 = vadd.f32 %v3134, %v3157
      %v3174 = vadd.f32 %v3135, %v3157
      %v3175 = vadd.f32 %v3136, %v3157
      %v3176 = vadd.f32 %v3137, %v3157
      %v3177 = vadd.f32 %v3138, %v3157
      %v3178 = vadd.f32 %v3139, %v3157
      %v3179 = vadd.f32 %v3140, %v3157
      %v3180 = vadd.f32 %v3141, %v3157
      %v3181 = vadd.f32 %v3142, %v3157
      %v3182 = vadd.f32 %v3143, %v3157
      %v3183 = vadd.f32 %v3144, %v3157
      %v3184 = vadd.f32 %v3145, %v3157
      %v3185 = vadd.f32 %v3146, %v3157
      %v3186 = vadd.f32 %v3147, %v3157
      %v3187 = vadd.f32 %v3148, %v3157
      %v3188 = vadd.f32 %v3149, %v3157
      %v3189 = vadd.f32 %v3150, %v3157
      %v3190 = vadd.f32 %v3151, %v3157
      %3191 = vst [vmem:[%s482] sm:$0xff] %v3159
      %3192 = vst [vmem:[%s482 + $0x8] sm:$0xff] %v3160
      %3193 = vst [vmem:[%s482 + $0x10] sm:$0xff] %v3161
      %3194 = vst [vmem:[%s482 + $0x18] sm:$0xff] %v3162
      %3195 = vst [vmem:[%s482 + $0x20] sm:$0xff] %v3163
      %3196 = vst [vmem:[%s482 + $0x28] sm:$0xff] %v3164
      %3197 = vst [vmem:[%s482 + $0x30] sm:$0xff] %v3165
      %3198 = vst [vmem:[%s482 + $0x38] sm:$0xff] %v3166
      %3199 = vst [vmem:[%s482 + $0x40] sm:$0xff] %v3167
      %3200 = vst [vmem:[%s482 + $0x48] sm:$0xff] %v3168
      %3201 = vst [vmem:[%s482 + $0x50] sm:$0xff] %v3169
      %3202 = vst [vmem:[%s482 + $0x58] sm:$0xff] %v3170
      %3203 = vst [vmem:[%s482 + $0x60] sm:$0xff] %v3171
      %3204 = vst [vmem:[%s482 + $0x68] sm:$0xff] %v3172
      %3205 = vst [vmem:[%s482 + $0x70] sm:$0xff] %v3173
      %3206 = vst [vmem:[%s482 + $0x78] sm:$0xff] %v3174
      %3207 = vst [vmem:[%s482 + $0x80] sm:$0xff] %v3175
      %3208 = vst [vmem:[%s482 + $0x88] sm:$0xff] %v3176
      %3209 = vst [vmem:[%s482 + $0x90] sm:$0xff] %v3177
      %3210 = vst [vmem:[%s482 + $0x98] sm:$0xff] %v3178
      %3211 = vst [vmem:[%s482 + $0xa0] sm:$0xff] %v3179
      %3212 = vst [vmem:[%s482 + $0xa8] sm:$0xff] %v3180
      %3213 = vst [vmem:[%s482 + $0xb0] sm:$0xff] %v3181
      %3214 = vst [vmem:[%s482 + $0xb8] sm:$0xff] %v3182
      %3215 = vst [vmem:[%s482 + $0xc0] sm:$0xff] %v3183
      %3216 = vst [vmem:[%s482 + $0xc8] sm:$0xff] %v3184
      %3217 = vst [vmem:[%s482 + $0xd0] sm:$0xff] %v3185
      %3218 = vst [vmem:[%s482 + $0xd8] sm:$0xff] %v3186
      %3219 = vst [vmem:[%s482 + $0xe0] sm:$0xff] %v3187
      %3220 = vst [vmem:[%s482 + $0xe8] sm:$0xff] %v3188
      %3221 = vst [vmem:[%s482 + $0xf0] sm:$0xff] %v3189
      %3222 = vst [vmem:[%s482 + $0xf8] sm:$0xff] %v3190
      %v3223 = vadd.f32 %v3120, %v3121
      %v3224 = vadd.f32 %v3223, %v3122
      %v3225 = vadd.f32 %v3224, %v3123
      %v3226 = vadd.f32 %v3225, %v3124
      %v3227 = vadd.f32 %v3226, %v3125
      %v3228 = vadd.f32 %v3227, %v3126
      %v3229 = vadd.f32 %v3228, %v3127
      %v3230 = vadd.f32 %v3229, %v3128
      %v3231 = vadd.f32 %v3230, %v3129
      %v3232 = vadd.f32 %v3231, %v3130
      %v3233 = vadd.f32 %v3232, %v3131
      %v3234 = vadd.f32 %v3233, %v3132
      %v3235 = vadd.f32 %v3234, %v3133
      %v3236 = vadd.f32 %v3235, %v3134
      %v3237 = vadd.f32 %v3236, %v3135
      %v3238 = vadd.f32 %v3237, %v3136
      %v3239 = vadd.f32 %v3238, %v3137
      %v3240 = vadd.f32 %v3239, %v3138
      %v3241 = vadd.f32 %v3240, %v3139
      %v3242 = vadd.f32 %v3241, %v3140
      %v3243 = vadd.f32 %v3242, %v3141
      %v3244 = vadd.f32 %v3243, %v3142
      %v3245 = vadd.f32 %v3244, %v3143
      %v3246 = vadd.f32 %v3245, %v3144
      %v3247 = vadd.f32 %v3246, %v3145
      %v3248 = vadd.f32 %v3247, %v3146
      %v3249 = vadd.f32 %v3248, %v3147
      %v3250 = vadd.f32 %v3249, %v3148
      %v3251 = vadd.f32 %v3250, %v3149
      %v3252 = vadd.f32 %v3251, %v3150
      %v3253 = vadd.f32 %v3252, %v3151
      %v3254 = vrot.slane %v3253, 4
      %v3255 = vadd.f32 %v3253, %v3254
      %v3256 = vrot.slane %v3255, 2
      %v3257 = vadd.f32 %v3255, %v3256
      %v3258 = vrot.slane %v3257, 1
      %v3259 = vadd.f32 %v3257, %v3258
      %v3260 = vmul.f32 %v3120, %v3120
      %v3261 = vmul.f32 %v3121, %v3121
      %v3262 = vmul.f32 %v3122, %v3122
      %v3263 = vmul.f32 %v3123, %v3123
      %v3264 = vmul.f32 %v3124, %v3124
      %v3265 = vmul.f32 %v3125, %v3125
      %v3266 = vmul.f32 %v3126, %v3126
      %v3267 = vmul.f32 %v3127, %v3127
      %v3268 = vmul.f32 %v3128, %v3128
      %v3269 = vmul.f32 %v3129, %v3129
      %v3270 = vmul.f32 %v3130, %v3130
      %v3271 = vmul.f32 %v3131, %v3131
      %v3272 = vmul.f32 %v3132, %v3132
      %v3273 = vmul.f32 %v3133, %v3133
      %v3274 = vmul.f32 %v3134, %v3134
      %v3275 = vmul.f32 %v3135, %v3135
      %v3276 = vmul.f32 %v3136, %v3136
      %v3277 = vmul.f32 %v3137, %v3137
      %v3278 = vmul.f32 %v3138, %v3138
      %v3279 = vmul.f32 %v3139, %v3139
      %v3280 = vmul.f32 %v3140, %v3140
      %v3281 = vmul.f32 %v3141, %v3141
      %v3282 = vmul.f32 %v3142, %v3142
      %v3283 = vmul.f32 %v3143, %v3143
      %v3284 = vmul.f32 %v3144, %v3144
      %v3285 = vmul.f32 %v3145, %v3145
      %v3286 = vmul.f32 %v3146, %v3146
      %v3287 = vmul.f32 %v3147, %v3147
      %v3288 = vmul.f32 %v3148, %v3148
      %v3289 = vmul.f32 %v3149, %v3149
      %v3290 = vmul.f32 %v3150, %v3150
      %v3291 = vmul.f32 %v3151, %v3151
      %v3292 = vadd.f32 %v3260, %v3261
      %v3293 = vadd.f32 %v3292, %v3262
      %v3294 = vadd.f32 %v3293, %v3263
      %v3295 = vadd.f32 %v3294, %v3264
      %v3296 = vadd.f32 %v3295, %v3265
      %v3297 = vadd.f32 %v3296, %v3266
      %v3298 = vadd.f32 %v3297, %v3267
      %v3299 = vadd.f32 %v3298, %v3268
      %v3300 = vadd.f32 %v3299, %v3269
      %v3301 = vadd.f32 %v3300, %v3270
      %v3302 = vadd.f32 %v3301, %v3271
      %v3303 = vadd.f32 %v3302, %v3272
      %v3304 = vadd.f32 %v3303, %v3273
      %v3305 = vadd.f32 %v3304, %v3274
      %v3306 = vadd.f32 %v3305, %v3275
      %v3307 = vadd.f32 %v3306, %v3276
      %v3308 = vadd.f32 %v3307, %v3277
      %v3309 = vadd.f32 %v3308, %v3278
      %v3310 = vadd.f32 %v3309, %v3279
      %v3311 = vadd.f32 %v3310, %v3280
      %v3312 = vadd.f32 %v3311, %v3281
      %v3313 = vadd.f32 %v3312, %v3282
      %v3314 = vadd.f32 %v3313, %v3283
      %v3315 = vadd.f32 %v3314, %v3284
      %v3316 = vadd.f32 %v3315, %v3285
      %v3317 = vadd.f32 %v3316, %v3286
      %v3318 = vadd.f32 %v3317, %v3287
      %v3319 = vadd.f32 %v3318, %v3288
      %v3320 = vadd.f32 %v3319, %v3289
      %v3321 = vadd.f32 %v3320, %v3290
      %v3322 = vadd.f32 %v3321, %v3291
      %v3323 = vrot.slane %v3322, 4
      %v3324 = vadd.f32 %v3322, %v3323
      %v3325 = vrot.slane %v3324, 2
      %v3326 = vadd.f32 %v3324, %v3325
      %v3327 = vrot.slane %v3326, 1
      %v3328 = vadd.f32 %v3326, %v3327
      %v3329 = vsel %vm731, %v3259, %v3328
      %vm3330 = vcmask 1041408
      %v3331 = vsel %vm3330, %v3329, 0.0
      %3332 = vst [vmem:[%s489] sm:$0xff] %v3331
      %p3333 = scmp.lt.s32.totalorder %s24, 1
      %s3334 = scalar_select %p3333, %s24, 1
      %p3335 = scmp.lt.s32.totalorder %s25, 0
      %s3336 = scalar_select %p3335, %s25, 0
      %s3337 = smul.addr %s3336, 32
      %s3338 = smul.addr %s3334, 32
      %s3339 = sadd.s32 %s3337, %s3338
      %s3340 = smul.addr %s3339, 8
      %s3341 = scalar_lea.vmem %s7, %s3340
      %p3342 = scmp.lt.s32.totalorder %s24, 1
      %s3343 = scalar_select %p3342, %s24, 1
      %p3344 = scmp.lt.s32.totalorder %s25, 0
      %s3345 = scalar_select %p3344, %s25, 0
      %s3346 = sadd.s32 %s3345, %s3343
      %s3347 = smul.addr %s3346, 8
      %s3348 = scalar_lea.vmem %s8, %s3347
      // Predicated region
      $region49: #{double_conv.4} parent=47 // pred_check
        %p3349 = pneg %p236
      $region50: #{double_conv.4} parent=47 // pred_check_branch
        %3351 = sbr.rel (%p3349) target = $region52
      $region51: #{double_conv.4} parent=47 // pred_region
        _
      $region52: #{double_conv.4} parent=47 // pred_fallthru
        _
      // Predicated region
      $region53: #{double_conv.4} parent=47 // pred_check
        %p3352 = pneg %p264
      $region54: #{double_conv.4} parent=47 // pred_check_branch
        %3354 = sbr.rel (%p3352) target = $region56
      $region55: #{double_conv.4} parent=47 // pred_region
        _
      $region56: #{double_conv.4} parent=47 // pred_fallthru
        _
    $region48: #{double_conv.4} parent=5 // pred_fallthru
      _
    %p3355 = scmp.le.s32.totalorder 2, %s15
    // Predicated region
    $region57: #{double_conv.4} parent=5 // pred_check
      %p3356 = pneg %p3355
    $region58: #{double_conv.4} parent=5 // pred_check_branch
      %3358 = sbr.rel (%p3356) target = $region60
    $region59: #{double_conv.4} parent=5 // pred_region
      %s3359 = ssub.s32 %s15, 2
      // Predicated region
      $region61: #{double_conv.4} parent=59 // pred_check
        %p3360 = pneg %p242
      $region62: #{double_conv.4} parent=59 // pred_check_branch
        %3362 = sbr.rel (%p3360) target = $region64
      $region63: #{double_conv.4} parent=59 // pred_region
        %p3363 = scmp.lt.s32.totalorder %s26, 1
        %s3364 = scalar_select %p3363, %s26, 1
        %p3365 = scmp.lt.s32.totalorder %s27, 0
        %s3366 = scalar_select %p3365, %s27, 0
        %s3367 = smul.addr %s3366, 32
        %s3368 = smul.addr %s3364, 32
        %s3369 = sadd.s32 %s3367, %s3368
        %s3370 = smul.addr %s3369, 8
        %s3371 = scalar_lea.vmem %s7, %s3370
      $region64: #{double_conv.4} parent=59 // pred_fallthru
        _
      // Predicated region
      $region65: #{double_conv.4} parent=59 // pred_check
        %p3372 = pneg %p270
      $region66: #{double_conv.4} parent=59 // pred_check_branch
        %3374 = sbr.rel (%p3372) target = $region68
      $region67: #{double_conv.4} parent=59 // pred_region
        %p3375 = scmp.lt.s32.totalorder %s26, 1
        %s3376 = scalar_select %p3375, %s26, 1
        %p3377 = scmp.lt.s32.totalorder %s27, 0
        %s3378 = scalar_select %p3377, %s27, 0
        %s3379 = sadd.s32 %s3378, %s3376
        %s3380 = smul.addr %s3379, 8
        %s3381 = scalar_lea.vmem %s8, %s3380
      $region68: #{double_conv.4} parent=59 // pred_fallthru
        _
    $region60: #{double_conv.4} parent=5 // pred_fallthru
      _
  $region6: #{double_conv.4} parent=0 // loop_footer
    %s19 = sadd.s32 1, %s15
  $region7: #{double_conv.4} parent=0 // loop_footer_branch
    %14 = sbr.rel target = $region3
  $region8: #{double_conv.4} parent=0 // loop_exit
    _

</llo_original>
